<compile_context>
chip_gen: v7x
topology: tpu7x:2x2x1
jax: 0.10.0
libtpu: 0.0.40
codegen_flags: <defaults>
</compile_context>

<pallas_src>
import functools

import jax
import jax.numpy as jnp
from jax import lax
from jax.experimental import pallas as pl
from jax.experimental.pallas import tpu as pltpu


_VMEM_LIMIT = 32 * 1024 * 1024      # safe on v5e/v6e (128 MiB) and v7x (64 MiB)
_VMEM_BUDGET = 20 * 1024 * 1024     # target working set used to size row tiles


# --------------------------------------------------------------------------------------
# Pallas kernels
# --------------------------------------------------------------------------------------

def _make_sa_msg_kernel(layer_counts, nsamples):
    """Fused multi-scale shared-MLP + max-pool over the neighborhood axis.

    Kernel ref layout: [grouped_0 .. grouped_{K-1},  (w, b) per layer per scale ..., out]
    grouped_k block: (S_k, tile_points, C_in_k)  -> pooled (tile_points, C_out_k),
    outputs of all scales concatenated on the channel (lane) axis.
    """
    n_scales = len(layer_counts)

    def kernel(*refs):
        o_ref = refs[-1]
        params = refs[n_scales:-1]
        outs = []
        p = 0
        for k in range(n_scales):
            s = nsamples[k]
            x = refs[k][...]                                   # (S, tp, C_in)
            tp = x.shape[1]
            # Fold the neighborhood axis into matmul rows: free reshape (tp % 8 == 0).
            h = x.reshape(s * tp, x.shape[2]).astype(jnp.float32)
            for _ in range(layer_counts[k]):
                w = params[p][...]                             # (C_l, C_{l+1})
                b = params[p + 1][...]                         # (1, C_{l+1})
                p += 2
                h = jnp.maximum(
                    jnp.dot(h, w, preferred_element_type=jnp.float32) + b, 0.0)
            # Max-pool over the neighborhood axis (VPU elementwise max of S slabs).
            outs.append(jnp.max(h.reshape(s, tp, h.shape[1]), axis=0))
        o_ref[...] = jnp.concatenate(outs, axis=-1).astype(o_ref.dtype)

    return kernel


def _make_pointwise_mlp_kernel(n_layers):
    """Per-point MLP (linear + ReLU chain) on a (tile_rows, C_in) block."""

    def kernel(x_ref, *refs):
        o_ref = refs[-1]
        h = x_ref[...].astype(jnp.float32)
        for l in range(n_layers):
            w = refs[2 * l][...]
            b = refs[2 * l + 1][...]
            h = jnp.maximum(
                jnp.dot(h, w, preferred_element_type=jnp.float32) + b, 0.0)
        o_ref[...] = h.astype(o_ref.dtype)

    return kernel


def _fit_row_tile(rows, max_tile, per_row_bytes, fixed_bytes):
    """Largest 8-aligned row tile that keeps the working set under the VMEM budget."""
    t = min(max_tile, rows, max(1, (_VMEM_BUDGET - fixed_bytes) // max(per_row_bytes, 1)))
    if t < rows:
        t = max(8, (t // 8) * 8)
        t = min(t, rows)          # if rows < 8, full-extent block is still legal
    return t


def sa_msg_mlp_maxpool(grouped_list, weights_list, biases_list, *, max_tile_points=128):
    """grouped_list[k]: (S_k, P, C_in) sample-major groups (all scales share P).

    Returns (P, sum_k C_out_k): per-scale shared-MLP + max-pool, channel-concatenated.
    """
    n_scales = len(grouped_list)
    P = grouped_list[0].shape[1]
    c_out_total = sum(int(ws[-1].shape[1]) for ws in weights_list)

    # VMEM sizing: double-buffered inputs + widest intermediate per scale + output.
    w_bytes = 4 * sum(int(w.size) + int(b.size)
                      for ws, bs in zip(weights_list, biases_list)
                      for w, b in zip(ws, bs))
    per_point = 4 * 2 * c_out_total
    for g, ws in zip(grouped_list, weights_list):
        S, _, cin = g.shape
        cmax = max([int(cin)] + [int(w.shape[1]) for w in ws])
        per_point += 4 * S * (2 * cin + 2 * cmax)
    tp = _fit_row_tile(P, max_tile_points, per_point, w_bytes)

    grid = (pl.cdiv(P, tp),)
    in_specs, args, layer_counts = [], [], []
    for g in grouped_list:
        S, _, cin = g.shape
        in_specs.append(pl.BlockSpec((S, tp, cin), lambda i: (0, i, 0)))
        args.append(g)
    for ws, bs in zip(weights_list, biases_list):
        layer_counts.append(len(ws))
        for w, b in zip(ws, bs):
            in_specs.append(pl.BlockSpec(w.shape, lambda i: (0, 0)))
            in_specs.append(pl.BlockSpec(b.shape, lambda i: (0, 0)))
            args += [w, b]

    flops = 2 * P * sum(
        int(g.shape[0]) * sum(int(w.shape[0]) * int(w.shape[1]) for w in ws)
        for g, ws in zip(grouped_list, weights_list))
    bytes_acc = 4 * (sum(int(g.size) for g in grouped_list) + P * c_out_total) + w_bytes

    return pl.pallas_call(
        _make_sa_msg_kernel(tuple(layer_counts),
                            tuple(int(g.shape[0]) for g in grouped_list)),
        out_shape=jax.ShapeDtypeStruct((P, c_out_total), grouped_list[0].dtype),
        grid_spec=pltpu.PrefetchScalarGridSpec(
            num_scalar_prefetch=0,
            grid=grid,
            in_specs=in_specs,
            out_specs=pl.BlockSpec((tp, c_out_total), lambda i: (i, 0)),
        ),
        compiler_params=pltpu.CompilerParams(
            dimension_semantics=("parallel",),
            vmem_limit_bytes=_VMEM_LIMIT,
        ),
        cost_estimate=pl.CostEstimate(
            flops=int(flops), transcendentals=0, bytes_accessed=int(bytes_acc)),
    )(*args)


def pointwise_mlp(x, weights, biases, *, max_tile_rows=512):
    """x: (R, C_in).  Returns (R, C_out) after linear+ReLU chain."""
    R, c_in = x.shape
    c_out = int(weights[-1].shape[1])
    n_layers = len(weights)

    w_bytes = 4 * sum(int(w.size) + int(b.size) for w, b in zip(weights, biases))
    cmax = max([int(c_in)] + [int(w.shape[1]) for w in weights])
    per_row = 4 * (2 * c_in + 2 * cmax + 2 * c_out)
    tr = _fit_row_tile(R, max_tile_rows, per_row, w_bytes)

    grid = (pl.cdiv(R, tr),)
    in_specs = [pl.BlockSpec((tr, c_in), lambda i: (i, 0))]
    args = [x]
    for w, b in zip(weights, biases):
        in_specs.append(pl.BlockSpec(w.shape, lambda i: (0, 0)))
        in_specs.append(pl.BlockSpec(b.shape, lambda i: (0, 0)))
        args += [w, b]

    flops = 2 * R * sum(int(w.shape[0]) * int(w.shape[1]) for w in weights)
    bytes_acc = 4 * (int(x.size) + R * c_out) + w_bytes

    return pl.pallas_call(
        _make_pointwise_mlp_kernel(n_layers),
        out_shape=jax.ShapeDtypeStruct((R, c_out), x.dtype),
        grid_spec=pltpu.PrefetchScalarGridSpec(
            num_scalar_prefetch=0,
            grid=grid,
            in_specs=in_specs,
            out_specs=pl.BlockSpec((tr, c_out), lambda i: (i, 0)),
        ),
        compiler_params=pltpu.CompilerParams(
            dimension_semantics=("parallel",),
            vmem_limit_bytes=_VMEM_LIMIT,
        ),
        cost_estimate=pl.CostEstimate(
            flops=int(flops), transcendentals=0, bytes_accessed=int(bytes_acc)),
    )(*args)


# --------------------------------------------------------------------------------------
# Data-dependent helpers (plain JAX, jitted)
# --------------------------------------------------------------------------------------

@functools.partial(jax.jit, static_argnames=("npoint",))
def farthest_point_sample(xyz, npoint):
    """xyz: (B, N, 3) -> (B, npoint) int32 indices (first centroid = index 0)."""
    B, N, _ = xyz.shape

    def single(pts):
        def body(i, state):
            idxs, dists, last = state
            d = jnp.sum((pts - pts[last]) ** 2, axis=-1)
            dists = jnp.minimum(dists, d)
            nxt = jnp.argmax(dists).astype(jnp.int32)
            return idxs.at[i].set(nxt), dists, nxt

        idxs = jnp.zeros((npoint,), jnp.int32)
        dists = jnp.full((N,), 1e10, jnp.float32)
        idxs, _, _ = lax.fori_loop(1, npoint, body, (idxs, dists, jnp.int32(0)))
        return idxs

    return jax.vmap(single)(xyz)


@functools.partial(jax.jit, static_argnames=("radius", "nsample"))
def ball_query(radius, nsample, xyz, new_xyz):
    """Return (B, M, nsample) int32 indices of up to nsample points within radius.

    Matches CUDA ball_query semantics: first nsample in-radius points in index order,
    shortfall filled with the first in-radius index (the centroid itself is always in radius).
    """
    _, N, _ = xyz.shape
    d2 = jnp.sum((new_xyz[:, :, None, :] - xyz[:, None, :, :]) ** 2, axis=-1)  # (B,M,N)
    mask = d2 <= radius * radius
    arange = jnp.arange(N, dtype=jnp.int32)
    sort_key = jnp.where(mask, arange[None, None, :], N + arange[None, None, :])
    order = jnp.argsort(sort_key, axis=-1)[:, :, :nsample].astype(jnp.int32)
    in_r = jnp.take_along_axis(mask, order, axis=-1)
    first = order[:, :, :1]
    return jnp.where(in_r, order, first)


def _gather_idx(x, idx):
    """x: (B, N, C), idx: (B, ...) int -> (B, ..., C)."""
    return jax.vmap(lambda xb, ib: xb[ib])(x, idx)


@jax.jit
def three_nn_interpolate(unknown, known, known_feats):
    """unknown: (B,n,3), known: (B,m,3), known_feats: (B,C,m) -> (B,n,C)."""
    d2 = jnp.sum((unknown[:, :, None, :] - known[:, None, :, :]) ** 2, axis=-1)
    neg_vals, idx = lax.top_k(-d2, 3)                       # (B, n, 3)
    dist = jnp.maximum(-neg_vals, 0.0)
    w = 1.0 / (dist + 1e-8)
    w = w / jnp.sum(w, axis=-1, keepdims=True)
    feats = jnp.transpose(known_feats, (0, 2, 1))           # (B, m, C)
    gathered = _gather_idx(feats, idx)                      # (B, n, 3, C)
    return jnp.sum(gathered * w[..., None], axis=2)


# --------------------------------------------------------------------------------------
# Modules
# --------------------------------------------------------------------------------------

class PointnetSAModuleMSG:
    def __init__(self, key, npoint, radii, nsamples, mlps, use_xyz=True):
        self.npoint = npoint
        self.radii = radii
        self.nsamples = nsamples
        self.use_xyz = use_xyz
        self.weights, self.biases = [], []
        for spec in mlps:
            chans = list(spec)
            if use_xyz:
                chans[0] += 3
            ws, bs = [], []
            for cin, cout in zip(chans[:-1], chans[1:]):
                key, sub = jax.random.split(key)
                ws.append((jax.random.normal(sub, (cin, cout), jnp.float32)
                           / (cin ** 0.5)).astype(jnp.float32))
                bs.append(jnp.zeros((1, cout), jnp.float32))
            self.weights.append(ws)
            self.biases.append(bs)

    def __call__(self, xyz, features):
        """xyz: (B, N, 3); features: (B, C, N) or None."""
        B = xyz.shape[0]
        fps_idx = farthest_point_sample(xyz, self.npoint)          # (B, M)
        new_xyz = _gather_idx(xyz, fps_idx)                        # (B, M, 3)
        feats_bnc = (jnp.transpose(features, (0, 2, 1))
                     if features is not None else None)

        grouped_list = []
        for radius, ns in zip(self.radii, self.nsamples):
            idx = ball_query(float(radius), int(ns), xyz, new_xyz)  # (B, M, ns)
            grouped_xyz = _gather_idx(xyz, idx) - new_xyz[:, :, None, :]
            if feats_bnc is not None:
                grouped_f = _gather_idx(feats_bnc, idx)             # (B, M, ns, C)
                grouped = (jnp.concatenate([grouped_xyz, grouped_f], axis=-1)
                           if self.use_xyz else grouped_f)
            else:
                grouped = grouped_xyz
            c_in = grouped.shape[-1]
            # sample-major layout (S, B*M, C) so the kernel does pure 2-D MXU matmuls
            grouped_list.append(
                jnp.transpose(grouped, (2, 0, 1, 3)).reshape(ns, B * self.npoint, c_in))

        pooled = sa_msg_mlp_maxpool(grouped_list, self.weights, self.biases)  # (B*M, sumC)
        new_features = pooled.reshape(B, self.npoint, -1)          # (B, M, sumC)
        new_features = jnp.transpose(new_features, (0, 2, 1))      # (B, sumC, M)
        return new_xyz, new_features, fps_idx


class PointnetFPModule:
    def __init__(self, key, mlp):
        self.weights, self.biases = [], []
        for cin, cout in zip(mlp[:-1], mlp[1:]):
            key, sub = jax.random.split(key)
            self.weights.append((jax.random.normal(sub, (cin, cout), jnp.float32)
                                 / (cin ** 0.5)).astype(jnp.float32))
            self.biases.append(jnp.zeros((1, cout), jnp.float32))

    def __call__(self, unknown, known, unknown_feats, known_feats):
        """unknown_feats: (B,C1,n) or None; known_feats: (B,C2,m) -> (B,C_out,n)."""
        interp = three_nn_interpolate(unknown, known, known_feats)  # (B, n, C2)
        if unknown_feats is not None:
            skip = jnp.transpose(unknown_feats, (0, 2, 1))          # (B, n, C1)
            new = jnp.concatenate([interp, skip], axis=-1)
        else:
            new = interp
        B, n, c = new.shape
        out = pointwise_mlp(new.reshape(B * n, c), self.weights, self.biases)
        return jnp.transpose(out.reshape(B, n, -1), (0, 2, 1))      # (B, C_out, n)


class PointNet2MSGPallas:
    def __init__(self, model_cfg, input_channels, key):
        sa_cfg = model_cfg["SA_CONFIG"]
        channel_in = input_channels - 3
        skip_channel_list = [channel_in]
        self.SA_modules = []
        channel_out = channel_in
        for k in range(len(sa_cfg["NPOINTS"])):
            mlps = [list(m) for m in sa_cfg["MLPS"][k]]
            channel_out = 0
            for idx in range(len(mlps)):
                mlps[idx] = [channel_in] + mlps[idx]
                channel_out += mlps[idx][-1]
            key, sub = jax.random.split(key)
            self.SA_modules.append(PointnetSAModuleMSG(
                sub, npoint=sa_cfg["NPOINTS"][k], radii=sa_cfg["RADIUS"][k],
                nsamples=sa_cfg["NSAMPLE"][k], mlps=mlps,
                use_xyz=sa_cfg.get("USE_XYZ", True)))
            skip_channel_list.append(channel_out)
            channel_in = channel_out

        self.FP_modules = []
        fp_mlps = model_cfg["FP_MLPS"]
        for k in range(len(fp_mlps)):
            pre_channel = fp_mlps[k + 1][-1] if k + 1 < len(fp_mlps) else channel_out
            key, sub = jax.random.split(key)
            self.FP_modules.append(PointnetFPModule(
                sub, mlp=[pre_channel + skip_channel_list[k]] + list(fp_mlps[k])))
        self.num_point_features = fp_mlps[0][-1]

    @staticmethod
    def break_up_pc(pc):
        batch_idx = pc[:, 0]
        xyz = pc[:, 1:4]
        features = pc[:, 4:] if pc.shape[-1] > 4 else None
        return batch_idx, xyz, features

    def forward(self, batch_dict):
        batch_size = batch_dict["batch_size"]
        points = batch_dict["points"]
        batch_idx, xyz, features = self.break_up_pc(points)

        pts_img = batch_dict["pts_img"][:, 1:]
        xyz = xyz.reshape(batch_size, -1, 3)
        pts_img = pts_img.reshape(batch_size, -1, 2)
        h, w = batch_dict["image_size"]
        pts_img = pts_img.at[..., 0].set(2.0 * (pts_img[..., 0] / w) - 1.0)
        pts_img = pts_img.at[..., 1].set(2.0 * (pts_img[..., 1] / h) - 1.0)
        if features is not None:
            features = jnp.transpose(
                features.reshape(batch_size, -1, features.shape[-1]), (0, 2, 1))

        l_xyz, l_features, li_idx, selected_pts = [xyz], [features], [], [pts_img]
        for i in range(len(self.SA_modules)):
            li_xyz, li_feat, pts_idx = self.SA_modules[i](l_xyz[i], l_features[i])
            pts = jnp.take_along_axis(
                selected_pts[-1], jnp.repeat(pts_idx[..., None], 2, axis=-1), axis=1)
            # TODO(synk): PWG bottom-up image fusion (config-eval'd grid_sample attention
            # modules) has no definition available -> identity on li_feat.
            l_xyz.append(li_xyz)
            l_features.append(li_feat)
            li_idx.append(pts_idx)
            selected_pts.append(pts)

        for i in range(-1, -(len(self.FP_modules) + 1), -1):
            pts_feats = self.FP_modules[i](
                l_xyz[i - 1], l_xyz[i], l_features[i - 1], l_features[i])
            # TODO(synk): PWG top-down image fusion -> identity on pts_feats.
            l_features[i - 1] = pts_feats

        point_features = jnp.transpose(l_features[0], (0, 2, 1))   # (B, N, C)
        batch_dict["point_features"] = point_features.reshape(-1, point_features.shape[-1])
        batch_dict["point_coords"] = jnp.concatenate(
            [batch_idx[:, None], l_xyz[0].reshape(-1, 3)], axis=1)
        return batch_dict

    __call__ = forward


# --------------------------------------------------------------------------------------
# Self-test
# --------------------------------------------------------------------------------------

if __name__ == "__main__":
    # ---- unit check: fused multi-scale SA kernel vs pure-JAX reference ----
    k0 = jax.random.PRNGKey(0)
    kx0, kx1, kw1, kw2, kw3, kw4 = jax.random.split(k0, 6)
    g0 = jax.random.normal(kx0, (8, 64, 6), jnp.float32)          # scale 0: (S0, P, C_in)
    g1 = jax.random.normal(kx1, (16, 64, 6), jnp.float32)         # scale 1: (S1, P, C_in)
    w1 = jax.random.normal(kw1, (6, 16), jnp.float32) * 0.1
    b1 = jnp.zeros((1, 16), jnp.float32)
    w2 = jax.random.normal(kw2, (16, 24), jnp.float32) * 0.1
    b2 = jnp.zeros((1, 24), jnp.float32)
    w3 = jax.random.normal(kw3, (6, 16), jnp.float32) * 0.1
    b3 = jnp.zeros((1, 16), jnp.float32)
    w4 = jax.random.normal(kw4, (16, 32), jnp.float32) * 0.1
    b4 = jnp.zeros((1, 32), jnp.float32)

    got = sa_msg_mlp_maxpool([g0, g1], [[w1, w2], [w3, w4]], [[b1, b2], [b3, b4]])

    def _ref_scale(g, ws, bs):
        h = g
        for w, b in zip(ws, bs):
            h = jnp.maximum(jnp.einsum("spc,co->spo", h, w,
                                       precision=lax.Precision.HIGHEST) + b, 0.0)
        return jnp.max(h, axis=0)

    ref = jnp.concatenate([_ref_scale(g0, [w1, w2], [b1, b2]),
                           _ref_scale(g1, [w3, w4], [b3, b4])], axis=-1)
    assert bool(jnp.allclose(got, ref, atol=1e-3, rtol=1e-3))

    # ---- unit check: pointwise MLP (ragged row tiling path) ----
    x2 = jax.random.normal(kx0, (200, 6), jnp.float32)
    got2 = pointwise_mlp(x2, [w1, w2], [b1, b2])
    r2 = jnp.maximum(jnp.dot(x2, w1, precision=lax.Precision.HIGHEST) + b1, 0.0)
    r2 = jnp.maximum(jnp.dot(r2, w2, precision=lax.Precision.HIGHEST) + b2, 0.0)
    assert bool(jnp.allclose(got2, r2, atol=1e-3, rtol=1e-3))

    # ---- full backbone forward on small deterministic inputs ----
    key = jax.random.PRNGKey(0)
    batch_size, n_pts, num_feat = 2, 128, 1                      # input_channels = 4
    model_cfg = {
        "SA_CONFIG": {
            "NPOINTS": [64, 16],
            "RADIUS": [[0.4, 0.8], [0.8, 1.6]],
            "NSAMPLE": [[8, 16], [8, 16]],
            "MLPS": [[[8, 16], [8, 16]], [[16, 32], [16, 32]]],
            "USE_XYZ": True,
        },
        "FP_MLPS": [[32, 32], [32, 32]],
    }
    k1, k2, k3, kmodel = jax.random.split(key, 4)
    xyz = jax.random.uniform(k1, (batch_size, n_pts, 3), jnp.float32, -1.0, 1.0)
    feats = jax.random.normal(k2, (batch_size, n_pts, num_feat), jnp.float32)
    bidx = jnp.repeat(jnp.arange(batch_size, dtype=jnp.float32), n_pts)[:, None]
    points = jnp.concatenate(
        [bidx, xyz.reshape(-1, 3), feats.reshape(-1, num_feat)], axis=1)
    h_img, w_img = 32, 64
    pts_img_xy = jax.random.uniform(k3, (batch_size * n_pts, 2), jnp.float32) \
        * jnp.array([w_img, h_img], jnp.float32)
    pts_img = jnp.concatenate([bidx, pts_img_xy], axis=1)

    batch_dict = {
        "batch_size": batch_size,
        "points": points,
        "pts_img": pts_img,
        "image_size": (h_img, w_img),
    }

    model = PointNet2MSGPallas(model_cfg, input_channels=4, key=kmodel)
    out = model(batch_dict)
    pf = jax.block_until_ready(out["point_features"])
    pc = jax.block_until_ready(out["point_coords"])

    assert pf.shape == (batch_size * n_pts, model.num_point_features)
    assert pc.shape == (batch_size * n_pts, 4)
    assert bool(jnp.all(jnp.isfinite(pf)))
    assert bool(jnp.all(jnp.isfinite(pc)))
    print("KERNEL_OK")
</pallas_src>

<mosaic_0001>
module attributes {stable_mosaic.version = 11 : i64} {
  func.func @kernel(%arg0: i32, %arg1: memref<8x64x6xf32, #tpu.memory_space<vmem>>, %arg2: memref<16x64x6xf32, #tpu.memory_space<vmem>>, %arg3: memref<6x16xf32, #tpu.memory_space<vmem>>, %arg4: memref<1x16xf32, #tpu.memory_space<vmem>>, %arg5: memref<16x24xf32, #tpu.memory_space<vmem>>, %arg6: memref<1x24xf32, #tpu.memory_space<vmem>>, %arg7: memref<6x16xf32, #tpu.memory_space<vmem>>, %arg8: memref<1x16xf32, #tpu.memory_space<vmem>>, %arg9: memref<16x32xf32, #tpu.memory_space<vmem>>, %arg10: memref<1x32xf32, #tpu.memory_space<vmem>>, %arg11: memref<64x56xf32, #tpu.memory_space<vmem>>) attributes {dimension_semantics = [#tpu.dimension_semantics<parallel>], iteration_bounds = array<i64: 1>, scalar_prefetch = 0 : i64, scratch_operands = 0 : i64, tpu.core_type = #tpu.core_type<tc>, window_params = [{transform_indices = @transform_0, window_bounds = array<i64: 8, 64, 6>}, {transform_indices = @transform_1, window_bounds = array<i64: 16, 64, 6>}, {pipeline_mode = #tpu.pipeline_mode<synchronous>, transform_indices = @transform_2, window_bounds = array<i64: 6, 16>}, {pipeline_mode = #tpu.pipeline_mode<synchronous>, transform_indices = @transform_3, window_bounds = array<i64: 1, 16>}, {pipeline_mode = #tpu.pipeline_mode<synchronous>, transform_indices = @transform_4, window_bounds = array<i64: 16, 24>}, {pipeline_mode = #tpu.pipeline_mode<synchronous>, transform_indices = @transform_5, window_bounds = array<i64: 1, 24>}, {pipeline_mode = #tpu.pipeline_mode<synchronous>, transform_indices = @transform_6, window_bounds = array<i64: 6, 16>}, {pipeline_mode = #tpu.pipeline_mode<synchronous>, transform_indices = @transform_7, window_bounds = array<i64: 1, 16>}, {pipeline_mode = #tpu.pipeline_mode<synchronous>, transform_indices = @transform_8, window_bounds = array<i64: 16, 32>}, {pipeline_mode = #tpu.pipeline_mode<synchronous>, transform_indices = @transform_9, window_bounds = array<i64: 1, 32>}, {transform_indices = @transform_10, window_bounds = array<i64: 64, 56>}]} {
    %c0 = arith.constant 0 : index
    %c0_0 = arith.constant 0 : index
    %c0_1 = arith.constant 0 : index
    %0 = vector.load %arg1[%c0, %c0_0, %c0_1] : memref<8x64x6xf32, #tpu.memory_space<vmem>>, vector<8x64x6xf32>
    %1 = vector.shape_cast %0 : vector<8x64x6xf32> to vector<512x6xf32>
    %c0_2 = arith.constant 0 : index
    %c0_3 = arith.constant 0 : index
    %2 = vector.load %arg3[%c0_2, %c0_3] : memref<6x16xf32, #tpu.memory_space<vmem>>, vector<6x16xf32>
    %c0_4 = arith.constant 0 : index
    %c0_5 = arith.constant 0 : index
    %3 = vector.load %arg4[%c0_4, %c0_5] : memref<1x16xf32, #tpu.memory_space<vmem>>, vector<1x16xf32>
    %cst = arith.constant dense<0.000000e+00> : vector<512x16xf32>
    %4 = tpu.matmul %1, %2, %cst {dimension_numbers = #tpu.dot_dimension_numbers<[1], [0], [0], [1], [0, 0, 1, 1], [], []>} : vector<512x6xf32>, vector<6x16xf32>, vector<512x16xf32> -> vector<512x16xf32>
    %5 = vector.broadcast %3 : vector<1x16xf32> to vector<512x16xf32>
    %6 = arith.addf %4, %5 : vector<512x16xf32>
    %cst_6 = arith.constant 0.000000e+00 : f32
    %7 = vector.broadcast %cst_6 : f32 to vector<512x16xf32>
    %8 = arith.maximumf %6, %7 : vector<512x16xf32>
    %c0_7 = arith.constant 0 : index
    %c0_8 = arith.constant 0 : index
    %9 = vector.load %arg5[%c0_7, %c0_8] : memref<16x24xf32, #tpu.memory_space<vmem>>, vector<16x24xf32>
    %c0_9 = arith.constant 0 : index
    %c0_10 = arith.constant 0 : index
    %10 = vector.load %arg6[%c0_9, %c0_10] : memref<1x24xf32, #tpu.memory_space<vmem>>, vector<1x24xf32>
    %cst_11 = arith.constant dense<0.000000e+00> : vector<512x24xf32>
    %11 = tpu.matmul %8, %9, %cst_11 {dimension_numbers = #tpu.dot_dimension_numbers<[1], [0], [0], [1], [0, 0, 1, 1], [], []>} : vector<512x16xf32>, vector<16x24xf32>, vector<512x24xf32> -> vector<512x24xf32>
    %12 = vector.broadcast %10 : vector<1x24xf32> to vector<512x24xf32>
    %13 = arith.addf %11, %12 : vector<512x24xf32>
    %cst_12 = arith.constant 0.000000e+00 : f32
    %14 = vector.broadcast %cst_12 : f32 to vector<512x24xf32>
    %15 = arith.maximumf %13, %14 : vector<512x24xf32>
    %16 = vector.shape_cast %15 : vector<512x24xf32> to vector<8x64x24xf32>
    %cst_13 = arith.constant dense<0xFF800000> : vector<64x24xf32>
    %17 = vector.multi_reduction <maximumf>, %16, %cst_13 [0] : vector<8x64x24xf32> to vector<64x24xf32>
    %c0_14 = arith.constant 0 : index
    %c0_15 = arith.constant 0 : index
    %c0_16 = arith.constant 0 : index
    %18 = vector.load %arg2[%c0_14, %c0_15, %c0_16] : memref<16x64x6xf32, #tpu.memory_space<vmem>>, vector<16x64x6xf32>
    %19 = vector.shape_cast %18 : vector<16x64x6xf32> to vector<1024x6xf32>
    %c0_17 = arith.constant 0 : index
    %c0_18 = arith.constant 0 : index
    %20 = vector.load %arg7[%c0_17, %c0_18] : memref<6x16xf32, #tpu.memory_space<vmem>>, vector<6x16xf32>
    %c0_19 = arith.constant 0 : index
    %c0_20 = arith.constant 0 : index
    %21 = vector.load %arg8[%c0_19, %c0_20] : memref<1x16xf32, #tpu.memory_space<vmem>>, vector<1x16xf32>
    %cst_21 = arith.constant dense<0.000000e+00> : vector<1024x16xf32>
    %22 = tpu.matmul %19, %20, %cst_21 {dimension_numbers = #tpu.dot_dimension_numbers<[1], [0], [0], [1], [0, 0, 1, 1], [], []>} : vector<1024x6xf32>, vector<6x16xf32>, vector<1024x16xf32> -> vector<1024x16xf32>
    %23 = vector.broadcast %21 : vector<1x16xf32> to vector<1024x16xf32>
    %24 = arith.addf %22, %23 : vector<1024x16xf32>
    %cst_22 = arith.constant 0.000000e+00 : f32
    %25 = vector.broadcast %cst_22 : f32 to vector<1024x16xf32>
    %26 = arith.maximumf %24, %25 : vector<1024x16xf32>
    %c0_23 = arith.constant 0 : index
    %c0_24 = arith.constant 0 : index
    %27 = vector.load %arg9[%c0_23, %c0_24] : memref<16x32xf32, #tpu.memory_space<vmem>>, vector<16x32xf32>
    %c0_25 = arith.constant 0 : index
    %c0_26 = arith.constant 0 : index
    %28 = vector.load %arg10[%c0_25, %c0_26] : memref<1x32xf32, #tpu.memory_space<vmem>>, vector<1x32xf32>
    %cst_27 = arith.constant dense<0.000000e+00> : vector<1024x32xf32>
    %29 = tpu.matmul %26, %27, %cst_27 {dimension_numbers = #tpu.dot_dimension_numbers<[1], [0], [0], [1], [0, 0, 1, 1], [], []>} : vector<1024x16xf32>, vector<16x32xf32>, vector<1024x32xf32> -> vector<1024x32xf32>
    %30 = vector.broadcast %28 : vector<1x32xf32> to vector<1024x32xf32>
    %31 = arith.addf %29, %30 : vector<1024x32xf32>
    %cst_28 = arith.constant 0.000000e+00 : f32
    %32 = vector.broadcast %cst_28 : f32 to vector<1024x32xf32>
    %33 = arith.maximumf %31, %32 : vector<1024x32xf32>
    %34 = vector.shape_cast %33 : vector<1024x32xf32> to vector<16x64x32xf32>
    %cst_29 = arith.constant dense<0xFF800000> : vector<64x32xf32>
    %35 = vector.multi_reduction <maximumf>, %34, %cst_29 [0] : vector<16x64x32xf32> to vector<64x32xf32>
    %36 = tpu.concatenate %17, %35 in 1 : vector<64x24xf32>, vector<64x32xf32> -> vector<64x56xf32>
    %c0_30 = arith.constant 0 : index
    %c0_31 = arith.constant 0 : index
    %37 = vector.load %arg11[%c0_30, %c0_31] : memref<64x56xf32, #tpu.memory_space<vmem>>, vector<64x56xf32>
    tpu.vector_store %arg11[%c0_30, %c0_31], %36 {strides = array<i32>} : memref<64x56xf32, #tpu.memory_space<vmem>>, vector<64x56xf32>,
    return
  }
  func.func @transform_0(%arg0: i32) -> (i32, i32, i32) {
    %c0_i32 = arith.constant 0 : i32
    %c0_i32_0 = arith.constant 0 : i32
    %c0_i32_1 = arith.constant 0 : i32
    return %c0_i32, %arg0, %c0_i32_0 : i32, i32, i32
  }
  func.func @transform_1(%arg0: i32) -> (i32, i32, i32) {
    %c0_i32 = arith.constant 0 : i32
    %c0_i32_0 = arith.constant 0 : i32
    %c0_i32_1 = arith.constant 0 : i32
    return %c0_i32, %arg0, %c0_i32_0 : i32, i32, i32
  }
  func.func @transform_2(%arg0: i32) -> (i32, i32) {
    %c0_i32 = arith.constant 0 : i32
    %c0_i32_0 = arith.constant 0 : i32
    %c0_i32_1 = arith.constant 0 : i32
    return %c0_i32, %c0_i32_0 : i32, i32
  }
  func.func @transform_3(%arg0: i32) -> (i32, i32) {
    %c0_i32 = arith.constant 0 : i32
    %c0_i32_0 = arith.constant 0 : i32
    %c0_i32_1 = arith.constant 0 : i32
    return %c0_i32, %c0_i32_0 : i32, i32
  }
  func.func @transform_4(%arg0: i32) -> (i32, i32) {
    %c0_i32 = arith.constant 0 : i32
    %c0_i32_0 = arith.constant 0 : i32
    %c0_i32_1 = arith.constant 0 : i32
    return %c0_i32, %c0_i32_0 : i32, i32
  }
  func.func @transform_5(%arg0: i32) -> (i32, i32) {
    %c0_i32 = arith.constant 0 : i32
    %c0_i32_0 = arith.constant 0 : i32
    %c0_i32_1 = arith.constant 0 : i32
    return %c0_i32, %c0_i32_0 : i32, i32
  }
  func.func @transform_6(%arg0: i32) -> (i32, i32) {
    %c0_i32 = arith.constant 0 : i32
    %c0_i32_0 = arith.constant 0 : i32
    %c0_i32_1 = arith.constant 0 : i32
    return %c0_i32, %c0_i32_0 : i32, i32
  }
  func.func @transform_7(%arg0: i32) -> (i32, i32) {
    %c0_i32 = arith.constant 0 : i32
    %c0_i32_0 = arith.constant 0 : i32
    %c0_i32_1 = arith.constant 0 : i32
    return %c0_i32, %c0_i32_0 : i32, i32
  }
  func.func @transform_8(%arg0: i32) -> (i32, i32) {
    %c0_i32 = arith.constant 0 : i32
    %c0_i32_0 = arith.constant 0 : i32
    %c0_i32_1 = arith.constant 0 : i32
    return %c0_i32, %c0_i32_0 : i32, i32
  }
  func.func @transform_9(%arg0: i32) -> (i32, i32) {
    %c0_i32 = arith.constant 0 : i32
    %c0_i32_0 = arith.constant 0 : i32
    %c0_i32_1 = arith.constant 0 : i32
    return %c0_i32, %c0_i32_0 : i32, i32
  }
  func.func @transform_10(%arg0: i32) -> (i32, i32) {
    %c0_i32 = arith.constant 0 : i32
    %c0_i32_0 = arith.constant 0 : i32
    return %arg0, %c0_i32 : i32, i32
  }
}

</mosaic_0001>

<llo_original>
// kernel: tpu_custom_call.1
$region0: #{tpu_custom_call.1}
  #allocation0 [shape = 'u32[]', space=smem, size = 0x4, offset = 0x4, fixed_abs, tag = 'smem constant byte address 0x4 - core index']
  #allocation1 [shape = 'u32[144,128]{1,0:T(1,128)}', space=vmem, size = 0x12000, scoped, tag = 'internal scratch']
  %s0 = inlined_call_operand.vmem [shape: f32[8,64,6], index: 0, kind: input, shape index: {}]
  %s1 = inlined_call_operand.vmem [shape: f32[16,64,6], index: 1, kind: input, shape index: {}]
  %s2 = inlined_call_operand.vmem [shape: f32[6,16], index: 2, kind: input, shape index: {}]
  %s3 = inlined_call_operand.vmem [shape: f32[1,16], index: 3, kind: input, shape index: {}]
  %s4 = inlined_call_operand.vmem [shape: f32[16,24], index: 4, kind: input, shape index: {}]
  %s5 = inlined_call_operand.vmem [shape: f32[1,24], index: 5, kind: input, shape index: {}]
  %s6 = inlined_call_operand.vmem [shape: f32[6,16], index: 6, kind: input, shape index: {}]
  %s7 = inlined_call_operand.vmem [shape: f32[1,16], index: 7, kind: input, shape index: {}]
  %s8 = inlined_call_operand.vmem [shape: f32[16,32], index: 8, kind: input, shape index: {}]
  %s9 = inlined_call_operand.vmem [shape: f32[1,32], index: 9, kind: input, shape index: {}]
  %s10 = inlined_call_operand.vmem [shape: f32[64,56], index: 10, kind: output, shape index: {}]
  %s11 = sld [smem:[#allocation0]]
  $region50: #{tpu_custom_call.1} parent=0
    _
  %s13 = ssub.s32 1, %s11
  %s14 = scalar_select 0, %s13, %s11
  // Predicated region
  $region2: #{tpu_custom_call.1} parent=0 // pred_check
    _
  $region3: #{tpu_custom_call.1} parent=0 // pred_check_branch
    %16 = sbr.rel (0) target = $region5
  $region4: #{tpu_custom_call.1} parent=0 // pred_region
    _
  $region5: #{tpu_custom_call.1} parent=0 // pred_fallthru
    _
  // Predicated region
  $region6: #{tpu_custom_call.1} parent=0 // pred_check
    _
  $region7: #{tpu_custom_call.1} parent=0 // pred_check_branch
    %18 = sbr.rel (0) target = $region9
  $region8: #{tpu_custom_call.1} parent=0 // pred_region
    _
  $region9: #{tpu_custom_call.1} parent=0 // pred_fallthru
    _
  // Predicated region
  $region10: #{tpu_custom_call.1} parent=0 // pred_check
    _
  $region11: #{tpu_custom_call.1} parent=0 // pred_check_branch
    %20 = sbr.rel (0) target = $region13
  $region12: #{tpu_custom_call.1} parent=0 // pred_region
    _
  $region13: #{tpu_custom_call.1} parent=0 // pred_fallthru
    _
  // Predicated region
  $region14: #{tpu_custom_call.1} parent=0 // pred_check
    _
  $region15: #{tpu_custom_call.1} parent=0 // pred_check_branch
    %22 = sbr.rel (0) target = $region17
  $region16: #{tpu_custom_call.1} parent=0 // pred_region
    _
  $region17: #{tpu_custom_call.1} parent=0 // pred_fallthru
    _
  // Predicated region
  $region18: #{tpu_custom_call.1} parent=0 // pred_check
    _
  $region19: #{tpu_custom_call.1} parent=0 // pred_check_branch
    %24 = sbr.rel (0) target = $region21
  $region20: #{tpu_custom_call.1} parent=0 // pred_region
    _
  $region21: #{tpu_custom_call.1} parent=0 // pred_fallthru
    _
  // Predicated region
  $region22: #{tpu_custom_call.1} parent=0 // pred_check
    _
  $region23: #{tpu_custom_call.1} parent=0 // pred_check_branch
    %26 = sbr.rel (0) target = $region25
  $region24: #{tpu_custom_call.1} parent=0 // pred_region
    _
  $region25: #{tpu_custom_call.1} parent=0 // pred_fallthru
    _
  // Predicated region
  $region26: #{tpu_custom_call.1} parent=0 // pred_check
    _
  $region27: #{tpu_custom_call.1} parent=0 // pred_check_branch
    %28 = sbr.rel (0) target = $region29
  $region28: #{tpu_custom_call.1} parent=0 // pred_region
    _
  $region29: #{tpu_custom_call.1} parent=0 // pred_fallthru
    _
  // Predicated region
  $region30: #{tpu_custom_call.1} parent=0 // pred_check
    _
  $region31: #{tpu_custom_call.1} parent=0 // pred_check_branch
    %30 = sbr.rel (0) target = $region33
  $region32: #{tpu_custom_call.1} parent=0 // pred_region
    _
  $region33: #{tpu_custom_call.1} parent=0 // pred_fallthru
    _
  // Predicated region
  $region34: #{tpu_custom_call.1} parent=0 // pred_check
    _
  $region35: #{tpu_custom_call.1} parent=0 // pred_check_branch
    %32 = sbr.rel (0) target = $region37
  $region36: #{tpu_custom_call.1} parent=0 // pred_region
    _
  $region37: #{tpu_custom_call.1} parent=0 // pred_fallthru
    _
  // Predicated region
  $region38: #{tpu_custom_call.1} parent=0 // pred_check
    _
  $region39: #{tpu_custom_call.1} parent=0 // pred_check_branch
    %34 = sbr.rel (0) target = $region41
  $region40: #{tpu_custom_call.1} parent=0 // pred_region
    _
  $region41: #{tpu_custom_call.1} parent=0 // pred_fallthru
    _
  %v35 = vld [vmem:[%s0] sm:$0xff]
  %v36 = vld [vmem:[%s0 + $0x8] sm:$0xff]
  %v37 = vld [vmem:[%s0 + $0x10] sm:$0xff]
  %v38 = vld [vmem:[%s0 + $0x18] sm:$0xff]
  %v39 = vld [vmem:[%s0 + $0x20] sm:$0xff]
  %v40 = vld [vmem:[%s0 + $0x28] sm:$0xff]
  %v41 = vld [vmem:[%s0 + $0x30] sm:$0xff]
  %v42 = vld [vmem:[%s0 + $0x38] sm:$0xff]
  %v43 = vld [vmem:[%s0 + $0x40] sm:$0xff]
  %v44 = vld [vmem:[%s0 + $0x48] sm:$0xff]
  %v45 = vld [vmem:[%s0 + $0x50] sm:$0xff]
  %v46 = vld [vmem:[%s0 + $0x58] sm:$0xff]
  %v47 = vld [vmem:[%s0 + $0x60] sm:$0xff]
  %v48 = vld [vmem:[%s0 + $0x68] sm:$0xff]
  %v49 = vld [vmem:[%s0 + $0x70] sm:$0xff]
  %v50 = vld [vmem:[%s0 + $0x78] sm:$0xff]
  %v51 = vld [vmem:[%s0 + $0x80] sm:$0xff]
  %v52 = vld [vmem:[%s0 + $0x88] sm:$0xff]
  %v53 = vld [vmem:[%s0 + $0x90] sm:$0xff]
  %v54 = vld [vmem:[%s0 + $0x98] sm:$0xff]
  %v55 = vld [vmem:[%s0 + $0xa0] sm:$0xff]
  %v56 = vld [vmem:[%s0 + $0xa8] sm:$0xff]
  %v57 = vld [vmem:[%s0 + $0xb0] sm:$0xff]
  %v58 = vld [vmem:[%s0 + $0xb8] sm:$0xff]
  %v59 = vld [vmem:[%s0 + $0xc0] sm:$0xff]
  %v60 = vld [vmem:[%s0 + $0xc8] sm:$0xff]
  %v61 = vld [vmem:[%s0 + $0xd0] sm:$0xff]
  %v62 = vld [vmem:[%s0 + $0xd8] sm:$0xff]
  %v63 = vld [vmem:[%s0 + $0xe0] sm:$0xff]
  %v64 = vld [vmem:[%s0 + $0xe8] sm:$0xff]
  %v65 = vld [vmem:[%s0 + $0xf0] sm:$0xff]
  %v66 = vld [vmem:[%s0 + $0xf8] sm:$0xff]
  %v67 = vld [vmem:[%s0 + $0x100] sm:$0xff]
  %v68 = vld [vmem:[%s0 + $0x108] sm:$0xff]
  %v69 = vld [vmem:[%s0 + $0x110] sm:$0xff]
  %v70 = vld [vmem:[%s0 + $0x118] sm:$0xff]
  %v71 = vld [vmem:[%s0 + $0x120] sm:$0xff]
  %v72 = vld [vmem:[%s0 + $0x128] sm:$0xff]
  %v73 = vld [vmem:[%s0 + $0x130] sm:$0xff]
  %v74 = vld [vmem:[%s0 + $0x138] sm:$0xff]
  %v75 = vld [vmem:[%s0 + $0x140] sm:$0xff]
  %v76 = vld [vmem:[%s0 + $0x148] sm:$0xff]
  %v77 = vld [vmem:[%s0 + $0x150] sm:$0xff]
  %v78 = vld [vmem:[%s0 + $0x158] sm:$0xff]
  %v79 = vld [vmem:[%s0 + $0x160] sm:$0xff]
  %v80 = vld [vmem:[%s0 + $0x168] sm:$0xff]
  %v81 = vld [vmem:[%s0 + $0x170] sm:$0xff]
  %v82 = vld [vmem:[%s0 + $0x178] sm:$0xff]
  %v83 = vld [vmem:[%s0 + $0x180] sm:$0xff]
  %v84 = vld [vmem:[%s0 + $0x188] sm:$0xff]
  %v85 = vld [vmem:[%s0 + $0x190] sm:$0xff]
  %v86 = vld [vmem:[%s0 + $0x198] sm:$0xff]
  %v87 = vld [vmem:[%s0 + $0x1a0] sm:$0xff]
  %v88 = vld [vmem:[%s0 + $0x1a8] sm:$0xff]
  %v89 = vld [vmem:[%s0 + $0x1b0] sm:$0xff]
  %v90 = vld [vmem:[%s0 + $0x1b8] sm:$0xff]
  %v91 = vld [vmem:[%s0 + $0x1c0] sm:$0xff]
  %v92 = vld [vmem:[%s0 + $0x1c8] sm:$0xff]
  %v93 = vld [vmem:[%s0 + $0x1d0] sm:$0xff]
  %v94 = vld [vmem:[%s0 + $0x1d8] sm:$0xff]
  %v95 = vld [vmem:[%s0 + $0x1e0] sm:$0xff]
  %v96 = vld [vmem:[%s0 + $0x1e8] sm:$0xff]
  %v97 = vld [vmem:[%s0 + $0x1f0] sm:$0xff]
  %v98 = vld [vmem:[%s0 + $0x1f8] sm:$0xff]
  %v99 = vld [vmem:[%s2] sm:$0x3f]
  %v100 = vld [vmem:[%s3] sm:$0x1]
  %v102 = vlaneseq
  %v103 = vshrl.u32 %v102, 7
  %v104 = vsub.s32 0, %v103
  %v105 = vrot.slane %v100, %v104
  %vm107 = vcmask 48128
  %v109 = vsel %vm107, %v35, 0
  %v112 = vsel %vm107, %v36, 0
  %v115 = vsel %vm107, %v37, 0
  %v118 = vsel %vm107, %v38, 0
  %v121 = vsel %vm107, %v39, 0
  %v124 = vsel %vm107, %v40, 0
  %v127 = vsel %vm107, %v41, 0
  %v130 = vsel %vm107, %v42, 0
  %v133 = vsel %vm107, %v43, 0
  %v136 = vsel %vm107, %v44, 0
  %v139 = vsel %vm107, %v45, 0
  %v142 = vsel %vm107, %v46, 0
  %v145 = vsel %vm107, %v47, 0
  %v148 = vsel %vm107, %v48, 0
  %v151 = vsel %vm107, %v49, 0
  %v154 = vsel %vm107, %v50, 0
  %v157 = vsel %vm107, %v51, 0
  %v160 = vsel %vm107, %v52, 0
  %v163 = vsel %vm107, %v53, 0
  %v166 = vsel %vm107, %v54, 0
  %v169 = vsel %vm107, %v55, 0
  %v172 = vsel %vm107, %v56, 0
  %v175 = vsel %vm107, %v57, 0
  %v178 = vsel %vm107, %v58, 0
  %v181 = vsel %vm107, %v59, 0
  %v184 = vsel %vm107, %v60, 0
  %v187 = vsel %vm107, %v61, 0
  %v190 = vsel %vm107, %v62, 0
  %v193 = vsel %vm107, %v63, 0
  %v196 = vsel %vm107, %v64, 0
  %v199 = vsel %vm107, %v65, 0
  %v202 = vsel %vm107, %v66, 0
  %v205 = vsel %vm107, %v67, 0
  %v208 = vsel %vm107, %v68, 0
  %v211 = vsel %vm107, %v69, 0
  %v214 = vsel %vm107, %v70, 0
  %v217 = vsel %vm107, %v71, 0
  %v220 = vsel %vm107, %v72, 0
  %v223 = vsel %vm107, %v73, 0
  %v226 = vsel %vm107, %v74, 0
  %v229 = vsel %vm107, %v75, 0
  %v232 = vsel %vm107, %v76, 0
  %v235 = vsel %vm107, %v77, 0
  %v238 = vsel %vm107, %v78, 0
  %v241 = vsel %vm107, %v79, 0
  %v244 = vsel %vm107, %v80, 0
  %v247 = vsel %vm107, %v81, 0
  %v250 = vsel %vm107, %v82, 0
  %v253 = vsel %vm107, %v83, 0
  %v256 = vsel %vm107, %v84, 0
  %v259 = vsel %vm107, %v85, 0
  %v262 = vsel %vm107, %v86, 0
  %v265 = vsel %vm107, %v87, 0
  %v268 = vsel %vm107, %v88, 0
  %v271 = vsel %vm107, %v89, 0
  %v274 = vsel %vm107, %v90, 0
  %v277 = vsel %vm107, %v91, 0
  %v280 = vsel %vm107, %v92, 0
  %v283 = vsel %vm107, %v93, 0
  %v286 = vsel %vm107, %v94, 0
  %v289 = vsel %vm107, %v95, 0
  %v292 = vsel %vm107, %v96, 0
  %v295 = vsel %vm107, %v97, 0
  %v298 = vsel %vm107, %v98, 0
  %vm300 = vcmask 1045504
  %v302 = vsel %vm300, %v99, 0
  %304 = vmatprep.subr.mxu0 0.0
  %305 = vmatpush1.msra.mxu0 %v302
  %306 = vmatprep.subr.mxu0 0.0
  %307 = vmatpush1.msra.mxu0 0.0
  %308 = vmatprep.subr.mxu0 0.0
  %309 = vmatpush1.msra.mxu0 0.0
  %310 = vmatprep.subr.mxu0 0.0
  %311 = vmatpush1.msra.mxu0 0.0
  %312 = vmatprep.subr.mxu0 0.0
  %313 = vmatpush1.msra.mxu0 0.0
  %314 = vmatprep.subr.mxu0 0.0
  %315 = vmatpush1.msra.mxu0 0.0
  %316 = vmatprep.subr.mxu0 0.0
  %317 = vmatpush1.msra.mxu0 0.0
  %318 = vmatprep.subr.mxu0 0.0
  %319 = vmatpush1.msra.mxu0 0.0
  %320 = vmatprep.subr.mxu0 0.0
  %321 = vmatpush1.msra.mxu0 0.0
  %322 = vmatprep.subr.mxu0 0.0
  %323 = vmatpush1.msra.mxu0 0.0
  %324 = vmatprep.subr.mxu0 0.0
  %325 = vmatpush1.msra.mxu0 0.0
  %326 = vmatprep.subr.mxu0 0.0
  %327 = vmatpush1.msra.mxu0 0.0
  %328 = vmatprep.subr.mxu0 0.0
  %329 = vmatpush1.msra.mxu0 0.0
  %330 = vmatprep.subr.mxu0 0.0
  %331 = vmatpush1.msra.mxu0 0.0
  %332 = vmatprep.subr.mxu0 0.0
  %333 = vmatpush1.msra.mxu0 0.0
  %334 = vmatprep.subr.mxu0 0.0
  %335 = vmatpush1.msra.mxu0 0.0
  %336 = vmatprep.subr.mxu0 0.0
  %337 = vmatpush1.msra.mxu0 0.0
  %338 = vmatprep.subr.mxu0 0.0
  %339 = vmatpush1.msra.mxu0 0.0
  %340 = vmatprep.subr.mxu0 0.0
  %341 = vmatpush1.msra.mxu0 0.0
  %342 = vmatprep.subr.mxu0 0.0
  %343 = vmatpush1.msra.mxu0 0.0
  %344 = vmatprep.subr.mxu0 0.0
  %345 = vmatpush1.msra.mxu0 0.0
  %346 = vmatprep.subr.mxu0 0.0
  %347 = vmatpush1.msra.mxu0 0.0
  %348 = vmatprep.subr.mxu0 0.0
  %349 = vmatpush1.msra.mxu0 0.0
  %350 = vmatprep.subr.mxu0 0.0
  %351 = vmatpush1.msra.mxu0 0.0
  %352 = vmatprep.subr.mxu0 0.0
  %353 = vmatpush1.msra.mxu0 0.0
  %354 = vmatprep.subr.mxu0 0.0
  %355 = vmatpush1.msra.mxu0 0.0
  %356 = vmatprep.subr.mxu0 0.0
  %357 = vmatpush1.msra.mxu0 0.0
  %358 = vmatprep.subr.mxu0 0.0
  %359 = vmatpush1.msra.mxu0 0.0
  %360 = vmatprep.subr.mxu0 0.0
  %361 = vmatpush1.msra.mxu0 0.0
  %362 = vmatprep.subr.mxu0 0.0
  %363 = vmatpush1.msra.mxu0 0.0
  %364 = vmatprep.subr.mxu0 0.0
  %365 = vmatpush1.msra.mxu0 0.0
  %366 = vmatprep.subr.mxu0 0.0
  %367 = vmatpush1.msra.mxu0 0.0
  %368 = vmatprep.mubr.f32.mxu0 0.0
  %369 = vmatmul.mubr.f32.gmra.mrb[0].mxu0 %v109
  %v370 = vpop.f32.mrb[0].mxu0
  %v371 = vadd.f32 %v105, %v370
  %v372 = vpop.f32.mrb[0].mxu0
  %373 = vmatprep.mubr.f32.mxu0 0.0
  %374 = vmatmul.mubr.f32.gmra.mrb[0].mxu0 %v112
  %v375 = vpop.f32.mrb[0].mxu0
  %v376 = vadd.f32 %v105, %v375
  %v377 = vpop.f32.mrb[0].mxu0
  %378 = vmatprep.mubr.f32.mxu0 0.0
  %379 = vmatmul.mubr.f32.gmra.mrb[0].mxu0 %v115
  %v380 = vpop.f32.mrb[0].mxu0
  %v381 = vadd.f32 %v105, %v380
  %v382 = vpop.f32.mrb[0].mxu0
  %383 = vmatprep.mubr.f32.mxu0 0.0
  %384 = vmatmul.mubr.f32.gmra.mrb[0].mxu0 %v118
  %v385 = vpop.f32.mrb[0].mxu0
  %v386 = vadd.f32 %v105, %v385
  %v387 = vpop.f32.mrb[0].mxu0
  %388 = vmatprep.mubr.f32.mxu0 0.0
  %389 = vmatmul.mubr.f32.gmra.mrb[0].mxu0 %v121
  %v390 = vpop.f32.mrb[0].mxu0
  %v391 = vadd.f32 %v105, %v390
  %v392 = vpop.f32.mrb[0].mxu0
  %393 = vmatprep.mubr.f32.mxu0 0.0
  %394 = vmatmul.mubr.f32.gmra.mrb[0].mxu0 %v124
  %v395 = vpop.f32.mrb[0].mxu0
  %v396 = vadd.f32 %v105, %v395
  %v397 = vpop.f32.mrb[0].mxu0
  %398 = vmatprep.mubr.f32.mxu0 0.0
  %399 = vmatmul.mubr.f32.gmra.mrb[0].mxu0 %v127
  %v400 = vpop.f32.mrb[0].mxu0
  %v401 = vadd.f32 %v105, %v400
  %v402 = vpop.f32.mrb[0].mxu0
  %403 = vmatprep.mubr.f32.mxu0 0.0
  %404 = vmatmul.mubr.f32.gmra.mrb[0].mxu0 %v130
  %v405 = vpop.f32.mrb[0].mxu0
  %v406 = vadd.f32 %v105, %v405
  %v407 = vpop.f32.mrb[0].mxu0
  %408 = vmatprep.mubr.f32.mxu0 0.0
  %409 = vmatmul.mubr.f32.gmra.mrb[0].mxu0 %v133
  %v410 = vpop.f32.mrb[0].mxu0
  %v411 = vadd.f32 %v105, %v410
  %v412 = vpop.f32.mrb[0].mxu0
  %413 = vmatprep.mubr.f32.mxu0 0.0
  %414 = vmatmul.mubr.f32.gmra.mrb[0].mxu0 %v136
  %v415 = vpop.f32.mrb[0].mxu0
  %v416 = vadd.f32 %v105, %v415
  %v417 = vpop.f32.mrb[0].mxu0
  %418 = vmatprep.mubr.f32.mxu0 0.0
  %419 = vmatmul.mubr.f32.gmra.mrb[0].mxu0 %v139
  %v420 = vpop.f32.mrb[0].mxu0
  %v421 = vadd.f32 %v105, %v420
  %v422 = vpop.f32.mrb[0].mxu0
  %423 = vmatprep.mubr.f32.mxu0 0.0
  %424 = vmatmul.mubr.f32.gmra.mrb[0].mxu0 %v142
  %v425 = vpop.f32.mrb[0].mxu0
  %v426 = vadd.f32 %v105, %v425
  %v427 = vpop.f32.mrb[0].mxu0
  %428 = vmatprep.mubr.f32.mxu0 0.0
  %429 = vmatmul.mubr.f32.gmra.mrb[0].mxu0 %v145
  %v430 = vpop.f32.mrb[0].mxu0
  %v431 = vadd.f32 %v105, %v430
  %v432 = vpop.f32.mrb[0].mxu0
  %433 = vmatprep.mubr.f32.mxu0 0.0
  %434 = vmatmul.mubr.f32.gmra.mrb[0].mxu0 %v148
  %v435 = vpop.f32.mrb[0].mxu0
  %v436 = vadd.f32 %v105, %v435
  %v437 = vpop.f32.mrb[0].mxu0
  %438 = vmatprep.mubr.f32.mxu0 0.0
  %439 = vmatmul.mubr.f32.gmra.mrb[0].mxu0 %v151
  %v440 = vpop.f32.mrb[0].mxu0
  %v441 = vadd.f32 %v105, %v440
  %v442 = vpop.f32.mrb[0].mxu0
  %443 = vmatprep.mubr.f32.mxu0 0.0
  %444 = vmatmul.mubr.f32.gmra.mrb[0].mxu0 %v154
  %v445 = vpop.f32.mrb[0].mxu0
  %v446 = vadd.f32 %v105, %v445
  %v447 = vpop.f32.mrb[0].mxu0
  %448 = vmatprep.mubr.f32.mxu0 0.0
  %449 = vmatmul.mubr.f32.gmra.mrb[0].mxu0 %v157
  %v450 = vpop.f32.mrb[0].mxu0
  %v451 = vadd.f32 %v105, %v450
  %v452 = vpop.f32.mrb[0].mxu0
  %453 = vmatprep.mubr.f32.mxu0 0.0
  %454 = vmatmul.mubr.f32.gmra.mrb[0].mxu0 %v160
  %v455 = vpop.f32.mrb[0].mxu0
  %v456 = vadd.f32 %v105, %v455
  %v457 = vpop.f32.mrb[0].mxu0
  %458 = vmatprep.mubr.f32.mxu0 0.0
  %459 = vmatmul.mubr.f32.gmra.mrb[0].mxu0 %v163
  %v460 = vpop.f32.mrb[0].mxu0
  %v461 = vadd.f32 %v105, %v460
  %v462 = vpop.f32.mrb[0].mxu0
  %463 = vmatprep.mubr.f32.mxu0 0.0
  %464 = vmatmul.mubr.f32.gmra.mrb[0].mxu0 %v166
  %v465 = vpop.f32.mrb[0].mxu0
  %v466 = vadd.f32 %v105, %v465
  %v467 = vpop.f32.mrb[0].mxu0
  %468 = vmatprep.mubr.f32.mxu0 0.0
  %469 = vmatmul.mubr.f32.gmra.mrb[0].mxu0 %v169
  %v470 = vpop.f32.mrb[0].mxu0
  %v471 = vadd.f32 %v105, %v470
  %v472 = vpop.f32.mrb[0].mxu0
  %473 = vmatprep.mubr.f32.mxu0 0.0
  %474 = vmatmul.mubr.f32.gmra.mrb[0].mxu0 %v172
  %v475 = vpop.f32.mrb[0].mxu0
  %v476 = vadd.f32 %v105, %v475
  %v477 = vpop.f32.mrb[0].mxu0
  %478 = vmatprep.mubr.f32.mxu0 0.0
  %479 = vmatmul.mubr.f32.gmra.mrb[0].mxu0 %v175
  %v480 = vpop.f32.mrb[0].mxu0
  %v481 = vadd.f32 %v105, %v480
  %v482 = vpop.f32.mrb[0].mxu0
  %483 = vmatprep.mubr.f32.mxu0 0.0
  %484 = vmatmul.mubr.f32.gmra.mrb[0].mxu0 %v178
  %v485 = vpop.f32.mrb[0].mxu0
  %v486 = vadd.f32 %v105, %v485
  %v487 = vpop.f32.mrb[0].mxu0
  %488 = vmatprep.mubr.f32.mxu0 0.0
  %489 = vmatmul.mubr.f32.gmra.mrb[0].mxu0 %v181
  %v490 = vpop.f32.mrb[0].mxu0
  %v491 = vadd.f32 %v105, %v490
  %v492 = vpop.f32.mrb[0].mxu0
  %493 = vmatprep.mubr.f32.mxu0 0.0
  %494 = vmatmul.mubr.f32.gmra.mrb[0].mxu0 %v184
  %v495 = vpop.f32.mrb[0].mxu0
  %v496 = vadd.f32 %v105, %v495
  %v497 = vpop.f32.mrb[0].mxu0
  %498 = vmatprep.mubr.f32.mxu0 0.0
  %499 = vmatmul.mubr.f32.gmra.mrb[0].mxu0 %v187
  %v500 = vpop.f32.mrb[0].mxu0
  %v501 = vadd.f32 %v105, %v500
  %v502 = vpop.f32.mrb[0].mxu0
  %503 = vmatprep.mubr.f32.mxu0 0.0
  %504 = vmatmul.mubr.f32.gmra.mrb[0].mxu0 %v190
  %v505 = vpop.f32.mrb[0].mxu0
  %v506 = vadd.f32 %v105, %v505
  %v507 = vpop.f32.mrb[0].mxu0
  %508 = vmatprep.mubr.f32.mxu0 0.0
  %509 = vmatmul.mubr.f32.gmra.mrb[0].mxu0 %v193
  %v510 = vpop.f32.mrb[0].mxu0
  %v511 = vadd.f32 %v105, %v510
  %v512 = vpop.f32.mrb[0].mxu0
  %513 = vmatprep.mubr.f32.mxu0 0.0
  %514 = vmatmul.mubr.f32.gmra.mrb[0].mxu0 %v196
  %v515 = vpop.f32.mrb[0].mxu0
  %v516 = vadd.f32 %v105, %v515
  %v517 = vpop.f32.mrb[0].mxu0
  %518 = vmatprep.mubr.f32.mxu0 0.0
  %519 = vmatmul.mubr.f32.gmra.mrb[0].mxu0 %v199
  %v520 = vpop.f32.mrb[0].mxu0
  %v521 = vadd.f32 %v105, %v520
  %v522 = vpop.f32.mrb[0].mxu0
  %523 = vmatprep.mubr.f32.mxu0 0.0
  %524 = vmatmul.mubr.f32.gmra.mrb[0].mxu0 %v202
  %v525 = vpop.f32.mrb[0].mxu0
  %v526 = vadd.f32 %v105, %v525
  %v527 = vpop.f32.mrb[0].mxu0
  %528 = vmatprep.mubr.f32.mxu0 0.0
  %529 = vmatmul.mubr.f32.gmra.mrb[0].mxu0 %v205
  %v530 = vpop.f32.mrb[0].mxu0
  %v531 = vadd.f32 %v105, %v530
  %v532 = vpop.f32.mrb[0].mxu0
  %533 = vmatprep.mubr.f32.mxu0 0.0
  %534 = vmatmul.mubr.f32.gmra.mrb[0].mxu0 %v208
  %v535 = vpop.f32.mrb[0].mxu0
  %v536 = vadd.f32 %v105, %v535
  %v537 = vpop.f32.mrb[0].mxu0
  %538 = vmatprep.mubr.f32.mxu0 0.0
  %539 = vmatmul.mubr.f32.gmra.mrb[0].mxu0 %v211
  %v540 = vpop.f32.mrb[0].mxu0
  %v541 = vadd.f32 %v105, %v540
  %v542 = vpop.f32.mrb[0].mxu0
  %543 = vmatprep.mubr.f32.mxu0 0.0
  %544 = vmatmul.mubr.f32.gmra.mrb[0].mxu0 %v214
  %v545 = vpop.f32.mrb[0].mxu0
  %v546 = vadd.f32 %v105, %v545
  %v547 = vpop.f32.mrb[0].mxu0
  %548 = vmatprep.mubr.f32.mxu0 0.0
  %549 = vmatmul.mubr.f32.gmra.mrb[0].mxu0 %v217
  %v550 = vpop.f32.mrb[0].mxu0
  %v551 = vadd.f32 %v105, %v550
  %v552 = vpop.f32.mrb[0].mxu0
  %553 = vmatprep.mubr.f32.mxu0 0.0
  %554 = vmatmul.mubr.f32.gmra.mrb[0].mxu0 %v220
  %v555 = vpop.f32.mrb[0].mxu0
  %v556 = vadd.f32 %v105, %v555
  %v557 = vpop.f32.mrb[0].mxu0
  %558 = vmatprep.mubr.f32.mxu0 0.0
  %559 = vmatmul.mubr.f32.gmra.mrb[0].mxu0 %v223
  %v560 = vpop.f32.mrb[0].mxu0
  %v561 = vadd.f32 %v105, %v560
  %v562 = vpop.f32.mrb[0].mxu0
  %563 = vmatprep.mubr.f32.mxu0 0.0
  %564 = vmatmul.mubr.f32.gmra.mrb[0].mxu0 %v226
  %v565 = vpop.f32.mrb[0].mxu0
  %v566 = vadd.f32 %v105, %v565
  %v567 = vpop.f32.mrb[0].mxu0
  %568 = vmatprep.mubr.f32.mxu0 0.0
  %569 = vmatmul.mubr.f32.gmra.mrb[0].mxu0 %v229
  %v570 = vpop.f32.mrb[0].mxu0
  %v571 = vadd.f32 %v105, %v570
  %v572 = vpop.f32.mrb[0].mxu0
  %573 = vmatprep.mubr.f32.mxu0 0.0
  %574 = vmatmul.mubr.f32.gmra.mrb[0].mxu0 %v232
  %v575 = vpop.f32.mrb[0].mxu0
  %v576 = vadd.f32 %v105, %v575
  %v577 = vpop.f32.mrb[0].mxu0
  %578 = vmatprep.mubr.f32.mxu0 0.0
  %579 = vmatmul.mubr.f32.gmra.mrb[0].mxu0 %v235
  %v580 = vpop.f32.mrb[0].mxu0
  %v581 = vadd.f32 %v105, %v580
  %v582 = vpop.f32.mrb[0].mxu0
  %583 = vmatprep.mubr.f32.mxu0 0.0
  %584 = vmatmul.mubr.f32.gmra.mrb[0].mxu0 %v238
  %v585 = vpop.f32.mrb[0].mxu0
  %v586 = vadd.f32 %v105, %v585
  %v587 = vpop.f32.mrb[0].mxu0
  %588 = vmatprep.mubr.f32.mxu0 0.0
  %589 = vmatmul.mubr.f32.gmra.mrb[0].mxu0 %v241
  %v590 = vpop.f32.mrb[0].mxu0
  %v591 = vadd.f32 %v105, %v590
  %v592 = vpop.f32.mrb[0].mxu0
  %593 = vmatprep.mubr.f32.mxu0 0.0
  %594 = vmatmul.mubr.f32.gmra.mrb[0].mxu0 %v244
  %v595 = vpop.f32.mrb[0].mxu0
  %v596 = vadd.f32 %v105, %v595
  %v597 = vpop.f32.mrb[0].mxu0
  %598 = vmatprep.mubr.f32.mxu0 0.0
  %599 = vmatmul.mubr.f32.gmra.mrb[0].mxu0 %v247
  %v600 = vpop.f32.mrb[0].mxu0
  %v601 = vadd.f32 %v105, %v600
  %v602 = vpop.f32.mrb[0].mxu0
  %603 = vmatprep.mubr.f32.mxu0 0.0
  %604 = vmatmul.mubr.f32.gmra.mrb[0].mxu0 %v250
  %v605 = vpop.f32.mrb[0].mxu0
  %v606 = vadd.f32 %v105, %v605
  %v607 = vpop.f32.mrb[0].mxu0
  %608 = vmatprep.mubr.f32.mxu0 0.0
  %609 = vmatmul.mubr.f32.gmra.mrb[0].mxu0 %v253
  %v610 = vpop.f32.mrb[0].mxu0
  %v611 = vadd.f32 %v105, %v610
  %v612 = vpop.f32.mrb[0].mxu0
  %613 = vmatprep.mubr.f32.mxu0 0.0
  %614 = vmatmul.mubr.f32.gmra.mrb[0].mxu0 %v256
  %v615 = vpop.f32.mrb[0].mxu0
  %v616 = vadd.f32 %v105, %v615
  %v617 = vpop.f32.mrb[0].mxu0
  %618 = vmatprep.mubr.f32.mxu0 0.0
  %619 = vmatmul.mubr.f32.gmra.mrb[0].mxu0 %v259
  %v620 = vpop.f32.mrb[0].mxu0
  %v621 = vadd.f32 %v105, %v620
  %v622 = vpop.f32.mrb[0].mxu0
  %623 = vmatprep.mubr.f32.mxu0 0.0
  %624 = vmatmul.mubr.f32.gmra.mrb[0].mxu0 %v262
  %v625 = vpop.f32.mrb[0].mxu0
  %v626 = vadd.f32 %v105, %v625
  %v627 = vpop.f32.mrb[0].mxu0
  %628 = vmatprep.mubr.f32.mxu0 0.0
  %629 = vmatmul.mubr.f32.gmra.mrb[0].mxu0 %v265
  %v630 = vpop.f32.mrb[0].mxu0
  %v631 = vadd.f32 %v105, %v630
  %v632 = vpop.f32.mrb[0].mxu0
  %633 = vmatprep.mubr.f32.mxu0 0.0
  %634 = vmatmul.mubr.f32.gmra.mrb[0].mxu0 %v268
  %v635 = vpop.f32.mrb[0].mxu0
  %v636 = vadd.f32 %v105, %v635
  %v637 = vpop.f32.mrb[0].mxu0
  %638 = vmatprep.mubr.f32.mxu0 0.0
  %639 = vmatmul.mubr.f32.gmra.mrb[0].mxu0 %v271
  %v640 = vpop.f32.mrb[0].mxu0
  %v641 = vadd.f32 %v105, %v640
  %v642 = vpop.f32.mrb[0].mxu0
  %643 = vmatprep.mubr.f32.mxu0 0.0
  %644 = vmatmul.mubr.f32.gmra.mrb[0].mxu0 %v274
  %v645 = vpop.f32.mrb[0].mxu0
  %v646 = vadd.f32 %v105, %v645
  %v647 = vpop.f32.mrb[0].mxu0
  %648 = vmatprep.mubr.f32.mxu0 0.0
  %649 = vmatmul.mubr.f32.gmra.mrb[0].mxu0 %v277
  %v650 = vpop.f32.mrb[0].mxu0
  %v651 = vadd.f32 %v105, %v650
  %v652 = vpop.f32.mrb[0].mxu0
  %653 = vmatprep.mubr.f32.mxu0 0.0
  %654 = vmatmul.mubr.f32.gmra.mrb[0].mxu0 %v280
  %v655 = vpop.f32.mrb[0].mxu0
  %v656 = vadd.f32 %v105, %v655
  %v657 = vpop.f32.mrb[0].mxu0
  %658 = vmatprep.mubr.f32.mxu0 0.0
  %659 = vmatmul.mubr.f32.gmra.mrb[0].mxu0 %v283
  %v660 = vpop.f32.mrb[0].mxu0
  %v661 = vadd.f32 %v105, %v660
  %v662 = vpop.f32.mrb[0].mxu0
  %663 = vmatprep.mubr.f32.mxu0 0.0
  %664 = vmatmul.mubr.f32.gmra.mrb[0].mxu0 %v286
  %v665 = vpop.f32.mrb[0].mxu0
  %v666 = vadd.f32 %v105, %v665
  %v667 = vpop.f32.mrb[0].mxu0
  %668 = vmatprep.mubr.f32.mxu0 0.0
  %669 = vmatmul.mubr.f32.gmra.mrb[0].mxu0 %v289
  %v670 = vpop.f32.mrb[0].mxu0
  %v671 = vadd.f32 %v105, %v670
  %v672 = vpop.f32.mrb[0].mxu0
  %673 = vmatprep.mubr.f32.mxu0 0.0
  %674 = vmatmul.mubr.f32.gmra.mrb[0].mxu0 %v292
  %v675 = vpop.f32.mrb[0].mxu0
  %v676 = vadd.f32 %v105, %v675
  %v677 = vpop.f32.mrb[0].mxu0
  %678 = vmatprep.mubr.f32.mxu0 0.0
  %679 = vmatmul.mubr.f32.gmra.mrb[0].mxu0 %v295
  %v680 = vpop.f32.mrb[0].mxu0
  %v681 = vadd.f32 %v105, %v680
  %v682 = vpop.f32.mrb[0].mxu0
  %683 = vmatprep.mubr.f32.mxu0 0.0
  %684 = vmatmul.mubr.f32.gmra.mrb[0].mxu0 %v298
  %v685 = vpop.f32.mrb[0].mxu0
  %v686 = vadd.f32 %v105, %v685
  %v687 = vpop.f32.mrb[0].mxu0
  %688 = vdwg.mxu0
  %v689 = vmax.f32 %v371, 0.0
  %v690 = vmax.f32 %v376, 0.0
  %v691 = vmax.f32 %v381, 0.0
  %v692 = vmax.f32 %v386, 0.0
  %v693 = vmax.f32 %v391, 0.0
  %v694 = vmax.f32 %v396, 0.0
  %v695 = vmax.f32 %v401, 0.0
  %v696 = vmax.f32 %v406, 0.0
  %v697 = vmax.f32 %v411, 0.0
  %v698 = vmax.f32 %v416, 0.0
  %v699 = vmax.f32 %v421, 0.0
  %v700 = vmax.f32 %v426, 0.0
  %v701 = vmax.f32 %v431, 0.0
  %v702 = vmax.f32 %v436, 0.0
  %v703 = vmax.f32 %v441, 0.0
  %v704 = vmax.f32 %v446, 0.0
  %v705 = vmax.f32 %v451, 0.0
  %v706 = vmax.f32 %v456, 0.0
  %v707 = vmax.f32 %v461, 0.0
  %v708 = vmax.f32 %v466, 0.0
  %v709 = vmax.f32 %v471, 0.0
  %v710 = vmax.f32 %v476, 0.0
  %v711 = vmax.f32 %v481, 0.0
  %v712 = vmax.f32 %v486, 0.0
  %v713 = vmax.f32 %v491, 0.0
  %v714 = vmax.f32 %v496, 0.0
  %v715 = vmax.f32 %v501, 0.0
  %v716 = vmax.f32 %v506, 0.0
  %v717 = vmax.f32 %v511, 0.0
  %v718 = vmax.f32 %v516, 0.0
  %v719 = vmax.f32 %v521, 0.0
  %v720 = vmax.f32 %v526, 0.0
  %v721 = vmax.f32 %v531, 0.0
  %v722 = vmax.f32 %v536, 0.0
  %v723 = vmax.f32 %v541, 0.0
  %v724 = vmax.f32 %v546, 0.0
  %v725 = vmax.f32 %v551, 0.0
  %v726 = vmax.f32 %v556, 0.0
  %v727 = vmax.f32 %v561, 0.0
  %v728 = vmax.f32 %v566, 0.0
  %v729 = vmax.f32 %v571, 0.0
  %v730 = vmax.f32 %v576, 0.0
  %v731 = vmax.f32 %v581, 0.0
  %v732 = vmax.f32 %v586, 0.0
  %v733 = vmax.f32 %v591, 0.0
  %v734 = vmax.f32 %v596, 0.0
  %v735 = vmax.f32 %v601, 0.0
  %v736 = vmax.f32 %v606, 0.0
  %v737 = vmax.f32 %v611, 0.0
  %v738 = vmax.f32 %v616, 0.0
  %v739 = vmax.f32 %v621, 0.0
  %v740 = vmax.f32 %v626, 0.0
  %v741 = vmax.f32 %v631, 0.0
  %v742 = vmax.f32 %v636, 0.0
  %v743 = vmax.f32 %v641, 0.0
  %v744 = vmax.f32 %v646, 0.0
  %v745 = vmax.f32 %v651, 0.0
  %v746 = vmax.f32 %v656, 0.0
  %v747 = vmax.f32 %v661, 0.0
  %v748 = vmax.f32 %v666, 0.0
  %v749 = vmax.f32 %v671, 0.0
  %v750 = vmax.f32 %v676, 0.0
  %v751 = vmax.f32 %v681, 0.0
  %v752 = vmax.f32 %v686, 0.0
  %v753 = vld [vmem:[%s4] sm:$0xff]
  %v754 = vld [vmem:[%s4 + $0x8] sm:$0xff]
  %v755 = vld [vmem:[%s5] sm:$0x1]
  %v757 = vlaneseq
  %v758 = vshrl.u32 %v757, 7
  %v759 = vsub.s32 0, %v758
  %v760 = vrot.slane %v755, %v759
  %vm762 = vcmask 130048
  %v764 = vsel %vm762, %v689, 0
  %v767 = vsel %vm762, %v690, 0
  %v770 = vsel %vm762, %v691, 0
  %v773 = vsel %vm762, %v692, 0
  %v776 = vsel %vm762, %v693, 0
  %v779 = vsel %vm762, %v694, 0
  %v782 = vsel %vm762, %v695, 0
  %v785 = vsel %vm762, %v696, 0
  %v788 = vsel %vm762, %v697, 0
  %v791 = vsel %vm762, %v698, 0
  %v794 = vsel %vm762, %v699, 0
  %v797 = vsel %vm762, %v700, 0
  %v800 = vsel %vm762, %v701, 0
  %v803 = vsel %vm762, %v702, 0
  %v806 = vsel %vm762, %v703, 0
  %v809 = vsel %vm762, %v704, 0
  %v812 = vsel %vm762, %v705, 0
  %v815 = vsel %vm762, %v706, 0
  %v818 = vsel %vm762, %v707, 0
  %v821 = vsel %vm762, %v708, 0
  %v824 = vsel %vm762, %v709, 0
  %v827 = vsel %vm762, %v710, 0
  %v830 = vsel %vm762, %v711, 0
  %v833 = vsel %vm762, %v712, 0
  %v836 = vsel %vm762, %v713, 0
  %v839 = vsel %vm762, %v714, 0
  %v842 = vsel %vm762, %v715, 0
  %v845 = vsel %vm762, %v716, 0
  %v848 = vsel %vm762, %v717, 0
  %v851 = vsel %vm762, %v718, 0
  %v854 = vsel %vm762, %v719, 0
  %v857 = vsel %vm762, %v720, 0
  %v860 = vsel %vm762, %v721, 0
  %v863 = vsel %vm762, %v722, 0
  %v866 = vsel %vm762, %v723, 0
  %v869 = vsel %vm762, %v724, 0
  %v872 = vsel %vm762, %v725, 0
  %v875 = vsel %vm762, %v726, 0
  %v878 = vsel %vm762, %v727, 0
  %v881 = vsel %vm762, %v728, 0
  %v884 = vsel %vm762, %v729, 0
  %v887 = vsel %vm762, %v730, 0
  %v890 = vsel %vm762, %v731, 0
  %v893 = vsel %vm762, %v732, 0
  %v896 = vsel %vm762, %v733, 0
  %v899 = vsel %vm762, %v734, 0
  %v902 = vsel %vm762, %v735, 0
  %v905 = vsel %vm762, %v736, 0
  %v908 = vsel %vm762, %v737, 0
  %v911 = vsel %vm762, %v738, 0
  %v914 = vsel %vm762, %v739, 0
  %v917 = vsel %vm762, %v740, 0
  %v920 = vsel %vm762, %v741, 0
  %v923 = vsel %vm762, %v742, 0
  %v926 = vsel %vm762, %v743, 0
  %v929 = vsel %vm762, %v744, 0
  %v932 = vsel %vm762, %v745, 0
  %v935 = vsel %vm762, %v746, 0
  %v938 = vsel %vm762, %v747, 0
  %v941 = vsel %vm762, %v748, 0
  %v944 = vsel %vm762, %v749, 0
  %v947 = vsel %vm762, %v750, 0
  %v950 = vsel %vm762, %v751, 0
  %v953 = vsel %vm762, %v752, 0
  %955 = vmatprep.subr.mxu0 0.0
  %956 = vmatpush1.msra.mxu0 %v753
  %957 = vmatprep.subr.mxu0 0.0
  %958 = vmatpush1.msra.mxu0 %v754
  %959 = vmatprep.subr.mxu0 0.0
  %960 = vmatpush1.msra.mxu0 0.0
  %961 = vmatprep.subr.mxu0 0.0
  %962 = vmatpush1.msra.mxu0 0.0
  %963 = vmatprep.subr.mxu0 0.0
  %964 = vmatpush1.msra.mxu0 0.0
  %965 = vmatprep.subr.mxu0 0.0
  %966 = vmatpush1.msra.mxu0 0.0
  %967 = vmatprep.subr.mxu0 0.0
  %968 = vmatpush1.msra.mxu0 0.0
  %969 = vmatprep.subr.mxu0 0.0
  %970 = vmatpush1.msra.mxu0 0.0
  %971 = vmatprep.subr.mxu0 0.0
  %972 = vmatpush1.msra.mxu0 0.0
  %973 = vmatprep.subr.mxu0 0.0
  %974 = vmatpush1.msra.mxu0 0.0
  %975 = vmatprep.subr.mxu0 0.0
  %976 = vmatpush1.msra.mxu0 0.0
  %977 = vmatprep.subr.mxu0 0.0
  %978 = vmatpush1.msra.mxu0 0.0
  %979 = vmatprep.subr.mxu0 0.0
  %980 = vmatpush1.msra.mxu0 0.0
  %981 = vmatprep.subr.mxu0 0.0
  %982 = vmatpush1.msra.mxu0 0.0
  %983 = vmatprep.subr.mxu0 0.0
  %984 = vmatpush1.msra.mxu0 0.0
  %985 = vmatprep.subr.mxu0 0.0
  %986 = vmatpush1.msra.mxu0 0.0
  %987 = vmatprep.subr.mxu0 0.0
  %988 = vmatpush1.msra.mxu0 0.0
  %989 = vmatprep.subr.mxu0 0.0
  %990 = vmatpush1.msra.mxu0 0.0
  %991 = vmatprep.subr.mxu0 0.0
  %992 = vmatpush1.msra.mxu0 0.0
  %993 = vmatprep.subr.mxu0 0.0
  %994 = vmatpush1.msra.mxu0 0.0
  %995 = vmatprep.subr.mxu0 0.0
  %996 = vmatpush1.msra.mxu0 0.0
  %997 = vmatprep.subr.mxu0 0.0
  %998 = vmatpush1.msra.mxu0 0.0
  %999 = vmatprep.subr.mxu0 0.0
  %1000 = vmatpush1.msra.mxu0 0.0
  %1001 = vmatprep.subr.mxu0 0.0
  %1002 = vmatpush1.msra.mxu0 0.0
  %1003 = vmatprep.subr.mxu0 0.0
  %1004 = vmatpush1.msra.mxu0 0.0
  %1005 = vmatprep.subr.mxu0 0.0
  %1006 = vmatpush1.msra.mxu0 0.0
  %1007 = vmatprep.subr.mxu0 0.0
  %1008 = vmatpush1.msra.mxu0 0.0
  %1009 = vmatprep.subr.mxu0 0.0
  %1010 = vmatpush1.msra.mxu0 0.0
  %1011 = vmatprep.subr.mxu0 0.0
  %1012 = vmatpush1.msra.mxu0 0.0
  %1013 = vmatprep.subr.mxu0 0.0
  %1014 = vmatpush1.msra.mxu0 0.0
  %1015 = vmatprep.subr.mxu0 0.0
  %1016 = vmatpush1.msra.mxu0 0.0
  %1017 = vmatprep.subr.mxu0 0.0
  %1018 = vmatpush1.msra.mxu0 0.0
  %1019 = vmatprep.mubr.f32.mxu0 0.0
  %1020 = vmatmul.mubr.f32.gmra.mrb[0].mxu0 %v764
  %v1021 = vpop.f32.mrb[0].mxu0
  %v1022 = vadd.f32 %v760, %v1021
  %v1023 = vpop.f32.mrb[0].mxu0
  %1024 = vmatprep.mubr.f32.mxu0 0.0
  %1025 = vmatmul.mubr.f32.gmra.mrb[0].mxu0 %v767
  %v1026 = vpop.f32.mrb[0].mxu0
  %v1027 = vadd.f32 %v760, %v1026
  %v1028 = vpop.f32.mrb[0].mxu0
  %1029 = vmatprep.mubr.f32.mxu0 0.0
  %1030 = vmatmul.mubr.f32.gmra.mrb[0].mxu0 %v770
  %v1031 = vpop.f32.mrb[0].mxu0
  %v1032 = vadd.f32 %v760, %v1031
  %v1033 = vpop.f32.mrb[0].mxu0
  %1034 = vmatprep.mubr.f32.mxu0 0.0
  %1035 = vmatmul.mubr.f32.gmra.mrb[0].mxu0 %v773
  %v1036 = vpop.f32.mrb[0].mxu0
  %v1037 = vadd.f32 %v760, %v1036
  %v1038 = vpop.f32.mrb[0].mxu0
  %1039 = vmatprep.mubr.f32.mxu0 0.0
  %1040 = vmatmul.mubr.f32.gmra.mrb[0].mxu0 %v776
  %v1041 = vpop.f32.mrb[0].mxu0
  %v1042 = vadd.f32 %v760, %v1041
  %v1043 = vpop.f32.mrb[0].mxu0
  %1044 = vmatprep.mubr.f32.mxu0 0.0
  %1045 = vmatmul.mubr.f32.gmra.mrb[0].mxu0 %v779
  %v1046 = vpop.f32.mrb[0].mxu0
  %v1047 = vadd.f32 %v760, %v1046
  %v1048 = vpop.f32.mrb[0].mxu0
  %1049 = vmatprep.mubr.f32.mxu0 0.0
  %1050 = vmatmul.mubr.f32.gmra.mrb[0].mxu0 %v782
  %v1051 = vpop.f32.mrb[0].mxu0
  %v1052 = vadd.f32 %v760, %v1051
  %v1053 = vpop.f32.mrb[0].mxu0
  %1054 = vmatprep.mubr.f32.mxu0 0.0
  %1055 = vmatmul.mubr.f32.gmra.mrb[0].mxu0 %v785
  %v1056 = vpop.f32.mrb[0].mxu0
  %v1057 = vadd.f32 %v760, %v1056
  %v1058 = vpop.f32.mrb[0].mxu0
  %1059 = vmatprep.mubr.f32.mxu0 0.0
  %1060 = vmatmul.mubr.f32.gmra.mrb[0].mxu0 %v788
  %v1061 = vpop.f32.mrb[0].mxu0
  %v1062 = vadd.f32 %v760, %v1061
  %v1063 = vpop.f32.mrb[0].mxu0
  %1064 = vmatprep.mubr.f32.mxu0 0.0
  %1065 = vmatmul.mubr.f32.gmra.mrb[0].mxu0 %v791
  %v1066 = vpop.f32.mrb[0].mxu0
  %v1067 = vadd.f32 %v760, %v1066
  %v1068 = vpop.f32.mrb[0].mxu0
  %1069 = vmatprep.mubr.f32.mxu0 0.0
  %1070 = vmatmul.mubr.f32.gmra.mrb[0].mxu0 %v794
  %v1071 = vpop.f32.mrb[0].mxu0
  %v1072 = vadd.f32 %v760, %v1071
  %v1073 = vpop.f32.mrb[0].mxu0
  %1074 = vmatprep.mubr.f32.mxu0 0.0
  %1075 = vmatmul.mubr.f32.gmra.mrb[0].mxu0 %v797
  %v1076 = vpop.f32.mrb[0].mxu0
  %v1077 = vadd.f32 %v760, %v1076
  %v1078 = vpop.f32.mrb[0].mxu0
  %1079 = vmatprep.mubr.f32.mxu0 0.0
  %1080 = vmatmul.mubr.f32.gmra.mrb[0].mxu0 %v800
  %v1081 = vpop.f32.mrb[0].mxu0
  %v1082 = vadd.f32 %v760, %v1081
  %v1083 = vpop.f32.mrb[0].mxu0
  %1084 = vmatprep.mubr.f32.mxu0 0.0
  %1085 = vmatmul.mubr.f32.gmra.mrb[0].mxu0 %v803
  %v1086 = vpop.f32.mrb[0].mxu0
  %v1087 = vadd.f32 %v760, %v1086
  %v1088 = vpop.f32.mrb[0].mxu0
  %1089 = vmatprep.mubr.f32.mxu0 0.0
  %1090 = vmatmul.mubr.f32.gmra.mrb[0].mxu0 %v806
  %v1091 = vpop.f32.mrb[0].mxu0
  %v1092 = vadd.f32 %v760, %v1091
  %v1093 = vpop.f32.mrb[0].mxu0
  %1094 = vmatprep.mubr.f32.mxu0 0.0
  %1095 = vmatmul.mubr.f32.gmra.mrb[0].mxu0 %v809
  %v1096 = vpop.f32.mrb[0].mxu0
  %v1097 = vadd.f32 %v760, %v1096
  %v1098 = vpop.f32.mrb[0].mxu0
  %1099 = vmatprep.mubr.f32.mxu0 0.0
  %1100 = vmatmul.mubr.f32.gmra.mrb[0].mxu0 %v812
  %v1101 = vpop.f32.mrb[0].mxu0
  %v1102 = vadd.f32 %v760, %v1101
  %v1103 = vpop.f32.mrb[0].mxu0
  %1104 = vmatprep.mubr.f32.mxu0 0.0
  %1105 = vmatmul.mubr.f32.gmra.mrb[0].mxu0 %v815
  %v1106 = vpop.f32.mrb[0].mxu0
  %v1107 = vadd.f32 %v760, %v1106
  %v1108 = vpop.f32.mrb[0].mxu0
  %1109 = vmatprep.mubr.f32.mxu0 0.0
  %1110 = vmatmul.mubr.f32.gmra.mrb[0].mxu0 %v818
  %v1111 = vpop.f32.mrb[0].mxu0
  %v1112 = vadd.f32 %v760, %v1111
  %v1113 = vpop.f32.mrb[0].mxu0
  %1114 = vmatprep.mubr.f32.mxu0 0.0
  %1115 = vmatmul.mubr.f32.gmra.mrb[0].mxu0 %v821
  %v1116 = vpop.f32.mrb[0].mxu0
  %v1117 = vadd.f32 %v760, %v1116
  %v1118 = vpop.f32.mrb[0].mxu0
  %1119 = vmatprep.mubr.f32.mxu0 0.0
  %1120 = vmatmul.mubr.f32.gmra.mrb[0].mxu0 %v824
  %v1121 = vpop.f32.mrb[0].mxu0
  %v1122 = vadd.f32 %v760, %v1121
  %v1123 = vpop.f32.mrb[0].mxu0
  %1124 = vmatprep.mubr.f32.mxu0 0.0
  %1125 = vmatmul.mubr.f32.gmra.mrb[0].mxu0 %v827
  %v1126 = vpop.f32.mrb[0].mxu0
  %v1127 = vadd.f32 %v760, %v1126
  %v1128 = vpop.f32.mrb[0].mxu0
  %1129 = vmatprep.mubr.f32.mxu0 0.0
  %1130 = vmatmul.mubr.f32.gmra.mrb[0].mxu0 %v830
  %v1131 = vpop.f32.mrb[0].mxu0
  %v1132 = vadd.f32 %v760, %v1131
  %v1133 = vpop.f32.mrb[0].mxu0
  %1134 = vmatprep.mubr.f32.mxu0 0.0
  %1135 = vmatmul.mubr.f32.gmra.mrb[0].mxu0 %v833
  %v1136 = vpop.f32.mrb[0].mxu0
  %v1137 = vadd.f32 %v760, %v1136
  %v1138 = vpop.f32.mrb[0].mxu0
  %1139 = vmatprep.mubr.f32.mxu0 0.0
  %1140 = vmatmul.mubr.f32.gmra.mrb[0].mxu0 %v836
  %v1141 = vpop.f32.mrb[0].mxu0
  %v1142 = vadd.f32 %v760, %v1141
  %v1143 = vpop.f32.mrb[0].mxu0
  %1144 = vmatprep.mubr.f32.mxu0 0.0
  %1145 = vmatmul.mubr.f32.gmra.mrb[0].mxu0 %v839
  %v1146 = vpop.f32.mrb[0].mxu0
  %v1147 = vadd.f32 %v760, %v1146
  %v1148 = vpop.f32.mrb[0].mxu0
  %1149 = vmatprep.mubr.f32.mxu0 0.0
  %1150 = vmatmul.mubr.f32.gmra.mrb[0].mxu0 %v842
  %v1151 = vpop.f32.mrb[0].mxu0
  %v1152 = vadd.f32 %v760, %v1151
  %v1153 = vpop.f32.mrb[0].mxu0
  %1154 = vmatprep.mubr.f32.mxu0 0.0
  %1155 = vmatmul.mubr.f32.gmra.mrb[0].mxu0 %v845
  %v1156 = vpop.f32.mrb[0].mxu0
  %v1157 = vadd.f32 %v760, %v1156
  %v1158 = vpop.f32.mrb[0].mxu0
  %1159 = vmatprep.mubr.f32.mxu0 0.0
  %1160 = vmatmul.mubr.f32.gmra.mrb[0].mxu0 %v848
  %v1161 = vpop.f32.mrb[0].mxu0
  %v1162 = vadd.f32 %v760, %v1161
  %v1163 = vpop.f32.mrb[0].mxu0
  %1164 = vmatprep.mubr.f32.mxu0 0.0
  %1165 = vmatmul.mubr.f32.gmra.mrb[0].mxu0 %v851
  %v1166 = vpop.f32.mrb[0].mxu0
  %v1167 = vadd.f32 %v760, %v1166
  %v1168 = vpop.f32.mrb[0].mxu0
  %1169 = vmatprep.mubr.f32.mxu0 0.0
  %1170 = vmatmul.mubr.f32.gmra.mrb[0].mxu0 %v854
  %v1171 = vpop.f32.mrb[0].mxu0
  %v1172 = vadd.f32 %v760, %v1171
  %v1173 = vpop.f32.mrb[0].mxu0
  %1174 = vmatprep.mubr.f32.mxu0 0.0
  %1175 = vmatmul.mubr.f32.gmra.mrb[0].mxu0 %v857
  %v1176 = vpop.f32.mrb[0].mxu0
  %v1177 = vadd.f32 %v760, %v1176
  %v1178 = vpop.f32.mrb[0].mxu0
  %1179 = vmatprep.mubr.f32.mxu0 0.0
  %1180 = vmatmul.mubr.f32.gmra.mrb[0].mxu0 %v860
  %v1181 = vpop.f32.mrb[0].mxu0
  %v1182 = vadd.f32 %v760, %v1181
  %v1183 = vpop.f32.mrb[0].mxu0
  %1184 = vmatprep.mubr.f32.mxu0 0.0
  %1185 = vmatmul.mubr.f32.gmra.mrb[0].mxu0 %v863
  %v1186 = vpop.f32.mrb[0].mxu0
  %v1187 = vadd.f32 %v760, %v1186
  %v1188 = vpop.f32.mrb[0].mxu0
  %1189 = vmatprep.mubr.f32.mxu0 0.0
  %1190 = vmatmul.mubr.f32.gmra.mrb[0].mxu0 %v866
  %v1191 = vpop.f32.mrb[0].mxu0
  %v1192 = vadd.f32 %v760, %v1191
  %v1193 = vpop.f32.mrb[0].mxu0
  %1194 = vmatprep.mubr.f32.mxu0 0.0
  %1195 = vmatmul.mubr.f32.gmra.mrb[0].mxu0 %v869
  %v1196 = vpop.f32.mrb[0].mxu0
  %v1197 = vadd.f32 %v760, %v1196
  %v1198 = vpop.f32.mrb[0].mxu0
  %1199 = vmatprep.mubr.f32.mxu0 0.0
  %1200 = vmatmul.mubr.f32.gmra.mrb[0].mxu0 %v872
  %v1201 = vpop.f32.mrb[0].mxu0
  %v1202 = vadd.f32 %v760, %v1201
  %v1203 = vpop.f32.mrb[0].mxu0
  %1204 = vmatprep.mubr.f32.mxu0 0.0
  %1205 = vmatmul.mubr.f32.gmra.mrb[0].mxu0 %v875
  %v1206 = vpop.f32.mrb[0].mxu0
  %v1207 = vadd.f32 %v760, %v1206
  %v1208 = vpop.f32.mrb[0].mxu0
  %1209 = vmatprep.mubr.f32.mxu0 0.0
  %1210 = vmatmul.mubr.f32.gmra.mrb[0].mxu0 %v878
  %v1211 = vpop.f32.mrb[0].mxu0
  %v1212 = vadd.f32 %v760, %v1211
  %v1213 = vpop.f32.mrb[0].mxu0
  %1214 = vmatprep.mubr.f32.mxu0 0.0
  %1215 = vmatmul.mubr.f32.gmra.mrb[0].mxu0 %v881
  %v1216 = vpop.f32.mrb[0].mxu0
  %v1217 = vadd.f32 %v760, %v1216
  %v1218 = vpop.f32.mrb[0].mxu0
  %1219 = vmatprep.mubr.f32.mxu0 0.0
  %1220 = vmatmul.mubr.f32.gmra.mrb[0].mxu0 %v884
  %v1221 = vpop.f32.mrb[0].mxu0
  %v1222 = vadd.f32 %v760, %v1221
  %v1223 = vpop.f32.mrb[0].mxu0
  %1224 = vmatprep.mubr.f32.mxu0 0.0
  %1225 = vmatmul.mubr.f32.gmra.mrb[0].mxu0 %v887
  %v1226 = vpop.f32.mrb[0].mxu0
  %v1227 = vadd.f32 %v760, %v1226
  %v1228 = vpop.f32.mrb[0].mxu0
  %1229 = vmatprep.mubr.f32.mxu0 0.0
  %1230 = vmatmul.mubr.f32.gmra.mrb[0].mxu0 %v890
  %v1231 = vpop.f32.mrb[0].mxu0
  %v1232 = vadd.f32 %v760, %v1231
  %v1233 = vpop.f32.mrb[0].mxu0
  %1234 = vmatprep.mubr.f32.mxu0 0.0
  %1235 = vmatmul.mubr.f32.gmra.mrb[0].mxu0 %v893
  %v1236 = vpop.f32.mrb[0].mxu0
  %v1237 = vadd.f32 %v760, %v1236
  %v1238 = vpop.f32.mrb[0].mxu0
  %1239 = vmatprep.mubr.f32.mxu0 0.0
  %1240 = vmatmul.mubr.f32.gmra.mrb[0].mxu0 %v896
  %v1241 = vpop.f32.mrb[0].mxu0
  %v1242 = vadd.f32 %v760, %v1241
  %v1243 = vpop.f32.mrb[0].mxu0
  %1244 = vmatprep.mubr.f32.mxu0 0.0
  %1245 = vmatmul.mubr.f32.gmra.mrb[0].mxu0 %v899
  %v1246 = vpop.f32.mrb[0].mxu0
  %v1247 = vadd.f32 %v760, %v1246
  %v1248 = vpop.f32.mrb[0].mxu0
  %1249 = vmatprep.mubr.f32.mxu0 0.0
  %1250 = vmatmul.mubr.f32.gmra.mrb[0].mxu0 %v902
  %v1251 = vpop.f32.mrb[0].mxu0
  %v1252 = vadd.f32 %v760, %v1251
  %v1253 = vpop.f32.mrb[0].mxu0
  %1254 = vmatprep.mubr.f32.mxu0 0.0
  %1255 = vmatmul.mubr.f32.gmra.mrb[0].mxu0 %v905
  %v1256 = vpop.f32.mrb[0].mxu0
  %v1257 = vadd.f32 %v760, %v1256
  %v1258 = vpop.f32.mrb[0].mxu0
  %1259 = vmatprep.mubr.f32.mxu0 0.0
  %1260 = vmatmul.mubr.f32.gmra.mrb[0].mxu0 %v908
  %v1261 = vpop.f32.mrb[0].mxu0
  %v1262 = vadd.f32 %v760, %v1261
  %v1263 = vpop.f32.mrb[0].mxu0
  %1264 = vmatprep.mubr.f32.mxu0 0.0
  %1265 = vmatmul.mubr.f32.gmra.mrb[0].mxu0 %v911
  %v1266 = vpop.f32.mrb[0].mxu0
  %v1267 = vadd.f32 %v760, %v1266
  %v1268 = vpop.f32.mrb[0].mxu0
  %1269 = vmatprep.mubr.f32.mxu0 0.0
  %1270 = vmatmul.mubr.f32.gmra.mrb[0].mxu0 %v914
  %v1271 = vpop.f32.mrb[0].mxu0
  %v1272 = vadd.f32 %v760, %v1271
  %v1273 = vpop.f32.mrb[0].mxu0
  %1274 = vmatprep.mubr.f32.mxu0 0.0
  %1275 = vmatmul.mubr.f32.gmra.mrb[0].mxu0 %v917
  %v1276 = vpop.f32.mrb[0].mxu0
  %v1277 = vadd.f32 %v760, %v1276
  %v1278 = vpop.f32.mrb[0].mxu0
  %1279 = vmatprep.mubr.f32.mxu0 0.0
  %1280 = vmatmul.mubr.f32.gmra.mrb[0].mxu0 %v920
  %v1281 = vpop.f32.mrb[0].mxu0
  %v1282 = vadd.f32 %v760, %v1281
  %v1283 = vpop.f32.mrb[0].mxu0
  %1284 = vmatprep.mubr.f32.mxu0 0.0
  %1285 = vmatmul.mubr.f32.gmra.mrb[0].mxu0 %v923
  %v1286 = vpop.f32.mrb[0].mxu0
  %v1287 = vadd.f32 %v760, %v1286
  %v1288 = vpop.f32.mrb[0].mxu0
  %1289 = vmatprep.mubr.f32.mxu0 0.0
  %1290 = vmatmul.mubr.f32.gmra.mrb[0].mxu0 %v926
  %v1291 = vpop.f32.mrb[0].mxu0
  %v1292 = vadd.f32 %v760, %v1291
  %v1293 = vpop.f32.mrb[0].mxu0
  %1294 = vmatprep.mubr.f32.mxu0 0.0
  %1295 = vmatmul.mubr.f32.gmra.mrb[0].mxu0 %v929
  %v1296 = vpop.f32.mrb[0].mxu0
  %v1297 = vadd.f32 %v760, %v1296
  %v1298 = vpop.f32.mrb[0].mxu0
  %1299 = vmatprep.mubr.f32.mxu0 0.0
  %1300 = vmatmul.mubr.f32.gmra.mrb[0].mxu0 %v932
  %v1301 = vpop.f32.mrb[0].mxu0
  %v1302 = vadd.f32 %v760, %v1301
  %v1303 = vpop.f32.mrb[0].mxu0
  %1304 = vmatprep.mubr.f32.mxu0 0.0
  %1305 = vmatmul.mubr.f32.gmra.mrb[0].mxu0 %v935
  %v1306 = vpop.f32.mrb[0].mxu0
  %v1307 = vadd.f32 %v760, %v1306
  %v1308 = vpop.f32.mrb[0].mxu0
  %1309 = vmatprep.mubr.f32.mxu0 0.0
  %1310 = vmatmul.mubr.f32.gmra.mrb[0].mxu0 %v938
  %v1311 = vpop.f32.mrb[0].mxu0
  %v1312 = vadd.f32 %v760, %v1311
  %v1313 = vpop.f32.mrb[0].mxu0
  %1314 = vmatprep.mubr.f32.mxu0 0.0
  %1315 = vmatmul.mubr.f32.gmra.mrb[0].mxu0 %v941
  %v1316 = vpop.f32.mrb[0].mxu0
  %v1317 = vadd.f32 %v760, %v1316
  %v1318 = vpop.f32.mrb[0].mxu0
  %1319 = vmatprep.mubr.f32.mxu0 0.0
  %1320 = vmatmul.mubr.f32.gmra.mrb[0].mxu0 %v944
  %v1321 = vpop.f32.mrb[0].mxu0
  %v1322 = vadd.f32 %v760, %v1321
  %v1323 = vpop.f32.mrb[0].mxu0
  %1324 = vmatprep.mubr.f32.mxu0 0.0
  %1325 = vmatmul.mubr.f32.gmra.mrb[0].mxu0 %v947
  %v1326 = vpop.f32.mrb[0].mxu0
  %v1327 = vadd.f32 %v760, %v1326
  %v1328 = vpop.f32.mrb[0].mxu0
  %1329 = vmatprep.mubr.f32.mxu0 0.0
  %1330 = vmatmul.mubr.f32.gmra.mrb[0].mxu0 %v950
  %v1331 = vpop.f32.mrb[0].mxu0
  %v1332 = vadd.f32 %v760, %v1331
  %v1333 = vpop.f32.mrb[0].mxu0
  %1334 = vmatprep.mubr.f32.mxu0 0.0
  %1335 = vmatmul.mubr.f32.gmra.mrb[0].mxu0 %v953
  %v1336 = vpop.f32.mrb[0].mxu0
  %v1337 = vadd.f32 %v760, %v1336
  %v1338 = vpop.f32.mrb[0].mxu0
  %1339 = vdwg.mxu0
  %v1340 = vmax.f32 %v1022, 0.0
  %v1341 = vmax.f32 %v1027, 0.0
  %v1342 = vmax.f32 %v1032, 0.0
  %v1343 = vmax.f32 %v1037, 0.0
  %v1344 = vmax.f32 %v1042, 0.0
  %v1345 = vmax.f32 %v1047, 0.0
  %v1346 = vmax.f32 %v1052, 0.0
  %v1347 = vmax.f32 %v1057, 0.0
  %v1348 = vmax.f32 %v1062, 0.0
  %v1349 = vmax.f32 %v1067, 0.0
  %v1350 = vmax.f32 %v1072, 0.0
  %v1351 = vmax.f32 %v1077, 0.0
  %v1352 = vmax.f32 %v1082, 0.0
  %v1353 = vmax.f32 %v1087, 0.0
  %v1354 = vmax.f32 %v1092, 0.0
  %v1355 = vmax.f32 %v1097, 0.0
  %v1356 = vmax.f32 %v1102, 0.0
  %v1357 = vmax.f32 %v1107, 0.0
  %v1358 = vmax.f32 %v1112, 0.0
  %v1359 = vmax.f32 %v1117, 0.0
  %v1360 = vmax.f32 %v1122, 0.0
  %v1361 = vmax.f32 %v1127, 0.0
  %v1362 = vmax.f32 %v1132, 0.0
  %v1363 = vmax.f32 %v1137, 0.0
  %v1364 = vmax.f32 %v1142, 0.0
  %v1365 = vmax.f32 %v1147, 0.0
  %v1366 = vmax.f32 %v1152, 0.0
  %v1367 = vmax.f32 %v1157, 0.0
  %v1368 = vmax.f32 %v1162, 0.0
  %v1369 = vmax.f32 %v1167, 0.0
  %v1370 = vmax.f32 %v1172, 0.0
  %v1371 = vmax.f32 %v1177, 0.0
  %v1372 = vmax.f32 %v1182, 0.0
  %v1373 = vmax.f32 %v1187, 0.0
  %v1374 = vmax.f32 %v1192, 0.0
  %v1375 = vmax.f32 %v1197, 0.0
  %v1376 = vmax.f32 %v1202, 0.0
  %v1377 = vmax.f32 %v1207, 0.0
  %v1378 = vmax.f32 %v1212, 0.0
  %v1379 = vmax.f32 %v1217, 0.0
  %v1380 = vmax.f32 %v1222, 0.0
  %v1381 = vmax.f32 %v1227, 0.0
  %v1382 = vmax.f32 %v1232, 0.0
  %v1383 = vmax.f32 %v1237, 0.0
  %v1384 = vmax.f32 %v1242, 0.0
  %v1385 = vmax.f32 %v1247, 0.0
  %v1386 = vmax.f32 %v1252, 0.0
  %v1387 = vmax.f32 %v1257, 0.0
  %v1388 = vmax.f32 %v1262, 0.0
  %v1389 = vmax.f32 %v1267, 0.0
  %v1390 = vmax.f32 %v1272, 0.0
  %v1391 = vmax.f32 %v1277, 0.0
  %v1392 = vmax.f32 %v1282, 0.0
  %v1393 = vmax.f32 %v1287, 0.0
  %v1394 = vmax.f32 %v1292, 0.0
  %v1395 = vmax.f32 %v1297, 0.0
  %v1396 = vmax.f32 %v1302, 0.0
  %v1397 = vmax.f32 %v1307, 0.0
  %v1398 = vmax.f32 %v1312, 0.0
  %v1399 = vmax.f32 %v1317, 0.0
  %v1400 = vmax.f32 %v1322, 0.0
  %v1401 = vmax.f32 %v1327, 0.0
  %v1402 = vmax.f32 %v1332, 0.0
  %v1403 = vmax.f32 %v1337, 0.0
  %vm1404 = vcmask 195584
  %v1405 = vsel %vm1404, %v1340, -inf
  %v1406 = vsel %vm1404, %v1348, -inf
  %v1407 = vmax.f32 %v1405, %v1406
  %v1408 = vsel %vm1404, %v1356, -inf
  %v1409 = vmax.f32 %v1407, %v1408
  %v1410 = vsel %vm1404, %v1364, -inf
  %v1411 = vmax.f32 %v1409, %v1410
  %v1412 = vsel %vm1404, %v1372, -inf
  %v1413 = vmax.f32 %v1411, %v1412
  %v1414 = vsel %vm1404, %v1380, -inf
  %v1415 = vmax.f32 %v1413, %v1414
  %v1416 = vsel %vm1404, %v1388, -inf
  %v1417 = vmax.f32 %v1415, %v1416
  %v1418 = vsel %vm1404, %v1396, -inf
  %v1419 = vmax.f32 %v1417, %v1418
  %v1420 = vsel %vm1404, %v1341, -inf
  %v1421 = vsel %vm1404, %v1349, -inf
  %v1422 = vmax.f32 %v1420, %v1421
  %v1423 = vsel %vm1404, %v1357, -inf
  %v1424 = vmax.f32 %v1422, %v1423
  %v1425 = vsel %vm1404, %v1365, -inf
  %v1426 = vmax.f32 %v1424, %v1425
  %v1427 = vsel %vm1404, %v1373, -inf
  %v1428 = vmax.f32 %v1426, %v1427
  %v1429 = vsel %vm1404, %v1381, -inf
  %v1430 = vmax.f32 %v1428, %v1429
  %v1431 = vsel %vm1404, %v1389, -inf
  %v1432 = vmax.f32 %v1430, %v1431
  %v1433 = vsel %vm1404, %v1397, -inf
  %v1434 = vmax.f32 %v1432, %v1433
  %v1435 = vsel %vm1404, %v1342, -inf
  %v1436 = vsel %vm1404, %v1350, -inf
  %v1437 = vmax.f32 %v1435, %v1436
  %v1438 = vsel %vm1404, %v1358, -inf
  %v1439 = vmax.f32 %v1437, %v1438
  %v1440 = vsel %vm1404, %v1366, -inf
  %v1441 = vmax.f32 %v1439, %v1440
  %v1442 = vsel %vm1404, %v1374, -inf
  %v1443 = vmax.f32 %v1441, %v1442
  %v1444 = vsel %vm1404, %v1382, -inf
  %v1445 = vmax.f32 %v1443, %v1444
  %v1446 = vsel %vm1404, %v1390, -inf
  %v1447 = vmax.f32 %v1445, %v1446
  %v1448 = vsel %vm1404, %v1398, -inf
  %v1449 = vmax.f32 %v1447, %v1448
  %v1450 = vsel %vm1404, %v1343, -inf
  %v1451 = vsel %vm1404, %v1351, -inf
  %v1452 = vmax.f32 %v1450, %v1451
  %v1453 = vsel %vm1404, %v1359, -inf
  %v1454 = vmax.f32 %v1452, %v1453
  %v1455 = vsel %vm1404, %v1367, -inf
  %v1456 = vmax.f32 %v1454, %v1455
  %v1457 = vsel %vm1404, %v1375, -inf
  %v1458 = vmax.f32 %v1456, %v1457
  %v1459 = vsel %vm1404, %v1383, -inf
  %v1460 = vmax.f32 %v1458, %v1459
  %v1461 = vsel %vm1404, %v1391, -inf
  %v1462 = vmax.f32 %v1460, %v1461
  %v1463 = vsel %vm1404, %v1399, -inf
  %v1464 = vmax.f32 %v1462, %v1463
  %v1465 = vsel %vm1404, %v1344, -inf
  %v1466 = vsel %vm1404, %v1352, -inf
  %v1467 = vmax.f32 %v1465, %v1466
  %v1468 = vsel %vm1404, %v1360, -inf
  %v1469 = vmax.f32 %v1467, %v1468
  %v1470 = vsel %vm1404, %v1368, -inf
  %v1471 = vmax.f32 %v1469, %v1470
  %v1472 = vsel %vm1404, %v1376, -inf
  %v1473 = vmax.f32 %v1471, %v1472
  %v1474 = vsel %vm1404, %v1384, -inf
  %v1475 = vmax.f32 %v1473, %v1474
  %v1476 = vsel %vm1404, %v1392, -inf
  %v1477 = vmax.f32 %v1475, %v1476
  %v1478 = vsel %vm1404, %v1400, -inf
  %v1479 = vmax.f32 %v1477, %v1478
  %v1480 = vsel %vm1404, %v1345, -inf
  %v1481 = vsel %vm1404, %v1353, -inf
  %v1482 = vmax.f32 %v1480, %v1481
  %v1483 = vsel %vm1404, %v1361, -inf
  %v1484 = vmax.f32 %v1482, %v1483
  %v1485 = vsel %vm1404, %v1369, -inf
  %v1486 = vmax.f32 %v1484, %v1485
  %v1487 = vsel %vm1404, %v1377, -inf
  %v1488 = vmax.f32 %v1486, %v1487
  %v1489 = vsel %vm1404, %v1385, -inf
  %v1490 = vmax.f32 %v1488, %v1489
  %v1491 = vsel %vm1404, %v1393, -inf
  %v1492 = vmax.f32 %v1490, %v1491
  %v1493 = vsel %vm1404, %v1401, -inf
  %v1494 = vmax.f32 %v1492, %v1493
  %v1495 = vsel %vm1404, %v1346, -inf
  %v1496 = vsel %vm1404, %v1354, -inf
  %v1497 = vmax.f32 %v1495, %v1496
  %v1498 = vsel %vm1404, %v1362, -inf
  %v1499 = vmax.f32 %v1497, %v1498
  %v1500 = vsel %vm1404, %v1370, -inf
  %v1501 = vmax.f32 %v1499, %v1500
  %v1502 = vsel %vm1404, %v1378, -inf
  %v1503 = vmax.f32 %v1501, %v1502
  %v1504 = vsel %vm1404, %v1386, -inf
  %v1505 = vmax.f32 %v1503, %v1504
  %v1506 = vsel %vm1404, %v1394, -inf
  %v1507 = vmax.f32 %v1505, %v1506
  %v1508 = vsel %vm1404, %v1402, -inf
  %v1509 = vmax.f32 %v1507, %v1508
  %v1510 = vsel %vm1404, %v1347, -inf
  %v1511 = vsel %vm1404, %v1355, -inf
  %v1512 = vmax.f32 %v1510, %v1511
  %v1513 = vsel %vm1404, %v1363, -inf
  %v1514 = vmax.f32 %v1512, %v1513
  %v1515 = vsel %vm1404, %v1371, -inf
  %v1516 = vmax.f32 %v1514, %v1515
  %v1517 = vsel %vm1404, %v1379, -inf
  %v1518 = vmax.f32 %v1516, %v1517
  %v1519 = vsel %vm1404, %v1387, -inf
  %v1520 = vmax.f32 %v1518, %v1519
  %v1521 = vsel %vm1404, %v1395, -inf
  %v1522 = vmax.f32 %v1520, %v1521
  %v1523 = vsel %vm1404, %v1403, -inf
  %v1524 = vmax.f32 %v1522, %v1523
  %v1525 = vld [vmem:[%s1] sm:$0xff]
  %v1526 = vld [vmem:[%s1 + $0x8] sm:$0xff]
  %v1527 = vld [vmem:[%s1 + $0x10] sm:$0xff]
  %v1528 = vld [vmem:[%s1 + $0x18] sm:$0xff]
  %v1529 = vld [vmem:[%s1 + $0x20] sm:$0xff]
  %v1530 = vld [vmem:[%s1 + $0x28] sm:$0xff]
  %v1531 = vld [vmem:[%s1 + $0x30] sm:$0xff]
  %v1532 = vld [vmem:[%s1 + $0x38] sm:$0xff]
  %v1533 = vld [vmem:[%s1 + $0x40] sm:$0xff]
  %v1534 = vld [vmem:[%s1 + $0x48] sm:$0xff]
  %v1535 = vld [vmem:[%s1 + $0x50] sm:$0xff]
  %v1536 = vld [vmem:[%s1 + $0x58] sm:$0xff]
  %v1537 = vld [vmem:[%s1 + $0x60] sm:$0xff]
  %v1538 = vld [vmem:[%s1 + $0x68] sm:$0xff]
  %v1539 = vld [vmem:[%s1 + $0x70] sm:$0xff]
  %v1540 = vld [vmem:[%s1 + $0x78] sm:$0xff]
  %v1541 = vld [vmem:[%s1 + $0x80] sm:$0xff]
  %v1542 = vld [vmem:[%s1 + $0x88] sm:$0xff]
  %v1543 = vld [vmem:[%s1 + $0x90] sm:$0xff]
  %v1544 = vld [vmem:[%s1 + $0x98] sm:$0xff]
  %v1545 = vld [vmem:[%s1 + $0xa0] sm:$0xff]
  %v1546 = vld [vmem:[%s1 + $0xa8] sm:$0xff]
  %v1547 = vld [vmem:[%s1 + $0xb0] sm:$0xff]
  %v1548 = vld [vmem:[%s1 + $0xb8] sm:$0xff]
  %v1549 = vld [vmem:[%s1 + $0xc0] sm:$0xff]
  %v1550 = vld [vmem:[%s1 + $0xc8] sm:$0xff]
  %v1551 = vld [vmem:[%s1 + $0xd0] sm:$0xff]
  %v1552 = vld [vmem:[%s1 + $0xd8] sm:$0xff]
  %v1553 = vld [vmem:[%s1 + $0xe0] sm:$0xff]
  %v1554 = vld [vmem:[%s1 + $0xe8] sm:$0xff]
  %v1555 = vld [vmem:[%s1 + $0xf0] sm:$0xff]
  %v1556 = vld [vmem:[%s1 + $0xf8] sm:$0xff]
  %v1557 = vld [vmem:[%s1 + $0x100] sm:$0xff]
  %v1558 = vld [vmem:[%s1 + $0x108] sm:$0xff]
  %v1559 = vld [vmem:[%s1 + $0x110] sm:$0xff]
  %v1560 = vld [vmem:[%s1 + $0x118] sm:$0xff]
  %v1561 = vld [vmem:[%s1 + $0x120] sm:$0xff]
  %v1562 = vld [vmem:[%s1 + $0x128] sm:$0xff]
  %v1563 = vld [vmem:[%s1 + $0x130] sm:$0xff]
  %v1564 = vld [vmem:[%s1 + $0x138] sm:$0xff]
  %v1565 = vld [vmem:[%s1 + $0x140] sm:$0xff]
  %v1566 = vld [vmem:[%s1 + $0x148] sm:$0xff]
  %v1567 = vld [vmem:[%s1 + $0x150] sm:$0xff]
  %v1568 = vld [vmem:[%s1 + $0x158] sm:$0xff]
  %v1569 = vld [vmem:[%s1 + $0x160] sm:$0xff]
  %v1570 = vld [vmem:[%s1 + $0x168] sm:$0xff]
  %v1571 = vld [vmem:[%s1 + $0x170] sm:$0xff]
  %v1572 = vld [vmem:[%s1 + $0x178] sm:$0xff]
  %v1573 = vld [vmem:[%s1 + $0x180] sm:$0xff]
  %v1574 = vld [vmem:[%s1 + $0x188] sm:$0xff]
  %v1575 = vld [vmem:[%s1 + $0x190] sm:$0xff]
  %v1576 = vld [vmem:[%s1 + $0x198] sm:$0xff]
  %v1577 = vld [vmem:[%s1 + $0x1a0] sm:$0xff]
  %v1578 = vld [vmem:[%s1 + $0x1a8] sm:$0xff]
  %v1579 = vld [vmem:[%s1 + $0x1b0] sm:$0xff]
  %v1580 = vld [vmem:[%s1 + $0x1b8] sm:$0xff]
  %v1581 = vld [vmem:[%s1 + $0x1c0] sm:$0xff]
  %v1582 = vld [vmem:[%s1 + $0x1c8] sm:$0xff]
  %v1583 = vld [vmem:[%s1 + $0x1d0] sm:$0xff]
  %v1584 = vld [vmem:[%s1 + $0x1d8] sm:$0xff]
  %v1585 = vld [vmem:[%s1 + $0x1e0] sm:$0xff]
  %v1586 = vld [vmem:[%s1 + $0x1e8] sm:$0xff]
  %v1587 = vld [vmem:[%s1 + $0x1f0] sm:$0xff]
  %v1588 = vld [vmem:[%s1 + $0x1f8] sm:$0xff]
  %v1589 = vld [vmem:[%s1 + $0x200] sm:$0xff]
  %v1590 = vld [vmem:[%s1 + $0x208] sm:$0xff]
  %v1591 = vld [vmem:[%s1 + $0x210] sm:$0xff]
  %v1592 = vld [vmem:[%s1 + $0x218] sm:$0xff]
  %v1593 = vld [vmem:[%s1 + $0x220] sm:$0xff]
  %v1594 = vld [vmem:[%s1 + $0x228] sm:$0xff]
  %v1595 = vld [vmem:[%s1 + $0x230] sm:$0xff]
  %v1596 = vld [vmem:[%s1 + $0x238] sm:$0xff]
  %v1597 = vld [vmem:[%s1 + $0x240] sm:$0xff]
  %v1598 = vld [vmem:[%s1 + $0x248] sm:$0xff]
  %v1599 = vld [vmem:[%s1 + $0x250] sm:$0xff]
  %v1600 = vld [vmem:[%s1 + $0x258] sm:$0xff]
  %v1601 = vld [vmem:[%s1 + $0x260] sm:$0xff]
  %v1602 = vld [vmem:[%s1 + $0x268] sm:$0xff]
  %v1603 = vld [vmem:[%s1 + $0x270] sm:$0xff]
  %v1604 = vld [vmem:[%s1 + $0x278] sm:$0xff]
  %v1605 = vld [vmem:[%s1 + $0x280] sm:$0xff]
  %v1606 = vld [vmem:[%s1 + $0x288] sm:$0xff]
  %v1607 = vld [vmem:[%s1 + $0x290] sm:$0xff]
  %v1608 = vld [vmem:[%s1 + $0x298] sm:$0xff]
  %v1609 = vld [vmem:[%s1 + $0x2a0] sm:$0xff]
  %v1610 = vld [vmem:[%s1 + $0x2a8] sm:$0xff]
  %v1611 = vld [vmem:[%s1 + $0x2b0] sm:$0xff]
  %v1612 = vld [vmem:[%s1 + $0x2b8] sm:$0xff]
  %v1613 = vld [vmem:[%s1 + $0x2c0] sm:$0xff]
  %v1614 = vld [vmem:[%s1 + $0x2c8] sm:$0xff]
  %v1615 = vld [vmem:[%s1 + $0x2d0] sm:$0xff]
  %v1616 = vld [vmem:[%s1 + $0x2d8] sm:$0xff]
  %v1617 = vld [vmem:[%s1 + $0x2e0] sm:$0xff]
  %v1618 = vld [vmem:[%s1 + $0x2e8] sm:$0xff]
  %v1619 = vld [vmem:[%s1 + $0x2f0] sm:$0xff]
  %v1620 = vld [vmem:[%s1 + $0x2f8] sm:$0xff]
  %v1621 = vld [vmem:[%s1 + $0x300] sm:$0xff]
  %v1622 = vld [vmem:[%s1 + $0x308] sm:$0xff]
  %v1623 = vld [vmem:[%s1 + $0x310] sm:$0xff]
  %v1624 = vld [vmem:[%s1 + $0x318] sm:$0xff]
  %v1625 = vld [vmem:[%s1 + $0x320] sm:$0xff]
  %v1626 = vld [vmem:[%s1 + $0x328] sm:$0xff]
  %v1627 = vld [vmem:[%s1 + $0x330] sm:$0xff]
  %v1628 = vld [vmem:[%s1 + $0x338] sm:$0xff]
  %v1629 = vld [vmem:[%s1 + $0x340] sm:$0xff]
  %v1630 = vld [vmem:[%s1 + $0x348] sm:$0xff]
  %v1631 = vld [vmem:[%s1 + $0x350] sm:$0xff]
  %v1632 = vld [vmem:[%s1 + $0x358] sm:$0xff]
  %v1633 = vld [vmem:[%s1 + $0x360] sm:$0xff]
  %v1634 = vld [vmem:[%s1 + $0x368] sm:$0xff]
  %v1635 = vld [vmem:[%s1 + $0x370] sm:$0xff]
  %v1636 = vld [vmem:[%s1 + $0x378] sm:$0xff]
  %v1637 = vld [vmem:[%s1 + $0x380] sm:$0xff]
  %v1638 = vld [vmem:[%s1 + $0x388] sm:$0xff]
  %v1639 = vld [vmem:[%s1 + $0x390] sm:$0xff]
  %v1640 = vld [vmem:[%s1 + $0x398] sm:$0xff]
  %v1641 = vld [vmem:[%s1 + $0x3a0] sm:$0xff]
  %v1642 = vld [vmem:[%s1 + $0x3a8] sm:$0xff]
  %v1643 = vld [vmem:[%s1 + $0x3b0] sm:$0xff]
  %v1644 = vld [vmem:[%s1 + $0x3b8] sm:$0xff]
  %v1645 = vld [vmem:[%s1 + $0x3c0] sm:$0xff]
  %v1646 = vld [vmem:[%s1 + $0x3c8] sm:$0xff]
  %v1647 = vld [vmem:[%s1 + $0x3d0] sm:$0xff]
  %v1648 = vld [vmem:[%s1 + $0x3d8] sm:$0xff]
  %v1649 = vld [vmem:[%s1 + $0x3e0] sm:$0xff]
  %v1650 = vld [vmem:[%s1 + $0x3e8] sm:$0xff]
  %v1651 = vld [vmem:[%s1 + $0x3f0] sm:$0xff]
  %v1652 = vld [vmem:[%s1 + $0x3f8] sm:$0xff]
  %v1653 = vld [vmem:[%s6] sm:$0x3f]
  %v1654 = vld [vmem:[%s7] sm:$0x1]
  %v1656 = vlaneseq
  %v1657 = vshrl.u32 %v1656, 7
  %v1658 = vsub.s32 0, %v1657
  %v1659 = vrot.slane %v1654, %v1658
  %v1662 = vsel %vm107, %v1525, 0
  %v1665 = vsel %vm107, %v1526, 0
  %v1668 = vsel %vm107, %v1527, 0
  %v1671 = vsel %vm107, %v1528, 0
  %v1674 = vsel %vm107, %v1529, 0
  %v1677 = vsel %vm107, %v1530, 0
  %v1680 = vsel %vm107, %v1531, 0
  %v1683 = vsel %vm107, %v1532, 0
  %v1686 = vsel %vm107, %v1533, 0
  %v1689 = vsel %vm107, %v1534, 0
  %v1692 = vsel %vm107, %v1535, 0
  %v1695 = vsel %vm107, %v1536, 0
  %v1698 = vsel %vm107, %v1537, 0
  %v1701 = vsel %vm107, %v1538, 0
  %v1704 = vsel %vm107, %v1539, 0
  %v1707 = vsel %vm107, %v1540, 0
  %v1710 = vsel %vm107, %v1541, 0
  %v1713 = vsel %vm107, %v1542, 0
  %v1716 = vsel %vm107, %v1543, 0
  %v1719 = vsel %vm107, %v1544, 0
  %v1722 = vsel %vm107, %v1545, 0
  %v1725 = vsel %vm107, %v1546, 0
  %v1728 = vsel %vm107, %v1547, 0
  %v1731 = vsel %vm107, %v1548, 0
  %v1734 = vsel %vm107, %v1549, 0
  %v1737 = vsel %vm107, %v1550, 0
  %v1740 = vsel %vm107, %v1551, 0
  %v1743 = vsel %vm107, %v1552, 0
  %v1746 = vsel %vm107, %v1553, 0
  %v1749 = vsel %vm107, %v1554, 0
  %v1752 = vsel %vm107, %v1555, 0
  %v1755 = vsel %vm107, %v1556, 0
  %v1758 = vsel %vm107, %v1557, 0
  %v1761 = vsel %vm107, %v1558, 0
  %v1764 = vsel %vm107, %v1559, 0
  %v1767 = vsel %vm107, %v1560, 0
  %v1770 = vsel %vm107, %v1561, 0
  %v1773 = vsel %vm107, %v1562, 0
  %v1776 = vsel %vm107, %v1563, 0
  %v1779 = vsel %vm107, %v1564, 0
  %v1782 = vsel %vm107, %v1565, 0
  %v1785 = vsel %vm107, %v1566, 0
  %v1788 = vsel %vm107, %v1567, 0
  %v1791 = vsel %vm107, %v1568, 0
  %v1794 = vsel %vm107, %v1569, 0
  %v1797 = vsel %vm107, %v1570, 0
  %v1800 = vsel %vm107, %v1571, 0
  %v1803 = vsel %vm107, %v1572, 0
  %v1806 = vsel %vm107, %v1573, 0
  %v1809 = vsel %vm107, %v1574, 0
  %v1812 = vsel %vm107, %v1575, 0
  %v1815 = vsel %vm107, %v1576, 0
  %v1818 = vsel %vm107, %v1577, 0
  %v1821 = vsel %vm107, %v1578, 0
  %v1824 = vsel %vm107, %v1579, 0
  %v1827 = vsel %vm107, %v1580, 0
  %v1830 = vsel %vm107, %v1581, 0
  %v1833 = vsel %vm107, %v1582, 0
  %v1836 = vsel %vm107, %v1583, 0
  %v1839 = vsel %vm107, %v1584, 0
  %v1842 = vsel %vm107, %v1585, 0
  %v1845 = vsel %vm107, %v1586, 0
  %v1848 = vsel %vm107, %v1587, 0
  %v1851 = vsel %vm107, %v1588, 0
  %v1854 = vsel %vm107, %v1589, 0
  %v1857 = vsel %vm107, %v1590, 0
  %v1860 = vsel %vm107, %v1591, 0
  %v1863 = vsel %vm107, %v1592, 0
  %v1866 = vsel %vm107, %v1593, 0
  %v1869 = vsel %vm107, %v1594, 0
  %v1872 = vsel %vm107, %v1595, 0
  %v1875 = vsel %vm107, %v1596, 0
  %v1878 = vsel %vm107, %v1597, 0
  %v1881 = vsel %vm107, %v1598, 0
  %v1884 = vsel %vm107, %v1599, 0
  %v1887 = vsel %vm107, %v1600, 0
  %v1890 = vsel %vm107, %v1601, 0
  %v1893 = vsel %vm107, %v1602, 0
  %v1896 = vsel %vm107, %v1603, 0
  %v1899 = vsel %vm107, %v1604, 0
  %v1902 = vsel %vm107, %v1605, 0
  %v1905 = vsel %vm107, %v1606, 0
  %v1908 = vsel %vm107, %v1607, 0
  %v1911 = vsel %vm107, %v1608, 0
  %v1914 = vsel %vm107, %v1609, 0
  %v1917 = vsel %vm107, %v1610, 0
  %v1920 = vsel %vm107, %v1611, 0
  %v1923 = vsel %vm107, %v1612, 0
  %v1926 = vsel %vm107, %v1613, 0
  %v1929 = vsel %vm107, %v1614, 0
  %v1932 = vsel %vm107, %v1615, 0
  %v1935 = vsel %vm107, %v1616, 0
  %v1938 = vsel %vm107, %v1617, 0
  %v1941 = vsel %vm107, %v1618, 0
  %v1944 = vsel %vm107, %v1619, 0
  %v1947 = vsel %vm107, %v1620, 0
  %v1950 = vsel %vm107, %v1621, 0
  %v1953 = vsel %vm107, %v1622, 0
  %v1956 = vsel %vm107, %v1623, 0
  %v1959 = vsel %vm107, %v1624, 0
  %v1962 = vsel %vm107, %v1625, 0
  %v1965 = vsel %vm107, %v1626, 0
  %v1968 = vsel %vm107, %v1627, 0
  %v1971 = vsel %vm107, %v1628, 0
  %v1974 = vsel %vm107, %v1629, 0
  %v1977 = vsel %vm107, %v1630, 0
  %v1980 = vsel %vm107, %v1631, 0
  %v1983 = vsel %vm107, %v1632, 0
  %v1986 = vsel %vm107, %v1633, 0
  %v1989 = vsel %vm107, %v1634, 0
  %v1992 = vsel %vm107, %v1635, 0
  %v1995 = vsel %vm107, %v1636, 0
  %v1998 = vsel %vm107, %v1637, 0
  %v2001 = vsel %vm107, %v1638, 0
  %v2004 = vsel %vm107, %v1639, 0
  %v2007 = vsel %vm107, %v1640, 0
  %v2010 = vsel %vm107, %v1641, 0
  %v2013 = vsel %vm107, %v1642, 0
  %v2016 = vsel %vm107, %v1643, 0
  %v2019 = vsel %vm107, %v1644, 0
  %v2022 = vsel %vm107, %v1645, 0
  %v2025 = vsel %vm107, %v1646, 0
  %v2028 = vsel %vm107, %v1647, 0
  %v2031 = vsel %vm107, %v1648, 0
  %v2034 = vsel %vm107, %v1649, 0
  %v2037 = vsel %vm107, %v1650, 0
  %v2040 = vsel %vm107, %v1651, 0
  %v2043 = vsel %vm107, %v1652, 0
  %v2046 = vsel %vm300, %v1653, 0
  %2048 = vmatprep.subr.mxu0 0.0
  %2049 = vmatpush1.msra.mxu0 %v2046
  %2050 = vmatprep.subr.mxu0 0.0
  %2051 = vmatpush1.msra.mxu0 0.0
  %2052 = vmatprep.subr.mxu0 0.0
  %2053 = vmatpush1.msra.mxu0 0.0
  %2054 = vmatprep.subr.mxu0 0.0
  %2055 = vmatpush1.msra.mxu0 0.0
  %2056 = vmatprep.subr.mxu0 0.0
  %2057 = vmatpush1.msra.mxu0 0.0
  %2058 = vmatprep.subr.mxu0 0.0
  %2059 = vmatpush1.msra.mxu0 0.0
  %2060 = vmatprep.subr.mxu0 0.0
  %2061 = vmatpush1.msra.mxu0 0.0
  %2062 = vmatprep.subr.mxu0 0.0
  %2063 = vmatpush1.msra.mxu0 0.0
  %2064 = vmatprep.subr.mxu0 0.0
  %2065 = vmatpush1.msra.mxu0 0.0
  %2066 = vmatprep.subr.mxu0 0.0
  %2067 = vmatpush1.msra.mxu0 0.0
  %2068 = vmatprep.subr.mxu0 0.0
  %2069 = vmatpush1.msra.mxu0 0.0
  %2070 = vmatprep.subr.mxu0 0.0
  %2071 = vmatpush1.msra.mxu0 0.0
  %2072 = vmatprep.subr.mxu0 0.0
  %2073 = vmatpush1.msra.mxu0 0.0
  %2074 = vmatprep.subr.mxu0 0.0
  %2075 = vmatpush1.msra.mxu0 0.0
  %2076 = vmatprep.subr.mxu0 0.0
  %2077 = vmatpush1.msra.mxu0 0.0
  %2078 = vmatprep.subr.mxu0 0.0
  %2079 = vmatpush1.msra.mxu0 0.0
  %2080 = vmatprep.subr.mxu0 0.0
  %2081 = vmatpush1.msra.mxu0 0.0
  %2082 = vmatprep.subr.mxu0 0.0
  %2083 = vmatpush1.msra.mxu0 0.0
  %2084 = vmatprep.subr.mxu0 0.0
  %2085 = vmatpush1.msra.mxu0 0.0
  %2086 = vmatprep.subr.mxu0 0.0
  %2087 = vmatpush1.msra.mxu0 0.0
  %2088 = vmatprep.subr.mxu0 0.0
  %2089 = vmatpush1.msra.mxu0 0.0
  %2090 = vmatprep.subr.mxu0 0.0
  %2091 = vmatpush1.msra.mxu0 0.0
  %2092 = vmatprep.subr.mxu0 0.0
  %2093 = vmatpush1.msra.mxu0 0.0
  %2094 = vmatprep.subr.mxu0 0.0
  %2095 = vmatpush1.msra.mxu0 0.0
  %2096 = vmatprep.subr.mxu0 0.0
  %2097 = vmatpush1.msra.mxu0 0.0
  %2098 = vmatprep.subr.mxu0 0.0
  %2099 = vmatpush1.msra.mxu0 0.0
  %2100 = vmatprep.subr.mxu0 0.0
  %2101 = vmatpush1.msra.mxu0 0.0
  %2102 = vmatprep.subr.mxu0 0.0
  %2103 = vmatpush1.msra.mxu0 0.0
  %2104 = vmatprep.subr.mxu0 0.0
  %2105 = vmatpush1.msra.mxu0 0.0
  %2106 = vmatprep.subr.mxu0 0.0
  %2107 = vmatpush1.msra.mxu0 0.0
  %2108 = vmatprep.subr.mxu0 0.0
  %2109 = vmatpush1.msra.mxu0 0.0
  %2110 = vmatprep.subr.mxu0 0.0
  %2111 = vmatpush1.msra.mxu0 0.0
  %2112 = vmatprep.mubr.f32.mxu0 0.0
  %2113 = vmatmul.mubr.f32.gmra.mrb[0].mxu0 %v1662
  %v2114 = vpop.f32.mrb[0].mxu0
  %v2115 = vadd.f32 %v1659, %v2114
  %v2116 = vpop.f32.mrb[0].mxu0
  %2117 = vmatprep.mubr.f32.mxu0 0.0
  %2118 = vmatmul.mubr.f32.gmra.mrb[0].mxu0 %v1665
  %v2119 = vpop.f32.mrb[0].mxu0
  %v2120 = vadd.f32 %v1659, %v2119
  %v2121 = vpop.f32.mrb[0].mxu0
  %2122 = vmatprep.mubr.f32.mxu0 0.0
  %2123 = vmatmul.mubr.f32.gmra.mrb[0].mxu0 %v1668
  %v2124 = vpop.f32.mrb[0].mxu0
  %v2125 = vadd.f32 %v1659, %v2124
  %v2126 = vpop.f32.mrb[0].mxu0
  %2127 = vmatprep.mubr.f32.mxu0 0.0
  %2128 = vmatmul.mubr.f32.gmra.mrb[0].mxu0 %v1671
  %v2129 = vpop.f32.mrb[0].mxu0
  %v2130 = vadd.f32 %v1659, %v2129
  %v2131 = vpop.f32.mrb[0].mxu0
  %2132 = vmatprep.mubr.f32.mxu0 0.0
  %2133 = vmatmul.mubr.f32.gmra.mrb[0].mxu0 %v1674
  %v2134 = vpop.f32.mrb[0].mxu0
  %v2135 = vadd.f32 %v1659, %v2134
  %v2136 = vpop.f32.mrb[0].mxu0
  %2137 = vmatprep.mubr.f32.mxu0 0.0
  %2138 = vmatmul.mubr.f32.gmra.mrb[0].mxu0 %v1677
  %v2139 = vpop.f32.mrb[0].mxu0
  %v2140 = vadd.f32 %v1659, %v2139
  %v2141 = vpop.f32.mrb[0].mxu0
  %2142 = vmatprep.mubr.f32.mxu0 0.0
  %2143 = vmatmul.mubr.f32.gmra.mrb[0].mxu0 %v1680
  %v2144 = vpop.f32.mrb[0].mxu0
  %v2145 = vadd.f32 %v1659, %v2144
  %v2146 = vpop.f32.mrb[0].mxu0
  %2147 = vmatprep.mubr.f32.mxu0 0.0
  %2148 = vmatmul.mubr.f32.gmra.mrb[0].mxu0 %v1683
  %v2149 = vpop.f32.mrb[0].mxu0
  %v2150 = vadd.f32 %v1659, %v2149
  %v2151 = vpop.f32.mrb[0].mxu0
  %2152 = vmatprep.mubr.f32.mxu0 0.0
  %2153 = vmatmul.mubr.f32.gmra.mrb[0].mxu0 %v1686
  %v2154 = vpop.f32.mrb[0].mxu0
  %v2155 = vadd.f32 %v1659, %v2154
  %v2156 = vpop.f32.mrb[0].mxu0
  %2157 = vmatprep.mubr.f32.mxu0 0.0
  %2158 = vmatmul.mubr.f32.gmra.mrb[0].mxu0 %v1689
  %v2159 = vpop.f32.mrb[0].mxu0
  %v2160 = vadd.f32 %v1659, %v2159
  %v2161 = vpop.f32.mrb[0].mxu0
  %2162 = vmatprep.mubr.f32.mxu0 0.0
  %2163 = vmatmul.mubr.f32.gmra.mrb[0].mxu0 %v1692
  %v2164 = vpop.f32.mrb[0].mxu0
  %v2165 = vadd.f32 %v1659, %v2164
  %v2166 = vpop.f32.mrb[0].mxu0
  %2167 = vmatprep.mubr.f32.mxu0 0.0
  %2168 = vmatmul.mubr.f32.gmra.mrb[0].mxu0 %v1695
  %v2169 = vpop.f32.mrb[0].mxu0
  %v2170 = vadd.f32 %v1659, %v2169
  %v2171 = vpop.f32.mrb[0].mxu0
  %2172 = vmatprep.mubr.f32.mxu0 0.0
  %2173 = vmatmul.mubr.f32.gmra.mrb[0].mxu0 %v1698
  %v2174 = vpop.f32.mrb[0].mxu0
  %v2175 = vadd.f32 %v1659, %v2174
  %v2176 = vpop.f32.mrb[0].mxu0
  %2177 = vmatprep.mubr.f32.mxu0 0.0
  %2178 = vmatmul.mubr.f32.gmra.mrb[0].mxu0 %v1701
  %v2179 = vpop.f32.mrb[0].mxu0
  %v2180 = vadd.f32 %v1659, %v2179
  %v2181 = vpop.f32.mrb[0].mxu0
  %2182 = vmatprep.mubr.f32.mxu0 0.0
  %2183 = vmatmul.mubr.f32.gmra.mrb[0].mxu0 %v1704
  %v2184 = vpop.f32.mrb[0].mxu0
  %v2185 = vadd.f32 %v1659, %v2184
  %v2186 = vpop.f32.mrb[0].mxu0
  %2187 = vmatprep.mubr.f32.mxu0 0.0
  %2188 = vmatmul.mubr.f32.gmra.mrb[0].mxu0 %v1707
  %v2189 = vpop.f32.mrb[0].mxu0
  %v2190 = vadd.f32 %v1659, %v2189
  %v2191 = vpop.f32.mrb[0].mxu0
  %2192 = vmatprep.mubr.f32.mxu0 0.0
  %2193 = vmatmul.mubr.f32.gmra.mrb[0].mxu0 %v1710
  %v2194 = vpop.f32.mrb[0].mxu0
  %v2195 = vadd.f32 %v1659, %v2194
  %v2196 = vpop.f32.mrb[0].mxu0
  %2197 = vmatprep.mubr.f32.mxu0 0.0
  %2198 = vmatmul.mubr.f32.gmra.mrb[0].mxu0 %v1713
  %v2199 = vpop.f32.mrb[0].mxu0
  %v2200 = vadd.f32 %v1659, %v2199
  %v2201 = vpop.f32.mrb[0].mxu0
  %2202 = vmatprep.mubr.f32.mxu0 0.0
  %2203 = vmatmul.mubr.f32.gmra.mrb[0].mxu0 %v1716
  %v2204 = vpop.f32.mrb[0].mxu0
  %v2205 = vadd.f32 %v1659, %v2204
  %v2206 = vpop.f32.mrb[0].mxu0
  %2207 = vmatprep.mubr.f32.mxu0 0.0
  %2208 = vmatmul.mubr.f32.gmra.mrb[0].mxu0 %v1719
  %v2209 = vpop.f32.mrb[0].mxu0
  %v2210 = vadd.f32 %v1659, %v2209
  %v2211 = vpop.f32.mrb[0].mxu0
  %2212 = vmatprep.mubr.f32.mxu0 0.0
  %2213 = vmatmul.mubr.f32.gmra.mrb[0].mxu0 %v1722
  %v2214 = vpop.f32.mrb[0].mxu0
  %v2215 = vadd.f32 %v1659, %v2214
  %v2216 = vpop.f32.mrb[0].mxu0
  %2217 = vmatprep.mubr.f32.mxu0 0.0
  %2218 = vmatmul.mubr.f32.gmra.mrb[0].mxu0 %v1725
  %v2219 = vpop.f32.mrb[0].mxu0
  %v2220 = vadd.f32 %v1659, %v2219
  %v2221 = vpop.f32.mrb[0].mxu0
  %2222 = vmatprep.mubr.f32.mxu0 0.0
  %2223 = vmatmul.mubr.f32.gmra.mrb[0].mxu0 %v1728
  %v2224 = vpop.f32.mrb[0].mxu0
  %v2225 = vadd.f32 %v1659, %v2224
  %v2226 = vpop.f32.mrb[0].mxu0
  %2227 = vmatprep.mubr.f32.mxu0 0.0
  %2228 = vmatmul.mubr.f32.gmra.mrb[0].mxu0 %v1731
  %v2229 = vpop.f32.mrb[0].mxu0
  %v2230 = vadd.f32 %v1659, %v2229
  %v2231 = vpop.f32.mrb[0].mxu0
  %2232 = vmatprep.mubr.f32.mxu0 0.0
  %2233 = vmatmul.mubr.f32.gmra.mrb[0].mxu0 %v1734
  %v2234 = vpop.f32.mrb[0].mxu0
  %v2235 = vadd.f32 %v1659, %v2234
  %v2236 = vpop.f32.mrb[0].mxu0
  %2237 = vmatprep.mubr.f32.mxu0 0.0
  %2238 = vmatmul.mubr.f32.gmra.mrb[0].mxu0 %v1737
  %v2239 = vpop.f32.mrb[0].mxu0
  %v2240 = vadd.f32 %v1659, %v2239
  %v2241 = vpop.f32.mrb[0].mxu0
  %2242 = vmatprep.mubr.f32.mxu0 0.0
  %2243 = vmatmul.mubr.f32.gmra.mrb[0].mxu0 %v1740
  %v2244 = vpop.f32.mrb[0].mxu0
  %v2245 = vadd.f32 %v1659, %v2244
  %v2246 = vpop.f32.mrb[0].mxu0
  %2247 = vmatprep.mubr.f32.mxu0 0.0
  %2248 = vmatmul.mubr.f32.gmra.mrb[0].mxu0 %v1743
  %v2249 = vpop.f32.mrb[0].mxu0
  %v2250 = vadd.f32 %v1659, %v2249
  %v2251 = vpop.f32.mrb[0].mxu0
  %2252 = vmatprep.mubr.f32.mxu0 0.0
  %2253 = vmatmul.mubr.f32.gmra.mrb[0].mxu0 %v1746
  %v2254 = vpop.f32.mrb[0].mxu0
  %v2255 = vadd.f32 %v1659, %v2254
  %v2256 = vpop.f32.mrb[0].mxu0
  %2257 = vmatprep.mubr.f32.mxu0 0.0
  %2258 = vmatmul.mubr.f32.gmra.mrb[0].mxu0 %v1749
  %v2259 = vpop.f32.mrb[0].mxu0
  %v2260 = vadd.f32 %v1659, %v2259
  %v2261 = vpop.f32.mrb[0].mxu0
  %2262 = vmatprep.mubr.f32.mxu0 0.0
  %2263 = vmatmul.mubr.f32.gmra.mrb[0].mxu0 %v1752
  %v2264 = vpop.f32.mrb[0].mxu0
  %v2265 = vadd.f32 %v1659, %v2264
  %v2266 = vpop.f32.mrb[0].mxu0
  %2267 = vmatprep.mubr.f32.mxu0 0.0
  %2268 = vmatmul.mubr.f32.gmra.mrb[0].mxu0 %v1755
  %v2269 = vpop.f32.mrb[0].mxu0
  %v2270 = vadd.f32 %v1659, %v2269
  %v2271 = vpop.f32.mrb[0].mxu0
  %2272 = vmatprep.mubr.f32.mxu0 0.0
  %2273 = vmatmul.mubr.f32.gmra.mrb[0].mxu0 %v1758
  %v2274 = vpop.f32.mrb[0].mxu0
  %v2275 = vadd.f32 %v1659, %v2274
  %v2276 = vpop.f32.mrb[0].mxu0
  %2277 = vmatprep.mubr.f32.mxu0 0.0
  %2278 = vmatmul.mubr.f32.gmra.mrb[0].mxu0 %v1761
  %v2279 = vpop.f32.mrb[0].mxu0
  %v2280 = vadd.f32 %v1659, %v2279
  %v2281 = vpop.f32.mrb[0].mxu0
  %2282 = vmatprep.mubr.f32.mxu0 0.0
  %2283 = vmatmul.mubr.f32.gmra.mrb[0].mxu0 %v1764
  %v2284 = vpop.f32.mrb[0].mxu0
  %v2285 = vadd.f32 %v1659, %v2284
  %v2286 = vpop.f32.mrb[0].mxu0
  %2287 = vmatprep.mubr.f32.mxu0 0.0
  %2288 = vmatmul.mubr.f32.gmra.mrb[0].mxu0 %v1767
  %v2289 = vpop.f32.mrb[0].mxu0
  %v2290 = vadd.f32 %v1659, %v2289
  %v2291 = vpop.f32.mrb[0].mxu0
  %2292 = vmatprep.mubr.f32.mxu0 0.0
  %2293 = vmatmul.mubr.f32.gmra.mrb[0].mxu0 %v1770
  %v2294 = vpop.f32.mrb[0].mxu0
  %v2295 = vadd.f32 %v1659, %v2294
  %v2296 = vpop.f32.mrb[0].mxu0
  %2297 = vmatprep.mubr.f32.mxu0 0.0
  %2298 = vmatmul.mubr.f32.gmra.mrb[0].mxu0 %v1773
  %v2299 = vpop.f32.mrb[0].mxu0
  %v2300 = vadd.f32 %v1659, %v2299
  %v2301 = vpop.f32.mrb[0].mxu0
  %2302 = vmatprep.mubr.f32.mxu0 0.0
  %2303 = vmatmul.mubr.f32.gmra.mrb[0].mxu0 %v1776
  %v2304 = vpop.f32.mrb[0].mxu0
  %v2305 = vadd.f32 %v1659, %v2304
  %v2306 = vpop.f32.mrb[0].mxu0
  %2307 = vmatprep.mubr.f32.mxu0 0.0
  %2308 = vmatmul.mubr.f32.gmra.mrb[0].mxu0 %v1779
  %v2309 = vpop.f32.mrb[0].mxu0
  %v2310 = vadd.f32 %v1659, %v2309
  %v2311 = vpop.f32.mrb[0].mxu0
  %2312 = vmatprep.mubr.f32.mxu0 0.0
  %2313 = vmatmul.mubr.f32.gmra.mrb[0].mxu0 %v1782
  %v2314 = vpop.f32.mrb[0].mxu0
  %v2315 = vadd.f32 %v1659, %v2314
  %v2316 = vpop.f32.mrb[0].mxu0
  %2317 = vmatprep.mubr.f32.mxu0 0.0
  %2318 = vmatmul.mubr.f32.gmra.mrb[0].mxu0 %v1785
  %v2319 = vpop.f32.mrb[0].mxu0
  %v2320 = vadd.f32 %v1659, %v2319
  %v2321 = vpop.f32.mrb[0].mxu0
  %2322 = vmatprep.mubr.f32.mxu0 0.0
  %2323 = vmatmul.mubr.f32.gmra.mrb[0].mxu0 %v1788
  %v2324 = vpop.f32.mrb[0].mxu0
  %v2325 = vadd.f32 %v1659, %v2324
  %v2326 = vpop.f32.mrb[0].mxu0
  %2327 = vmatprep.mubr.f32.mxu0 0.0
  %2328 = vmatmul.mubr.f32.gmra.mrb[0].mxu0 %v1791
  %v2329 = vpop.f32.mrb[0].mxu0
  %v2330 = vadd.f32 %v1659, %v2329
  %v2331 = vpop.f32.mrb[0].mxu0
  %2332 = vmatprep.mubr.f32.mxu0 0.0
  %2333 = vmatmul.mubr.f32.gmra.mrb[0].mxu0 %v1794
  %v2334 = vpop.f32.mrb[0].mxu0
  %v2335 = vadd.f32 %v1659, %v2334
  %v2336 = vpop.f32.mrb[0].mxu0
  %2337 = vmatprep.mubr.f32.mxu0 0.0
  %2338 = vmatmul.mubr.f32.gmra.mrb[0].mxu0 %v1797
  %v2339 = vpop.f32.mrb[0].mxu0
  %v2340 = vadd.f32 %v1659, %v2339
  %v2341 = vpop.f32.mrb[0].mxu0
  %2342 = vmatprep.mubr.f32.mxu0 0.0
  %2343 = vmatmul.mubr.f32.gmra.mrb[0].mxu0 %v1800
  %v2344 = vpop.f32.mrb[0].mxu0
  %v2345 = vadd.f32 %v1659, %v2344
  %v2346 = vpop.f32.mrb[0].mxu0
  %2347 = vmatprep.mubr.f32.mxu0 0.0
  %2348 = vmatmul.mubr.f32.gmra.mrb[0].mxu0 %v1803
  %v2349 = vpop.f32.mrb[0].mxu0
  %v2350 = vadd.f32 %v1659, %v2349
  %v2351 = vpop.f32.mrb[0].mxu0
  %2352 = vmatprep.mubr.f32.mxu0 0.0
  %2353 = vmatmul.mubr.f32.gmra.mrb[0].mxu0 %v1806
  %v2354 = vpop.f32.mrb[0].mxu0
  %v2355 = vadd.f32 %v1659, %v2354
  %v2356 = vpop.f32.mrb[0].mxu0
  %2357 = vmatprep.mubr.f32.mxu0 0.0
  %2358 = vmatmul.mubr.f32.gmra.mrb[0].mxu0 %v1809
  %v2359 = vpop.f32.mrb[0].mxu0
  %v2360 = vadd.f32 %v1659, %v2359
  %v2361 = vpop.f32.mrb[0].mxu0
  %2362 = vmatprep.mubr.f32.mxu0 0.0
  %2363 = vmatmul.mubr.f32.gmra.mrb[0].mxu0 %v1812
  %v2364 = vpop.f32.mrb[0].mxu0
  %v2365 = vadd.f32 %v1659, %v2364
  %v2366 = vpop.f32.mrb[0].mxu0
  %2367 = vmatprep.mubr.f32.mxu0 0.0
  %2368 = vmatmul.mubr.f32.gmra.mrb[0].mxu0 %v1815
  %v2369 = vpop.f32.mrb[0].mxu0
  %v2370 = vadd.f32 %v1659, %v2369
  %v2371 = vpop.f32.mrb[0].mxu0
  %2372 = vmatprep.mubr.f32.mxu0 0.0
  %2373 = vmatmul.mubr.f32.gmra.mrb[0].mxu0 %v1818
  %v2374 = vpop.f32.mrb[0].mxu0
  %v2375 = vadd.f32 %v1659, %v2374
  %v2376 = vpop.f32.mrb[0].mxu0
  %2377 = vmatprep.mubr.f32.mxu0 0.0
  %2378 = vmatmul.mubr.f32.gmra.mrb[0].mxu0 %v1821
  %v2379 = vpop.f32.mrb[0].mxu0
  %v2380 = vadd.f32 %v1659, %v2379
  %v2381 = vpop.f32.mrb[0].mxu0
  %2382 = vmatprep.mubr.f32.mxu0 0.0
  %2383 = vmatmul.mubr.f32.gmra.mrb[0].mxu0 %v1824
  %v2384 = vpop.f32.mrb[0].mxu0
  %v2385 = vadd.f32 %v1659, %v2384
  %v2386 = vpop.f32.mrb[0].mxu0
  %2387 = vmatprep.mubr.f32.mxu0 0.0
  %2388 = vmatmul.mubr.f32.gmra.mrb[0].mxu0 %v1827
  %v2389 = vpop.f32.mrb[0].mxu0
  %v2390 = vadd.f32 %v1659, %v2389
  %v2391 = vpop.f32.mrb[0].mxu0
  %2392 = vmatprep.mubr.f32.mxu0 0.0
  %2393 = vmatmul.mubr.f32.gmra.mrb[0].mxu0 %v1830
  %v2394 = vpop.f32.mrb[0].mxu0
  %v2395 = vadd.f32 %v1659, %v2394
  %v2396 = vpop.f32.mrb[0].mxu0
  %2397 = vmatprep.mubr.f32.mxu0 0.0
  %2398 = vmatmul.mubr.f32.gmra.mrb[0].mxu0 %v1833
  %v2399 = vpop.f32.mrb[0].mxu0
  %v2400 = vadd.f32 %v1659, %v2399
  %v2401 = vpop.f32.mrb[0].mxu0
  %2402 = vmatprep.mubr.f32.mxu0 0.0
  %2403 = vmatmul.mubr.f32.gmra.mrb[0].mxu0 %v1836
  %v2404 = vpop.f32.mrb[0].mxu0
  %v2405 = vadd.f32 %v1659, %v2404
  %v2406 = vpop.f32.mrb[0].mxu0
  %2407 = vmatprep.mubr.f32.mxu0 0.0
  %2408 = vmatmul.mubr.f32.gmra.mrb[0].mxu0 %v1839
  %v2409 = vpop.f32.mrb[0].mxu0
  %v2410 = vadd.f32 %v1659, %v2409
  %v2411 = vpop.f32.mrb[0].mxu0
  %2412 = vmatprep.mubr.f32.mxu0 0.0
  %2413 = vmatmul.mubr.f32.gmra.mrb[0].mxu0 %v1842
  %v2414 = vpop.f32.mrb[0].mxu0
  %v2415 = vadd.f32 %v1659, %v2414
  %v2416 = vpop.f32.mrb[0].mxu0
  %2417 = vmatprep.mubr.f32.mxu0 0.0
  %2418 = vmatmul.mubr.f32.gmra.mrb[0].mxu0 %v1845
  %v2419 = vpop.f32.mrb[0].mxu0
  %v2420 = vadd.f32 %v1659, %v2419
  %v2421 = vpop.f32.mrb[0].mxu0
  %2422 = vmatprep.mubr.f32.mxu0 0.0
  %2423 = vmatmul.mubr.f32.gmra.mrb[0].mxu0 %v1848
  %v2424 = vpop.f32.mrb[0].mxu0
  %v2425 = vadd.f32 %v1659, %v2424
  %v2426 = vpop.f32.mrb[0].mxu0
  %2427 = vmatprep.mubr.f32.mxu0 0.0
  %2428 = vmatmul.mubr.f32.gmra.mrb[0].mxu0 %v1851
  %v2429 = vpop.f32.mrb[0].mxu0
  %v2430 = vadd.f32 %v1659, %v2429
  %v2431 = vpop.f32.mrb[0].mxu0
  %2432 = vmatprep.mubr.f32.mxu0 0.0
  %2433 = vmatmul.mubr.f32.gmra.mrb[0].mxu0 %v1854
  %v2434 = vpop.f32.mrb[0].mxu0
  %v2435 = vadd.f32 %v1659, %v2434
  %v2436 = vpop.f32.mrb[0].mxu0
  %2437 = vmatprep.mubr.f32.mxu0 0.0
  %2438 = vmatmul.mubr.f32.gmra.mrb[0].mxu0 %v1857
  %v2439 = vpop.f32.mrb[0].mxu0
  %v2440 = vadd.f32 %v1659, %v2439
  %v2441 = vpop.f32.mrb[0].mxu0
  %2442 = vmatprep.mubr.f32.mxu0 0.0
  %2443 = vmatmul.mubr.f32.gmra.mrb[0].mxu0 %v1860
  %v2444 = vpop.f32.mrb[0].mxu0
  %v2445 = vadd.f32 %v1659, %v2444
  %v2446 = vpop.f32.mrb[0].mxu0
  %2447 = vmatprep.mubr.f32.mxu0 0.0
  %2448 = vmatmul.mubr.f32.gmra.mrb[0].mxu0 %v1863
  %v2449 = vpop.f32.mrb[0].mxu0
  %v2450 = vadd.f32 %v1659, %v2449
  %v2451 = vpop.f32.mrb[0].mxu0
  %2452 = vmatprep.mubr.f32.mxu0 0.0
  %2453 = vmatmul.mubr.f32.gmra.mrb[0].mxu0 %v1866
  %v2454 = vpop.f32.mrb[0].mxu0
  %v2455 = vadd.f32 %v1659, %v2454
  %v2456 = vpop.f32.mrb[0].mxu0
  %2457 = vmatprep.mubr.f32.mxu0 0.0
  %2458 = vmatmul.mubr.f32.gmra.mrb[0].mxu0 %v1869
  %v2459 = vpop.f32.mrb[0].mxu0
  %v2460 = vadd.f32 %v1659, %v2459
  %v2461 = vpop.f32.mrb[0].mxu0
  %2462 = vmatprep.mubr.f32.mxu0 0.0
  %2463 = vmatmul.mubr.f32.gmra.mrb[0].mxu0 %v1872
  %v2464 = vpop.f32.mrb[0].mxu0
  %v2465 = vadd.f32 %v1659, %v2464
  %v2466 = vpop.f32.mrb[0].mxu0
  %2467 = vmatprep.mubr.f32.mxu0 0.0
  %2468 = vmatmul.mubr.f32.gmra.mrb[0].mxu0 %v1875
  %v2469 = vpop.f32.mrb[0].mxu0
  %v2470 = vadd.f32 %v1659, %v2469
  %v2471 = vpop.f32.mrb[0].mxu0
  %2472 = vmatprep.mubr.f32.mxu0 0.0
  %2473 = vmatmul.mubr.f32.gmra.mrb[0].mxu0 %v1878
  %v2474 = vpop.f32.mrb[0].mxu0
  %v2475 = vadd.f32 %v1659, %v2474
  %v2476 = vpop.f32.mrb[0].mxu0
  %2477 = vmatprep.mubr.f32.mxu0 0.0
  %2478 = vmatmul.mubr.f32.gmra.mrb[0].mxu0 %v1881
  %v2479 = vpop.f32.mrb[0].mxu0
  %v2480 = vadd.f32 %v1659, %v2479
  %v2481 = vpop.f32.mrb[0].mxu0
  %2482 = vmatprep.mubr.f32.mxu0 0.0
  %2483 = vmatmul.mubr.f32.gmra.mrb[0].mxu0 %v1884
  %v2484 = vpop.f32.mrb[0].mxu0
  %v2485 = vadd.f32 %v1659, %v2484
  %v2486 = vpop.f32.mrb[0].mxu0
  %2487 = vmatprep.mubr.f32.mxu0 0.0
  %2488 = vmatmul.mubr.f32.gmra.mrb[0].mxu0 %v1887
  %v2489 = vpop.f32.mrb[0].mxu0
  %v2490 = vadd.f32 %v1659, %v2489
  %v2491 = vpop.f32.mrb[0].mxu0
  %2492 = vmatprep.mubr.f32.mxu0 0.0
  %2493 = vmatmul.mubr.f32.gmra.mrb[0].mxu0 %v1890
  %v2494 = vpop.f32.mrb[0].mxu0
  %v2495 = vadd.f32 %v1659, %v2494
  %v2496 = vpop.f32.mrb[0].mxu0
  %2497 = vmatprep.mubr.f32.mxu0 0.0
  %2498 = vmatmul.mubr.f32.gmra.mrb[0].mxu0 %v1893
  %v2499 = vpop.f32.mrb[0].mxu0
  %v2500 = vadd.f32 %v1659, %v2499
  %v2501 = vpop.f32.mrb[0].mxu0
  %2502 = vmatprep.mubr.f32.mxu0 0.0
  %2503 = vmatmul.mubr.f32.gmra.mrb[0].mxu0 %v1896
  %v2504 = vpop.f32.mrb[0].mxu0
  %v2505 = vadd.f32 %v1659, %v2504
  %v2506 = vpop.f32.mrb[0].mxu0
  %2507 = vmatprep.mubr.f32.mxu0 0.0
  %2508 = vmatmul.mubr.f32.gmra.mrb[0].mxu0 %v1899
  %v2509 = vpop.f32.mrb[0].mxu0
  %v2510 = vadd.f32 %v1659, %v2509
  %v2511 = vpop.f32.mrb[0].mxu0
  %2512 = vmatprep.mubr.f32.mxu0 0.0
  %2513 = vmatmul.mubr.f32.gmra.mrb[0].mxu0 %v1902
  %v2514 = vpop.f32.mrb[0].mxu0
  %v2515 = vadd.f32 %v1659, %v2514
  %v2516 = vpop.f32.mrb[0].mxu0
  %2517 = vmatprep.mubr.f32.mxu0 0.0
  %2518 = vmatmul.mubr.f32.gmra.mrb[0].mxu0 %v1905
  %v2519 = vpop.f32.mrb[0].mxu0
  %v2520 = vadd.f32 %v1659, %v2519
  %v2521 = vpop.f32.mrb[0].mxu0
  %2522 = vmatprep.mubr.f32.mxu0 0.0
  %2523 = vmatmul.mubr.f32.gmra.mrb[0].mxu0 %v1908
  %v2524 = vpop.f32.mrb[0].mxu0
  %v2525 = vadd.f32 %v1659, %v2524
  %v2526 = vpop.f32.mrb[0].mxu0
  %2527 = vmatprep.mubr.f32.mxu0 0.0
  %2528 = vmatmul.mubr.f32.gmra.mrb[0].mxu0 %v1911
  %v2529 = vpop.f32.mrb[0].mxu0
  %v2530 = vadd.f32 %v1659, %v2529
  %v2531 = vpop.f32.mrb[0].mxu0
  %2532 = vmatprep.mubr.f32.mxu0 0.0
  %2533 = vmatmul.mubr.f32.gmra.mrb[0].mxu0 %v1914
  %v2534 = vpop.f32.mrb[0].mxu0
  %v2535 = vadd.f32 %v1659, %v2534
  %v2536 = vpop.f32.mrb[0].mxu0
  %2537 = vmatprep.mubr.f32.mxu0 0.0
  %2538 = vmatmul.mubr.f32.gmra.mrb[0].mxu0 %v1917
  %v2539 = vpop.f32.mrb[0].mxu0
  %v2540 = vadd.f32 %v1659, %v2539
  %v2541 = vpop.f32.mrb[0].mxu0
  %2542 = vmatprep.mubr.f32.mxu0 0.0
  %2543 = vmatmul.mubr.f32.gmra.mrb[0].mxu0 %v1920
  %v2544 = vpop.f32.mrb[0].mxu0
  %v2545 = vadd.f32 %v1659, %v2544
  %v2546 = vpop.f32.mrb[0].mxu0
  %2547 = vmatprep.mubr.f32.mxu0 0.0
  %2548 = vmatmul.mubr.f32.gmra.mrb[0].mxu0 %v1923
  %v2549 = vpop.f32.mrb[0].mxu0
  %v2550 = vadd.f32 %v1659, %v2549
  %v2551 = vpop.f32.mrb[0].mxu0
  %2552 = vmatprep.mubr.f32.mxu0 0.0
  %2553 = vmatmul.mubr.f32.gmra.mrb[0].mxu0 %v1926
  %v2554 = vpop.f32.mrb[0].mxu0
  %v2555 = vadd.f32 %v1659, %v2554
  %v2556 = vpop.f32.mrb[0].mxu0
  %2557 = vmatprep.mubr.f32.mxu0 0.0
  %2558 = vmatmul.mubr.f32.gmra.mrb[0].mxu0 %v1929
  %v2559 = vpop.f32.mrb[0].mxu0
  %v2560 = vadd.f32 %v1659, %v2559
  %v2561 = vpop.f32.mrb[0].mxu0
  %2562 = vmatprep.mubr.f32.mxu0 0.0
  %2563 = vmatmul.mubr.f32.gmra.mrb[0].mxu0 %v1932
  %v2564 = vpop.f32.mrb[0].mxu0
  %v2565 = vadd.f32 %v1659, %v2564
  %v2566 = vpop.f32.mrb[0].mxu0
  %2567 = vmatprep.mubr.f32.mxu0 0.0
  %2568 = vmatmul.mubr.f32.gmra.mrb[0].mxu0 %v1935
  %v2569 = vpop.f32.mrb[0].mxu0
  %v2570 = vadd.f32 %v1659, %v2569
  %v2571 = vpop.f32.mrb[0].mxu0
  %2572 = vmatprep.mubr.f32.mxu0 0.0
  %2573 = vmatmul.mubr.f32.gmra.mrb[0].mxu0 %v1938
  %v2574 = vpop.f32.mrb[0].mxu0
  %v2575 = vadd.f32 %v1659, %v2574
  %v2576 = vpop.f32.mrb[0].mxu0
  %2577 = vmatprep.mubr.f32.mxu0 0.0
  %2578 = vmatmul.mubr.f32.gmra.mrb[0].mxu0 %v1941
  %v2579 = vpop.f32.mrb[0].mxu0
  %v2580 = vadd.f32 %v1659, %v2579
  %v2581 = vpop.f32.mrb[0].mxu0
  %2582 = vmatprep.mubr.f32.mxu0 0.0
  %2583 = vmatmul.mubr.f32.gmra.mrb[0].mxu0 %v1944
  %v2584 = vpop.f32.mrb[0].mxu0
  %v2585 = vadd.f32 %v1659, %v2584
  %v2586 = vpop.f32.mrb[0].mxu0
  %2587 = vmatprep.mubr.f32.mxu0 0.0
  %2588 = vmatmul.mubr.f32.gmra.mrb[0].mxu0 %v1947
  %v2589 = vpop.f32.mrb[0].mxu0
  %v2590 = vadd.f32 %v1659, %v2589
  %v2591 = vpop.f32.mrb[0].mxu0
  %2592 = vmatprep.mubr.f32.mxu0 0.0
  %2593 = vmatmul.mubr.f32.gmra.mrb[0].mxu0 %v1950
  %v2594 = vpop.f32.mrb[0].mxu0
  %v2595 = vadd.f32 %v1659, %v2594
  %v2596 = vpop.f32.mrb[0].mxu0
  %2597 = vmatprep.mubr.f32.mxu0 0.0
  %2598 = vmatmul.mubr.f32.gmra.mrb[0].mxu0 %v1953
  %v2599 = vpop.f32.mrb[0].mxu0
  %v2600 = vadd.f32 %v1659, %v2599
  %v2601 = vpop.f32.mrb[0].mxu0
  %2602 = vmatprep.mubr.f32.mxu0 0.0
  %2603 = vmatmul.mubr.f32.gmra.mrb[0].mxu0 %v1956
  %v2604 = vpop.f32.mrb[0].mxu0
  %v2605 = vadd.f32 %v1659, %v2604
  %v2606 = vpop.f32.mrb[0].mxu0
  %2607 = vmatprep.mubr.f32.mxu0 0.0
  %2608 = vmatmul.mubr.f32.gmra.mrb[0].mxu0 %v1959
  %v2609 = vpop.f32.mrb[0].mxu0
  %v2610 = vadd.f32 %v1659, %v2609
  %v2611 = vpop.f32.mrb[0].mxu0
  %2612 = vmatprep.mubr.f32.mxu0 0.0
  %2613 = vmatmul.mubr.f32.gmra.mrb[0].mxu0 %v1962
  %v2614 = vpop.f32.mrb[0].mxu0
  %v2615 = vadd.f32 %v1659, %v2614
  %v2616 = vpop.f32.mrb[0].mxu0
  %2617 = vmatprep.mubr.f32.mxu0 0.0
  %2618 = vmatmul.mubr.f32.gmra.mrb[0].mxu0 %v1965
  %v2619 = vpop.f32.mrb[0].mxu0
  %v2620 = vadd.f32 %v1659, %v2619
  %v2621 = vpop.f32.mrb[0].mxu0
  %2622 = vmatprep.mubr.f32.mxu0 0.0
  %2623 = vmatmul.mubr.f32.gmra.mrb[0].mxu0 %v1968
  %v2624 = vpop.f32.mrb[0].mxu0
  %v2625 = vadd.f32 %v1659, %v2624
  %v2626 = vpop.f32.mrb[0].mxu0
  %2627 = vmatprep.mubr.f32.mxu0 0.0
  %2628 = vmatmul.mubr.f32.gmra.mrb[0].mxu0 %v1971
  %v2629 = vpop.f32.mrb[0].mxu0
  %v2630 = vadd.f32 %v1659, %v2629
  %v2631 = vpop.f32.mrb[0].mxu0
  %2632 = vmatprep.mubr.f32.mxu0 0.0
  %2633 = vmatmul.mubr.f32.gmra.mrb[0].mxu0 %v1974
  %v2634 = vpop.f32.mrb[0].mxu0
  %v2635 = vadd.f32 %v1659, %v2634
  %v2636 = vpop.f32.mrb[0].mxu0
  %2637 = vmatprep.mubr.f32.mxu0 0.0
  %2638 = vmatmul.mubr.f32.gmra.mrb[0].mxu0 %v1977
  %v2639 = vpop.f32.mrb[0].mxu0
  %v2640 = vadd.f32 %v1659, %v2639
  %v2641 = vpop.f32.mrb[0].mxu0
  %2642 = vmatprep.mubr.f32.mxu0 0.0
  %2643 = vmatmul.mubr.f32.gmra.mrb[0].mxu0 %v1980
  %v2644 = vpop.f32.mrb[0].mxu0
  %v2645 = vadd.f32 %v1659, %v2644
  %v2646 = vpop.f32.mrb[0].mxu0
  %2647 = vmatprep.mubr.f32.mxu0 0.0
  %2648 = vmatmul.mubr.f32.gmra.mrb[0].mxu0 %v1983
  %v2649 = vpop.f32.mrb[0].mxu0
  %v2650 = vadd.f32 %v1659, %v2649
  %v2651 = vpop.f32.mrb[0].mxu0
  %2652 = vmatprep.mubr.f32.mxu0 0.0
  %2653 = vmatmul.mubr.f32.gmra.mrb[0].mxu0 %v1986
  %v2654 = vpop.f32.mrb[0].mxu0
  %v2655 = vadd.f32 %v1659, %v2654
  %v2656 = vpop.f32.mrb[0].mxu0
  %2657 = vmatprep.mubr.f32.mxu0 0.0
  %2658 = vmatmul.mubr.f32.gmra.mrb[0].mxu0 %v1989
  %v2659 = vpop.f32.mrb[0].mxu0
  %v2660 = vadd.f32 %v1659, %v2659
  %v2661 = vpop.f32.mrb[0].mxu0
  %2662 = vmatprep.mubr.f32.mxu0 0.0
  %2663 = vmatmul.mubr.f32.gmra.mrb[0].mxu0 %v1992
  %v2664 = vpop.f32.mrb[0].mxu0
  %v2665 = vadd.f32 %v1659, %v2664
  %v2666 = vpop.f32.mrb[0].mxu0
  %2667 = vmatprep.mubr.f32.mxu0 0.0
  %2668 = vmatmul.mubr.f32.gmra.mrb[0].mxu0 %v1995
  %v2669 = vpop.f32.mrb[0].mxu0
  %v2670 = vadd.f32 %v1659, %v2669
  %v2671 = vpop.f32.mrb[0].mxu0
  %2672 = vmatprep.mubr.f32.mxu0 0.0
  %2673 = vmatmul.mubr.f32.gmra.mrb[0].mxu0 %v1998
  %v2674 = vpop.f32.mrb[0].mxu0
  %v2675 = vadd.f32 %v1659, %v2674
  %v2676 = vpop.f32.mrb[0].mxu0
  %2677 = vmatprep.mubr.f32.mxu0 0.0
  %2678 = vmatmul.mubr.f32.gmra.mrb[0].mxu0 %v2001
  %v2679 = vpop.f32.mrb[0].mxu0
  %v2680 = vadd.f32 %v1659, %v2679
  %v2681 = vpop.f32.mrb[0].mxu0
  %2682 = vmatprep.mubr.f32.mxu0 0.0
  %2683 = vmatmul.mubr.f32.gmra.mrb[0].mxu0 %v2004
  %v2684 = vpop.f32.mrb[0].mxu0
  %v2685 = vadd.f32 %v1659, %v2684
  %v2686 = vpop.f32.mrb[0].mxu0
  %2687 = vmatprep.mubr.f32.mxu0 0.0
  %2688 = vmatmul.mubr.f32.gmra.mrb[0].mxu0 %v2007
  %v2689 = vpop.f32.mrb[0].mxu0
  %v2690 = vadd.f32 %v1659, %v2689
  %v2691 = vpop.f32.mrb[0].mxu0
  %2692 = vmatprep.mubr.f32.mxu0 0.0
  %2693 = vmatmul.mubr.f32.gmra.mrb[0].mxu0 %v2010
  %v2694 = vpop.f32.mrb[0].mxu0
  %v2695 = vadd.f32 %v1659, %v2694
  %v2696 = vpop.f32.mrb[0].mxu0
  %2697 = vmatprep.mubr.f32.mxu0 0.0
  %2698 = vmatmul.mubr.f32.gmra.mrb[0].mxu0 %v2013
  %v2699 = vpop.f32.mrb[0].mxu0
  %v2700 = vadd.f32 %v1659, %v2699
  %v2701 = vpop.f32.mrb[0].mxu0
  %2702 = vmatprep.mubr.f32.mxu0 0.0
  %2703 = vmatmul.mubr.f32.gmra.mrb[0].mxu0 %v2016
  %v2704 = vpop.f32.mrb[0].mxu0
  %v2705 = vadd.f32 %v1659, %v2704
  %v2706 = vpop.f32.mrb[0].mxu0
  %2707 = vmatprep.mubr.f32.mxu0 0.0
  %2708 = vmatmul.mubr.f32.gmra.mrb[0].mxu0 %v2019
  %v2709 = vpop.f32.mrb[0].mxu0
  %v2710 = vadd.f32 %v1659, %v2709
  %v2711 = vpop.f32.mrb[0].mxu0
  %2712 = vmatprep.mubr.f32.mxu0 0.0
  %2713 = vmatmul.mubr.f32.gmra.mrb[0].mxu0 %v2022
  %v2714 = vpop.f32.mrb[0].mxu0
  %v2715 = vadd.f32 %v1659, %v2714
  %v2716 = vpop.f32.mrb[0].mxu0
  %2717 = vmatprep.mubr.f32.mxu0 0.0
  %2718 = vmatmul.mubr.f32.gmra.mrb[0].mxu0 %v2025
  %v2719 = vpop.f32.mrb[0].mxu0
  %v2720 = vadd.f32 %v1659, %v2719
  %v2721 = vpop.f32.mrb[0].mxu0
  %2722 = vmatprep.mubr.f32.mxu0 0.0
  %2723 = vmatmul.mubr.f32.gmra.mrb[0].mxu0 %v2028
  %v2724 = vpop.f32.mrb[0].mxu0
  %v2725 = vadd.f32 %v1659, %v2724
  %v2726 = vpop.f32.mrb[0].mxu0
  %2727 = vmatprep.mubr.f32.mxu0 0.0
  %2728 = vmatmul.mubr.f32.gmra.mrb[0].mxu0 %v2031
  %v2729 = vpop.f32.mrb[0].mxu0
  %v2730 = vadd.f32 %v1659, %v2729
  %v2731 = vpop.f32.mrb[0].mxu0
  %2732 = vmatprep.mubr.f32.mxu0 0.0
  %2733 = vmatmul.mubr.f32.gmra.mrb[0].mxu0 %v2034
  %v2734 = vpop.f32.mrb[0].mxu0
  %v2735 = vadd.f32 %v1659, %v2734
  %v2736 = vpop.f32.mrb[0].mxu0
  %2737 = vmatprep.mubr.f32.mxu0 0.0
  %2738 = vmatmul.mubr.f32.gmra.mrb[0].mxu0 %v2037
  %v2739 = vpop.f32.mrb[0].mxu0
  %v2740 = vadd.f32 %v1659, %v2739
  %v2741 = vpop.f32.mrb[0].mxu0
  %2742 = vmatprep.mubr.f32.mxu0 0.0
  %2743 = vmatmul.mubr.f32.gmra.mrb[0].mxu0 %v2040
  %v2744 = vpop.f32.mrb[0].mxu0
  %v2745 = vadd.f32 %v1659, %v2744
  %v2746 = vpop.f32.mrb[0].mxu0
  %2747 = vmatprep.mubr.f32.mxu0 0.0
  %2748 = vmatmul.mubr.f32.gmra.mrb[0].mxu0 %v2043
  %v2749 = vpop.f32.mrb[0].mxu0
  %v2750 = vadd.f32 %v1659, %v2749
  %v2751 = vpop.f32.mrb[0].mxu0
  %2752 = vdwg.mxu0
  %v2753 = vmax.f32 %v2115, 0.0
  %v2754 = vmax.f32 %v2120, 0.0
  %v2755 = vmax.f32 %v2125, 0.0
  %v2756 = vmax.f32 %v2130, 0.0
  %v2757 = vmax.f32 %v2135, 0.0
  %v2758 = vmax.f32 %v2140, 0.0
  %v2759 = vmax.f32 %v2145, 0.0
  %v2760 = vmax.f32 %v2150, 0.0
  %v2761 = vmax.f32 %v2155, 0.0
  %v2762 = vmax.f32 %v2160, 0.0
  %v2763 = vmax.f32 %v2165, 0.0
  %v2764 = vmax.f32 %v2170, 0.0
  %v2765 = vmax.f32 %v2175, 0.0
  %v2766 = vmax.f32 %v2180, 0.0
  %v2767 = vmax.f32 %v2185, 0.0
  %v2768 = vmax.f32 %v2190, 0.0
  %v2769 = vmax.f32 %v2195, 0.0
  %v2770 = vmax.f32 %v2200, 0.0
  %v2771 = vmax.f32 %v2205, 0.0
  %v2772 = vmax.f32 %v2210, 0.0
  %v2773 = vmax.f32 %v2215, 0.0
  %v2774 = vmax.f32 %v2220, 0.0
  %v2775 = vmax.f32 %v2225, 0.0
  %v2776 = vmax.f32 %v2230, 0.0
  %v2777 = vmax.f32 %v2235, 0.0
  %v2778 = vmax.f32 %v2240, 0.0
  %v2779 = vmax.f32 %v2245, 0.0
  %v2780 = vmax.f32 %v2250, 0.0
  %v2781 = vmax.f32 %v2255, 0.0
  %v2782 = vmax.f32 %v2260, 0.0
  %v2783 = vmax.f32 %v2265, 0.0
  %v2784 = vmax.f32 %v2270, 0.0
  %v2785 = vmax.f32 %v2275, 0.0
  %v2786 = vmax.f32 %v2280, 0.0
  %v2787 = vmax.f32 %v2285, 0.0
  %v2788 = vmax.f32 %v2290, 0.0
  %v2789 = vmax.f32 %v2295, 0.0
  %v2790 = vmax.f32 %v2300, 0.0
  %v2791 = vmax.f32 %v2305, 0.0
  %v2792 = vmax.f32 %v2310, 0.0
  %v2793 = vmax.f32 %v2315, 0.0
  %v2794 = vmax.f32 %v2320, 0.0
  %v2795 = vmax.f32 %v2325, 0.0
  %v2796 = vmax.f32 %v2330, 0.0
  %v2797 = vmax.f32 %v2335, 0.0
  %v2798 = vmax.f32 %v2340, 0.0
  %v2799 = vmax.f32 %v2345, 0.0
  %v2800 = vmax.f32 %v2350, 0.0
  %v2801 = vmax.f32 %v2355, 0.0
  %v2802 = vmax.f32 %v2360, 0.0
  %v2803 = vmax.f32 %v2365, 0.0
  %v2804 = vmax.f32 %v2370, 0.0
  %v2805 = vmax.f32 %v2375, 0.0
  %v2806 = vmax.f32 %v2380, 0.0
  %v2807 = vmax.f32 %v2385, 0.0
  %v2808 = vmax.f32 %v2390, 0.0
  %v2809 = vmax.f32 %v2395, 0.0
  %v2810 = vmax.f32 %v2400, 0.0
  %v2811 = vmax.f32 %v2405, 0.0
  %v2812 = vmax.f32 %v2410, 0.0
  %v2813 = vmax.f32 %v2415, 0.0
  %v2814 = vmax.f32 %v2420, 0.0
  %v2815 = vmax.f32 %v2425, 0.0
  %v2816 = vmax.f32 %v2430, 0.0
  %v2817 = vmax.f32 %v2435, 0.0
  %v2818 = vmax.f32 %v2440, 0.0
  %v2819 = vmax.f32 %v2445, 0.0
  %v2820 = vmax.f32 %v2450, 0.0
  %v2821 = vmax.f32 %v2455, 0.0
  %v2822 = vmax.f32 %v2460, 0.0
  %v2823 = vmax.f32 %v2465, 0.0
  %v2824 = vmax.f32 %v2470, 0.0
  %v2825 = vmax.f32 %v2475, 0.0
  %v2826 = vmax.f32 %v2480, 0.0
  %v2827 = vmax.f32 %v2485, 0.0
  %v2828 = vmax.f32 %v2490, 0.0
  %v2829 = vmax.f32 %v2495, 0.0
  %v2830 = vmax.f32 %v2500, 0.0
  %v2831 = vmax.f32 %v2505, 0.0
  %v2832 = vmax.f32 %v2510, 0.0
  %v2833 = vmax.f32 %v2515, 0.0
  %v2834 = vmax.f32 %v2520, 0.0
  %v2835 = vmax.f32 %v2525, 0.0
  %v2836 = vmax.f32 %v2530, 0.0
  %v2837 = vmax.f32 %v2535, 0.0
  %v2838 = vmax.f32 %v2540, 0.0
  %v2839 = vmax.f32 %v2545, 0.0
  %v2840 = vmax.f32 %v2550, 0.0
  %v2841 = vmax.f32 %v2555, 0.0
  %v2842 = vmax.f32 %v2560, 0.0
  %v2843 = vmax.f32 %v2565, 0.0
  %v2844 = vmax.f32 %v2570, 0.0
  %v2845 = vmax.f32 %v2575, 0.0
  %v2846 = vmax.f32 %v2580, 0.0
  %v2847 = vmax.f32 %v2585, 0.0
  %v2848 = vmax.f32 %v2590, 0.0
  %v2849 = vmax.f32 %v2595, 0.0
  %v2850 = vmax.f32 %v2600, 0.0
  %v2851 = vmax.f32 %v2605, 0.0
  %v2852 = vmax.f32 %v2610, 0.0
  %v2853 = vmax.f32 %v2615, 0.0
  %v2854 = vmax.f32 %v2620, 0.0
  %v2855 = vmax.f32 %v2625, 0.0
  %v2856 = vmax.f32 %v2630, 0.0
  %v2857 = vmax.f32 %v2635, 0.0
  %v2858 = vmax.f32 %v2640, 0.0
  %v2859 = vmax.f32 %v2645, 0.0
  %v2860 = vmax.f32 %v2650, 0.0
  %v2861 = vmax.f32 %v2655, 0.0
  %v2862 = vmax.f32 %v2660, 0.0
  %v2863 = vmax.f32 %v2665, 0.0
  %v2864 = vmax.f32 %v2670, 0.0
  %v2865 = vmax.f32 %v2675, 0.0
  %v2866 = vmax.f32 %v2680, 0.0
  %v2867 = vmax.f32 %v2685, 0.0
  %v2868 = vmax.f32 %v2690, 0.0
  %v2869 = vmax.f32 %v2695, 0.0
  %v2870 = vmax.f32 %v2700, 0.0
  %v2871 = vmax.f32 %v2705, 0.0
  %v2872 = vmax.f32 %v2710, 0.0
  %v2873 = vmax.f32 %v2715, 0.0
  %v2874 = vmax.f32 %v2720, 0.0
  %v2875 = vmax.f32 %v2725, 0.0
  %v2876 = vmax.f32 %v2730, 0.0
  %v2877 = vmax.f32 %v2735, 0.0
  %v2878 = vmax.f32 %v2740, 0.0
  %v2879 = vmax.f32 %v2745, 0.0
  %v2880 = vmax.f32 %v2750, 0.0
  %v2881 = vld [vmem:[%s8] sm:$0xff]
  %v2882 = vld [vmem:[%s8 + $0x8] sm:$0xff]
  %v2883 = vld [vmem:[%s9] sm:$0x1]
  %v2885 = vlaneseq
  %v2886 = vshrl.u32 %v2885, 7
  %v2887 = vsub.s32 0, %v2886
  %v2888 = vrot.slane %v2883, %v2887
  %v2891 = vsel %vm762, %v2753, 0
  %v2894 = vsel %vm762, %v2754, 0
  %v2897 = vsel %vm762, %v2755, 0
  %v2900 = vsel %vm762, %v2756, 0
  %v2903 = vsel %vm762, %v2757, 0
  %v2906 = vsel %vm762, %v2758, 0
  %v2909 = vsel %vm762, %v2759, 0
  %v2912 = vsel %vm762, %v2760, 0
  %v2915 = vsel %vm762, %v2761, 0
  %v2918 = vsel %vm762, %v2762, 0
  %v2921 = vsel %vm762, %v2763, 0
  %v2924 = vsel %vm762, %v2764, 0
  %v2927 = vsel %vm762, %v2765, 0
  %v2930 = vsel %vm762, %v2766, 0
  %v2933 = vsel %vm762, %v2767, 0
  %v2936 = vsel %vm762, %v2768, 0
  %v2939 = vsel %vm762, %v2769, 0
  %v2942 = vsel %vm762, %v2770, 0
  %v2945 = vsel %vm762, %v2771, 0
  %v2948 = vsel %vm762, %v2772, 0
  %v2951 = vsel %vm762, %v2773, 0
  %v2954 = vsel %vm762, %v2774, 0
  %v2957 = vsel %vm762, %v2775, 0
  %v2960 = vsel %vm762, %v2776, 0
  %v2963 = vsel %vm762, %v2777, 0
  %v2966 = vsel %vm762, %v2778, 0
  %v2969 = vsel %vm762, %v2779, 0
  %v2972 = vsel %vm762, %v2780, 0
  %v2975 = vsel %vm762, %v2781, 0
  %v2978 = vsel %vm762, %v2782, 0
  %v2981 = vsel %vm762, %v2783, 0
  %v2984 = vsel %vm762, %v2784, 0
  %v2987 = vsel %vm762, %v2785, 0
  %v2990 = vsel %vm762, %v2786, 0
  %v2993 = vsel %vm762, %v2787, 0
  %v2996 = vsel %vm762, %v2788, 0
  %v2999 = vsel %vm762, %v2789, 0
  %v3002 = vsel %vm762, %v2790, 0
  %v3005 = vsel %vm762, %v2791, 0
  %v3008 = vsel %vm762, %v2792, 0
  %v3011 = vsel %vm762, %v2793, 0
  %v3014 = vsel %vm762, %v2794, 0
  %v3017 = vsel %vm762, %v2795, 0
  %v3020 = vsel %vm762, %v2796, 0
  %v3023 = vsel %vm762, %v2797, 0
  %v3026 = vsel %vm762, %v2798, 0
  %v3029 = vsel %vm762, %v2799, 0
  %v3032 = vsel %vm762, %v2800, 0
  %v3035 = vsel %vm762, %v2801, 0
  %v3038 = vsel %vm762, %v2802, 0
  %v3041 = vsel %vm762, %v2803, 0
  %v3044 = vsel %vm762, %v2804, 0
  %v3047 = vsel %vm762, %v2805, 0
  %v3050 = vsel %vm762, %v2806, 0
  %v3053 = vsel %vm762, %v2807, 0
  %v3056 = vsel %vm762, %v2808, 0
  %v3059 = vsel %vm762, %v2809, 0
  %v3062 = vsel %vm762, %v2810, 0
  %v3065 = vsel %vm762, %v2811, 0
  %v3068 = vsel %vm762, %v2812, 0
  %v3071 = vsel %vm762, %v2813, 0
  %v3074 = vsel %vm762, %v2814, 0
  %v3077 = vsel %vm762, %v2815, 0
  %v3080 = vsel %vm762, %v2816, 0
  %v3083 = vsel %vm762, %v2817, 0
  %v3086 = vsel %vm762, %v2818, 0
  %v3089 = vsel %vm762, %v2819, 0
  %v3092 = vsel %vm762, %v2820, 0
  %v3095 = vsel %vm762, %v2821, 0
  %v3098 = vsel %vm762, %v2822, 0
  %v3101 = vsel %vm762, %v2823, 0
  %v3104 = vsel %vm762, %v2824, 0
  %v3107 = vsel %vm762, %v2825, 0
  %v3110 = vsel %vm762, %v2826, 0
  %v3113 = vsel %vm762, %v2827, 0
  %v3116 = vsel %vm762, %v2828, 0
  %v3119 = vsel %vm762, %v2829, 0
  %v3122 = vsel %vm762, %v2830, 0
  %v3125 = vsel %vm762, %v2831, 0
  %v3128 = vsel %vm762, %v2832, 0
  %v3131 = vsel %vm762, %v2833, 0
  %v3134 = vsel %vm762, %v2834, 0
  %v3137 = vsel %vm762, %v2835, 0
  %v3140 = vsel %vm762, %v2836, 0
  %v3143 = vsel %vm762, %v2837, 0
  %v3146 = vsel %vm762, %v2838, 0
  %v3149 = vsel %vm762, %v2839, 0
  %v3152 = vsel %vm762, %v2840, 0
  %v3155 = vsel %vm762, %v2841, 0
  %v3158 = vsel %vm762, %v2842, 0
  %v3161 = vsel %vm762, %v2843, 0
  %v3164 = vsel %vm762, %v2844, 0
  %v3167 = vsel %vm762, %v2845, 0
  %v3170 = vsel %vm762, %v2846, 0
  %v3173 = vsel %vm762, %v2847, 0
  %v3176 = vsel %vm762, %v2848, 0
  %v3179 = vsel %vm762, %v2849, 0
  %v3182 = vsel %vm762, %v2850, 0
  %v3185 = vsel %vm762, %v2851, 0
  %v3188 = vsel %vm762, %v2852, 0
  %v3191 = vsel %vm762, %v2853, 0
  %v3194 = vsel %vm762, %v2854, 0
  %v3197 = vsel %vm762, %v2855, 0
  %v3200 = vsel %vm762, %v2856, 0
  %v3203 = vsel %vm762, %v2857, 0
  %v3206 = vsel %vm762, %v2858, 0
  %v3209 = vsel %vm762, %v2859, 0
  %v3212 = vsel %vm762, %v2860, 0
  %v3215 = vsel %vm762, %v2861, 0
  %v3218 = vsel %vm762, %v2862, 0
  %v3221 = vsel %vm762, %v2863, 0
  %v3224 = vsel %vm762, %v2864, 0
  %v3227 = vsel %vm762, %v2865, 0
  %v3230 = vsel %vm762, %v2866, 0
  %v3233 = vsel %vm762, %v2867, 0
  %v3236 = vsel %vm762, %v2868, 0
  %v3239 = vsel %vm762, %v2869, 0
  %v3242 = vsel %vm762, %v2870, 0
  %v3245 = vsel %vm762, %v2871, 0
  %v3248 = vsel %vm762, %v2872, 0
  %v3251 = vsel %vm762, %v2873, 0
  %v3254 = vsel %vm762, %v2874, 0
  %v3257 = vsel %vm762, %v2875, 0
  %v3260 = vsel %vm762, %v2876, 0
  %v3263 = vsel %vm762, %v2877, 0
  %v3266 = vsel %vm762, %v2878, 0
  %v3269 = vsel %vm762, %v2879, 0
  %v3272 = vsel %vm762, %v2880, 0
  %3274 = vmatprep.subr.mxu0 0.0
  %3275 = vmatpush1.msra.mxu0 %v2881
  %3276 = vmatprep.subr.mxu0 0.0
  %3277 = vmatpush1.msra.mxu0 %v2882
  %3278 = vmatprep.subr.mxu0 0.0
  %3279 = vmatpush1.msra.mxu0 0.0
  %3280 = vmatprep.subr.mxu0 0.0
  %3281 = vmatpush1.msra.mxu0 0.0
  %3282 = vmatprep.subr.mxu0 0.0
  %3283 = vmatpush1.msra.mxu0 0.0
  %3284 = vmatprep.subr.mxu0 0.0
  %3285 = vmatpush1.msra.mxu0 0.0
  %3286 = vmatprep.subr.mxu0 0.0
  %3287 = vmatpush1.msra.mxu0 0.0
  %3288 = vmatprep.subr.mxu0 0.0
  %3289 = vmatpush1.msra.mxu0 0.0
  %3290 = vmatprep.subr.mxu0 0.0
  %3291 = vmatpush1.msra.mxu0 0.0
  %3292 = vmatprep.subr.mxu0 0.0
  %3293 = vmatpush1.msra.mxu0 0.0
  %3294 = vmatprep.subr.mxu0 0.0
  %3295 = vmatpush1.msra.mxu0 0.0
  %3296 = vmatprep.subr.mxu0 0.0
  %3297 = vmatpush1.msra.mxu0 0.0
  %3298 = vmatprep.subr.mxu0 0.0
  %3299 = vmatpush1.msra.mxu0 0.0
  %3300 = vmatprep.subr.mxu0 0.0
  %3301 = vmatpush1.msra.mxu0 0.0
  %3302 = vmatprep.subr.mxu0 0.0
  %3303 = vmatpush1.msra.mxu0 0.0
  %3304 = vmatprep.subr.mxu0 0.0
  %3305 = vmatpush1.msra.mxu0 0.0
  %3306 = vmatprep.subr.mxu0 0.0
  %3307 = vmatpush1.msra.mxu0 0.0
  %3308 = vmatprep.subr.mxu0 0.0
  %3309 = vmatpush1.msra.mxu0 0.0
  %3310 = vmatprep.subr.mxu0 0.0
  %3311 = vmatpush1.msra.mxu0 0.0
  %3312 = vmatprep.subr.mxu0 0.0
  %3313 = vmatpush1.msra.mxu0 0.0
  %3314 = vmatprep.subr.mxu0 0.0
  %3315 = vmatpush1.msra.mxu0 0.0
  %3316 = vmatprep.subr.mxu0 0.0
  %3317 = vmatpush1.msra.mxu0 0.0
  %3318 = vmatprep.subr.mxu0 0.0
  %3319 = vmatpush1.msra.mxu0 0.0
  %3320 = vmatprep.subr.mxu0 0.0
  %3321 = vmatpush1.msra.mxu0 0.0
  %3322 = vmatprep.subr.mxu0 0.0
  %3323 = vmatpush1.msra.mxu0 0.0
  %3324 = vmatprep.subr.mxu0 0.0
  %3325 = vmatpush1.msra.mxu0 0.0
  %3326 = vmatprep.subr.mxu0 0.0
  %3327 = vmatpush1.msra.mxu0 0.0
  %3328 = vmatprep.subr.mxu0 0.0
  %3329 = vmatpush1.msra.mxu0 0.0
  %3330 = vmatprep.subr.mxu0 0.0
  %3331 = vmatpush1.msra.mxu0 0.0
  %3332 = vmatprep.subr.mxu0 0.0
  %3333 = vmatpush1.msra.mxu0 0.0
  %3334 = vmatprep.subr.mxu0 0.0
  %3335 = vmatpush1.msra.mxu0 0.0
  %3336 = vmatprep.subr.mxu0 0.0
  %3337 = vmatpush1.msra.mxu0 0.0
  %3338 = vmatprep.mubr.f32.mxu0 0.0
  %3339 = vmatmul.mubr.f32.gmra.mrb[0].mxu0 %v2891
  %v3340 = vpop.f32.mrb[0].mxu0
  %v3341 = vadd.f32 %v2888, %v3340
  %v3342 = vpop.f32.mrb[0].mxu0
  %3343 = vmatprep.mubr.f32.mxu0 0.0
  %3344 = vmatmul.mubr.f32.gmra.mrb[0].mxu0 %v2894
  %v3345 = vpop.f32.mrb[0].mxu0
  %v3346 = vadd.f32 %v2888, %v3345
  %v3347 = vpop.f32.mrb[0].mxu0
  %3348 = vmatprep.mubr.f32.mxu0 0.0
  %3349 = vmatmul.mubr.f32.gmra.mrb[0].mxu0 %v2897
  %v3350 = vpop.f32.mrb[0].mxu0
  %v3351 = vadd.f32 %v2888, %v3350
  %v3352 = vpop.f32.mrb[0].mxu0
  %3353 = vmatprep.mubr.f32.mxu0 0.0
  %3354 = vmatmul.mubr.f32.gmra.mrb[0].mxu0 %v2900
  %v3355 = vpop.f32.mrb[0].mxu0
  %v3356 = vadd.f32 %v2888, %v3355
  %v3357 = vpop.f32.mrb[0].mxu0
  %3358 = vmatprep.mubr.f32.mxu0 0.0
  %3359 = vmatmul.mubr.f32.gmra.mrb[0].mxu0 %v2903
  %v3360 = vpop.f32.mrb[0].mxu0
  %v3361 = vadd.f32 %v2888, %v3360
  %v3362 = vpop.f32.mrb[0].mxu0
  %3363 = vmatprep.mubr.f32.mxu0 0.0
  %3364 = vmatmul.mubr.f32.gmra.mrb[0].mxu0 %v2906
  %v3365 = vpop.f32.mrb[0].mxu0
  %v3366 = vadd.f32 %v2888, %v3365
  %v3367 = vpop.f32.mrb[0].mxu0
  %3368 = vmatprep.mubr.f32.mxu0 0.0
  %3369 = vmatmul.mubr.f32.gmra.mrb[0].mxu0 %v2909
  %v3370 = vpop.f32.mrb[0].mxu0
  %v3371 = vadd.f32 %v2888, %v3370
  %v3372 = vpop.f32.mrb[0].mxu0
  %3373 = vmatprep.mubr.f32.mxu0 0.0
  %3374 = vmatmul.mubr.f32.gmra.mrb[0].mxu0 %v2912
  %v3375 = vpop.f32.mrb[0].mxu0
  %v3376 = vadd.f32 %v2888, %v3375
  %v3377 = vpop.f32.mrb[0].mxu0
  %3378 = vmatprep.mubr.f32.mxu0 0.0
  %3379 = vmatmul.mubr.f32.gmra.mrb[0].mxu0 %v2915
  %v3380 = vpop.f32.mrb[0].mxu0
  %v3381 = vadd.f32 %v2888, %v3380
  %v3382 = vpop.f32.mrb[0].mxu0
  %3383 = vmatprep.mubr.f32.mxu0 0.0
  %3384 = vmatmul.mubr.f32.gmra.mrb[0].mxu0 %v2918
  %v3385 = vpop.f32.mrb[0].mxu0
  %v3386 = vadd.f32 %v2888, %v3385
  %v3387 = vpop.f32.mrb[0].mxu0
  %3388 = vmatprep.mubr.f32.mxu0 0.0
  %3389 = vmatmul.mubr.f32.gmra.mrb[0].mxu0 %v2921
  %v3390 = vpop.f32.mrb[0].mxu0
  %v3391 = vadd.f32 %v2888, %v3390
  %v3392 = vpop.f32.mrb[0].mxu0
  %3393 = vmatprep.mubr.f32.mxu0 0.0
  %3394 = vmatmul.mubr.f32.gmra.mrb[0].mxu0 %v2924
  %v3395 = vpop.f32.mrb[0].mxu0
  %v3396 = vadd.f32 %v2888, %v3395
  %v3397 = vpop.f32.mrb[0].mxu0
  %3398 = vmatprep.mubr.f32.mxu0 0.0
  %3399 = vmatmul.mubr.f32.gmra.mrb[0].mxu0 %v2927
  %v3400 = vpop.f32.mrb[0].mxu0
  %v3401 = vadd.f32 %v2888, %v3400
  %v3402 = vpop.f32.mrb[0].mxu0
  %3403 = vmatprep.mubr.f32.mxu0 0.0
  %3404 = vmatmul.mubr.f32.gmra.mrb[0].mxu0 %v2930
  %v3405 = vpop.f32.mrb[0].mxu0
  %v3406 = vadd.f32 %v2888, %v3405
  %v3407 = vpop.f32.mrb[0].mxu0
  %3408 = vmatprep.mubr.f32.mxu0 0.0
  %3409 = vmatmul.mubr.f32.gmra.mrb[0].mxu0 %v2933
  %v3410 = vpop.f32.mrb[0].mxu0
  %v3411 = vadd.f32 %v2888, %v3410
  %v3412 = vpop.f32.mrb[0].mxu0
  %3413 = vmatprep.mubr.f32.mxu0 0.0
  %3414 = vmatmul.mubr.f32.gmra.mrb[0].mxu0 %v2936
  %v3415 = vpop.f32.mrb[0].mxu0
  %v3416 = vadd.f32 %v2888, %v3415
  %v3417 = vpop.f32.mrb[0].mxu0
  %3418 = vmatprep.mubr.f32.mxu0 0.0
  %3419 = vmatmul.mubr.f32.gmra.mrb[0].mxu0 %v2939
  %v3420 = vpop.f32.mrb[0].mxu0
  %v3421 = vadd.f32 %v2888, %v3420
  %v3422 = vpop.f32.mrb[0].mxu0
  %3423 = vmatprep.mubr.f32.mxu0 0.0
  %3424 = vmatmul.mubr.f32.gmra.mrb[0].mxu0 %v2942
  %v3425 = vpop.f32.mrb[0].mxu0
  %v3426 = vadd.f32 %v2888, %v3425
  %v3427 = vpop.f32.mrb[0].mxu0
  %3428 = vmatprep.mubr.f32.mxu0 0.0
  %3429 = vmatmul.mubr.f32.gmra.mrb[0].mxu0 %v2945
  %v3430 = vpop.f32.mrb[0].mxu0
  %v3431 = vadd.f32 %v2888, %v3430
  %v3432 = vpop.f32.mrb[0].mxu0
  %3433 = vmatprep.mubr.f32.mxu0 0.0
  %3434 = vmatmul.mubr.f32.gmra.mrb[0].mxu0 %v2948
  %v3435 = vpop.f32.mrb[0].mxu0
  %v3436 = vadd.f32 %v2888, %v3435
  %v3437 = vpop.f32.mrb[0].mxu0
  %3438 = vmatprep.mubr.f32.mxu0 0.0
  %3439 = vmatmul.mubr.f32.gmra.mrb[0].mxu0 %v2951
  %v3440 = vpop.f32.mrb[0].mxu0
  %v3441 = vadd.f32 %v2888, %v3440
  %v3442 = vpop.f32.mrb[0].mxu0
  %3443 = vmatprep.mubr.f32.mxu0 0.0
  %3444 = vmatmul.mubr.f32.gmra.mrb[0].mxu0 %v2954
  %v3445 = vpop.f32.mrb[0].mxu0
  %v3446 = vadd.f32 %v2888, %v3445
  %v3447 = vpop.f32.mrb[0].mxu0
  %3448 = vmatprep.mubr.f32.mxu0 0.0
  %3449 = vmatmul.mubr.f32.gmra.mrb[0].mxu0 %v2957
  %v3450 = vpop.f32.mrb[0].mxu0
  %v3451 = vadd.f32 %v2888, %v3450
  %v3452 = vpop.f32.mrb[0].mxu0
  %3453 = vmatprep.mubr.f32.mxu0 0.0
  %3454 = vmatmul.mubr.f32.gmra.mrb[0].mxu0 %v2960
  %v3455 = vpop.f32.mrb[0].mxu0
  %v3456 = vadd.f32 %v2888, %v3455
  %v3457 = vpop.f32.mrb[0].mxu0
  %3458 = vmatprep.mubr.f32.mxu0 0.0
  %3459 = vmatmul.mubr.f32.gmra.mrb[0].mxu0 %v2963
  %v3460 = vpop.f32.mrb[0].mxu0
  %v3461 = vadd.f32 %v2888, %v3460
  %v3462 = vpop.f32.mrb[0].mxu0
  %3463 = vmatprep.mubr.f32.mxu0 0.0
  %3464 = vmatmul.mubr.f32.gmra.mrb[0].mxu0 %v2966
  %v3465 = vpop.f32.mrb[0].mxu0
  %v3466 = vadd.f32 %v2888, %v3465
  %v3467 = vpop.f32.mrb[0].mxu0
  %3468 = vmatprep.mubr.f32.mxu0 0.0
  %3469 = vmatmul.mubr.f32.gmra.mrb[0].mxu0 %v2969
  %v3470 = vpop.f32.mrb[0].mxu0
  %v3471 = vadd.f32 %v2888, %v3470
  %v3472 = vpop.f32.mrb[0].mxu0
  %3473 = vmatprep.mubr.f32.mxu0 0.0
  %3474 = vmatmul.mubr.f32.gmra.mrb[0].mxu0 %v2972
  %v3475 = vpop.f32.mrb[0].mxu0
  %v3476 = vadd.f32 %v2888, %v3475
  %v3477 = vpop.f32.mrb[0].mxu0
  %3478 = vmatprep.mubr.f32.mxu0 0.0
  %3479 = vmatmul.mubr.f32.gmra.mrb[0].mxu0 %v2975
  %v3480 = vpop.f32.mrb[0].mxu0
  %v3481 = vadd.f32 %v2888, %v3480
  %v3482 = vpop.f32.mrb[0].mxu0
  %3483 = vmatprep.mubr.f32.mxu0 0.0
  %3484 = vmatmul.mubr.f32.gmra.mrb[0].mxu0 %v2978
  %v3485 = vpop.f32.mrb[0].mxu0
  %v3486 = vadd.f32 %v2888, %v3485
  %v3487 = vpop.f32.mrb[0].mxu0
  %3488 = vmatprep.mubr.f32.mxu0 0.0
  %3489 = vmatmul.mubr.f32.gmra.mrb[0].mxu0 %v2981
  %v3490 = vpop.f32.mrb[0].mxu0
  %v3491 = vadd.f32 %v2888, %v3490
  %v3492 = vpop.f32.mrb[0].mxu0
  %3493 = vmatprep.mubr.f32.mxu0 0.0
  %3494 = vmatmul.mubr.f32.gmra.mrb[0].mxu0 %v2984
  %v3495 = vpop.f32.mrb[0].mxu0
  %v3496 = vadd.f32 %v2888, %v3495
  %v3497 = vpop.f32.mrb[0].mxu0
  %3498 = vmatprep.mubr.f32.mxu0 0.0
  %3499 = vmatmul.mubr.f32.gmra.mrb[0].mxu0 %v2987
  %v3500 = vpop.f32.mrb[0].mxu0
  %v3501 = vadd.f32 %v2888, %v3500
  %v3502 = vpop.f32.mrb[0].mxu0
  %3503 = vmatprep.mubr.f32.mxu0 0.0
  %3504 = vmatmul.mubr.f32.gmra.mrb[0].mxu0 %v2990
  %v3505 = vpop.f32.mrb[0].mxu0
  %v3506 = vadd.f32 %v2888, %v3505
  %v3507 = vpop.f32.mrb[0].mxu0
  %3508 = vmatprep.mubr.f32.mxu0 0.0
  %3509 = vmatmul.mubr.f32.gmra.mrb[0].mxu0 %v2993
  %v3510 = vpop.f32.mrb[0].mxu0
  %v3511 = vadd.f32 %v2888, %v3510
  %v3512 = vpop.f32.mrb[0].mxu0
  %3513 = vmatprep.mubr.f32.mxu0 0.0
  %3514 = vmatmul.mubr.f32.gmra.mrb[0].mxu0 %v2996
  %v3515 = vpop.f32.mrb[0].mxu0
  %v3516 = vadd.f32 %v2888, %v3515
  %v3517 = vpop.f32.mrb[0].mxu0
  %3518 = vmatprep.mubr.f32.mxu0 0.0
  %3519 = vmatmul.mubr.f32.gmra.mrb[0].mxu0 %v2999
  %v3520 = vpop.f32.mrb[0].mxu0
  %v3521 = vadd.f32 %v2888, %v3520
  %v3522 = vpop.f32.mrb[0].mxu0
  %3523 = vmatprep.mubr.f32.mxu0 0.0
  %3524 = vmatmul.mubr.f32.gmra.mrb[0].mxu0 %v3002
  %v3525 = vpop.f32.mrb[0].mxu0
  %v3526 = vadd.f32 %v2888, %v3525
  %v3527 = vpop.f32.mrb[0].mxu0
  %3528 = vmatprep.mubr.f32.mxu0 0.0
  %3529 = vmatmul.mubr.f32.gmra.mrb[0].mxu0 %v3005
  %v3530 = vpop.f32.mrb[0].mxu0
  %v3531 = vadd.f32 %v2888, %v3530
  %v3532 = vpop.f32.mrb[0].mxu0
  %3533 = vmatprep.mubr.f32.mxu0 0.0
  %3534 = vmatmul.mubr.f32.gmra.mrb[0].mxu0 %v3008
  %v3535 = vpop.f32.mrb[0].mxu0
  %v3536 = vadd.f32 %v2888, %v3535
  %v3537 = vpop.f32.mrb[0].mxu0
  %3538 = vmatprep.mubr.f32.mxu0 0.0
  %3539 = vmatmul.mubr.f32.gmra.mrb[0].mxu0 %v3011
  %v3540 = vpop.f32.mrb[0].mxu0
  %v3541 = vadd.f32 %v2888, %v3540
  %v3542 = vpop.f32.mrb[0].mxu0
  %3543 = vmatprep.mubr.f32.mxu0 0.0
  %3544 = vmatmul.mubr.f32.gmra.mrb[0].mxu0 %v3014
  %v3545 = vpop.f32.mrb[0].mxu0
  %v3546 = vadd.f32 %v2888, %v3545
  %v3547 = vpop.f32.mrb[0].mxu0
  %3548 = vmatprep.mubr.f32.mxu0 0.0
  %3549 = vmatmul.mubr.f32.gmra.mrb[0].mxu0 %v3017
  %v3550 = vpop.f32.mrb[0].mxu0
  %v3551 = vadd.f32 %v2888, %v3550
  %v3552 = vpop.f32.mrb[0].mxu0
  %3553 = vmatprep.mubr.f32.mxu0 0.0
  %3554 = vmatmul.mubr.f32.gmra.mrb[0].mxu0 %v3020
  %v3555 = vpop.f32.mrb[0].mxu0
  %v3556 = vadd.f32 %v2888, %v3555
  %v3557 = vpop.f32.mrb[0].mxu0
  %3558 = vmatprep.mubr.f32.mxu0 0.0
  %3559 = vmatmul.mubr.f32.gmra.mrb[0].mxu0 %v3023
  %v3560 = vpop.f32.mrb[0].mxu0
  %v3561 = vadd.f32 %v2888, %v3560
  %v3562 = vpop.f32.mrb[0].mxu0
  %3563 = vmatprep.mubr.f32.mxu0 0.0
  %3564 = vmatmul.mubr.f32.gmra.mrb[0].mxu0 %v3026
  %v3565 = vpop.f32.mrb[0].mxu0
  %v3566 = vadd.f32 %v2888, %v3565
  %v3567 = vpop.f32.mrb[0].mxu0
  %3568 = vmatprep.mubr.f32.mxu0 0.0
  %3569 = vmatmul.mubr.f32.gmra.mrb[0].mxu0 %v3029
  %v3570 = vpop.f32.mrb[0].mxu0
  %v3571 = vadd.f32 %v2888, %v3570
  %v3572 = vpop.f32.mrb[0].mxu0
  %3573 = vmatprep.mubr.f32.mxu0 0.0
  %3574 = vmatmul.mubr.f32.gmra.mrb[0].mxu0 %v3032
  %v3575 = vpop.f32.mrb[0].mxu0
  %v3576 = vadd.f32 %v2888, %v3575
  %v3577 = vpop.f32.mrb[0].mxu0
  %3578 = vmatprep.mubr.f32.mxu0 0.0
  %3579 = vmatmul.mubr.f32.gmra.mrb[0].mxu0 %v3035
  %v3580 = vpop.f32.mrb[0].mxu0
  %v3581 = vadd.f32 %v2888, %v3580
  %v3582 = vpop.f32.mrb[0].mxu0
  %3583 = vmatprep.mubr.f32.mxu0 0.0
  %3584 = vmatmul.mubr.f32.gmra.mrb[0].mxu0 %v3038
  %v3585 = vpop.f32.mrb[0].mxu0
  %v3586 = vadd.f32 %v2888, %v3585
  %v3587 = vpop.f32.mrb[0].mxu0
  %3588 = vmatprep.mubr.f32.mxu0 0.0
  %3589 = vmatmul.mubr.f32.gmra.mrb[0].mxu0 %v3041
  %v3590 = vpop.f32.mrb[0].mxu0
  %v3591 = vadd.f32 %v2888, %v3590
  %v3592 = vpop.f32.mrb[0].mxu0
  %3593 = vmatprep.mubr.f32.mxu0 0.0
  %3594 = vmatmul.mubr.f32.gmra.mrb[0].mxu0 %v3044
  %v3595 = vpop.f32.mrb[0].mxu0
  %v3596 = vadd.f32 %v2888, %v3595
  %v3597 = vpop.f32.mrb[0].mxu0
  %3598 = vmatprep.mubr.f32.mxu0 0.0
  %3599 = vmatmul.mubr.f32.gmra.mrb[0].mxu0 %v3047
  %v3600 = vpop.f32.mrb[0].mxu0
  %v3601 = vadd.f32 %v2888, %v3600
  %v3602 = vpop.f32.mrb[0].mxu0
  %3603 = vmatprep.mubr.f32.mxu0 0.0
  %3604 = vmatmul.mubr.f32.gmra.mrb[0].mxu0 %v3050
  %v3605 = vpop.f32.mrb[0].mxu0
  %v3606 = vadd.f32 %v2888, %v3605
  %v3607 = vpop.f32.mrb[0].mxu0
  %3608 = vmatprep.mubr.f32.mxu0 0.0
  %3609 = vmatmul.mubr.f32.gmra.mrb[0].mxu0 %v3053
  %v3610 = vpop.f32.mrb[0].mxu0
  %v3611 = vadd.f32 %v2888, %v3610
  %v3612 = vpop.f32.mrb[0].mxu0
  %3613 = vmatprep.mubr.f32.mxu0 0.0
  %3614 = vmatmul.mubr.f32.gmra.mrb[0].mxu0 %v3056
  %v3615 = vpop.f32.mrb[0].mxu0
  %v3616 = vadd.f32 %v2888, %v3615
  %v3617 = vpop.f32.mrb[0].mxu0
  %3618 = vmatprep.mubr.f32.mxu0 0.0
  %3619 = vmatmul.mubr.f32.gmra.mrb[0].mxu0 %v3059
  %v3620 = vpop.f32.mrb[0].mxu0
  %v3621 = vadd.f32 %v2888, %v3620
  %v3622 = vpop.f32.mrb[0].mxu0
  %3623 = vmatprep.mubr.f32.mxu0 0.0
  %3624 = vmatmul.mubr.f32.gmra.mrb[0].mxu0 %v3062
  %v3625 = vpop.f32.mrb[0].mxu0
  %v3626 = vadd.f32 %v2888, %v3625
  %v3627 = vpop.f32.mrb[0].mxu0
  %3628 = vmatprep.mubr.f32.mxu0 0.0
  %3629 = vmatmul.mubr.f32.gmra.mrb[0].mxu0 %v3065
  %v3630 = vpop.f32.mrb[0].mxu0
  %v3631 = vadd.f32 %v2888, %v3630
  %v3632 = vpop.f32.mrb[0].mxu0
  %3633 = vmatprep.mubr.f32.mxu0 0.0
  %3634 = vmatmul.mubr.f32.gmra.mrb[0].mxu0 %v3068
  %v3635 = vpop.f32.mrb[0].mxu0
  %v3636 = vadd.f32 %v2888, %v3635
  %v3637 = vpop.f32.mrb[0].mxu0
  %3638 = vmatprep.mubr.f32.mxu0 0.0
  %3639 = vmatmul.mubr.f32.gmra.mrb[0].mxu0 %v3071
  %v3640 = vpop.f32.mrb[0].mxu0
  %v3641 = vadd.f32 %v2888, %v3640
  %v3642 = vpop.f32.mrb[0].mxu0
  %3643 = vmatprep.mubr.f32.mxu0 0.0
  %3644 = vmatmul.mubr.f32.gmra.mrb[0].mxu0 %v3074
  %v3645 = vpop.f32.mrb[0].mxu0
  %v3646 = vadd.f32 %v2888, %v3645
  %v3647 = vpop.f32.mrb[0].mxu0
  %3648 = vmatprep.mubr.f32.mxu0 0.0
  %3649 = vmatmul.mubr.f32.gmra.mrb[0].mxu0 %v3077
  %v3650 = vpop.f32.mrb[0].mxu0
  %v3651 = vadd.f32 %v2888, %v3650
  %v3652 = vpop.f32.mrb[0].mxu0
  %3653 = vmatprep.mubr.f32.mxu0 0.0
  %3654 = vmatmul.mubr.f32.gmra.mrb[0].mxu0 %v3080
  %v3655 = vpop.f32.mrb[0].mxu0
  %v3656 = vadd.f32 %v2888, %v3655
  %v3657 = vpop.f32.mrb[0].mxu0
  %3658 = vmatprep.mubr.f32.mxu0 0.0
  %3659 = vmatmul.mubr.f32.gmra.mrb[0].mxu0 %v3083
  %v3660 = vpop.f32.mrb[0].mxu0
  %v3661 = vadd.f32 %v2888, %v3660
  %v3662 = vpop.f32.mrb[0].mxu0
  %3663 = vmatprep.mubr.f32.mxu0 0.0
  %3664 = vmatmul.mubr.f32.gmra.mrb[0].mxu0 %v3086
  %v3665 = vpop.f32.mrb[0].mxu0
  %v3666 = vadd.f32 %v2888, %v3665
  %v3667 = vpop.f32.mrb[0].mxu0
  %3668 = vmatprep.mubr.f32.mxu0 0.0
  %3669 = vmatmul.mubr.f32.gmra.mrb[0].mxu0 %v3089
  %v3670 = vpop.f32.mrb[0].mxu0
  %v3671 = vadd.f32 %v2888, %v3670
  %v3672 = vpop.f32.mrb[0].mxu0
  %3673 = vmatprep.mubr.f32.mxu0 0.0
  %3674 = vmatmul.mubr.f32.gmra.mrb[0].mxu0 %v3092
  %v3675 = vpop.f32.mrb[0].mxu0
  %v3676 = vadd.f32 %v2888, %v3675
  %v3677 = vpop.f32.mrb[0].mxu0
  %3678 = vmatprep.mubr.f32.mxu0 0.0
  %3679 = vmatmul.mubr.f32.gmra.mrb[0].mxu0 %v3095
  %v3680 = vpop.f32.mrb[0].mxu0
  %v3681 = vadd.f32 %v2888, %v3680
  %v3682 = vpop.f32.mrb[0].mxu0
  %3683 = vmatprep.mubr.f32.mxu0 0.0
  %3684 = vmatmul.mubr.f32.gmra.mrb[0].mxu0 %v3098
  %v3685 = vpop.f32.mrb[0].mxu0
  %v3686 = vadd.f32 %v2888, %v3685
  %v3687 = vpop.f32.mrb[0].mxu0
  %3688 = vmatprep.mubr.f32.mxu0 0.0
  %3689 = vmatmul.mubr.f32.gmra.mrb[0].mxu0 %v3101
  %v3690 = vpop.f32.mrb[0].mxu0
  %v3691 = vadd.f32 %v2888, %v3690
  %v3692 = vpop.f32.mrb[0].mxu0
  %3693 = vmatprep.mubr.f32.mxu0 0.0
  %3694 = vmatmul.mubr.f32.gmra.mrb[0].mxu0 %v3104
  %v3695 = vpop.f32.mrb[0].mxu0
  %v3696 = vadd.f32 %v2888, %v3695
  %v3697 = vpop.f32.mrb[0].mxu0
  %3698 = vmatprep.mubr.f32.mxu0 0.0
  %3699 = vmatmul.mubr.f32.gmra.mrb[0].mxu0 %v3107
  %v3700 = vpop.f32.mrb[0].mxu0
  %v3701 = vadd.f32 %v2888, %v3700
  %v3702 = vpop.f32.mrb[0].mxu0
  %3703 = vmatprep.mubr.f32.mxu0 0.0
  %3704 = vmatmul.mubr.f32.gmra.mrb[0].mxu0 %v3110
  %v3705 = vpop.f32.mrb[0].mxu0
  %v3706 = vadd.f32 %v2888, %v3705
  %v3707 = vpop.f32.mrb[0].mxu0
  %3708 = vmatprep.mubr.f32.mxu0 0.0
  %3709 = vmatmul.mubr.f32.gmra.mrb[0].mxu0 %v3113
  %v3710 = vpop.f32.mrb[0].mxu0
  %v3711 = vadd.f32 %v2888, %v3710
  %v3712 = vpop.f32.mrb[0].mxu0
  %3713 = vmatprep.mubr.f32.mxu0 0.0
  %3714 = vmatmul.mubr.f32.gmra.mrb[0].mxu0 %v3116
  %v3715 = vpop.f32.mrb[0].mxu0
  %v3716 = vadd.f32 %v2888, %v3715
  %v3717 = vpop.f32.mrb[0].mxu0
  %3718 = vmatprep.mubr.f32.mxu0 0.0
  %3719 = vmatmul.mubr.f32.gmra.mrb[0].mxu0 %v3119
  %v3720 = vpop.f32.mrb[0].mxu0
  %v3721 = vadd.f32 %v2888, %v3720
  %v3722 = vpop.f32.mrb[0].mxu0
  %3723 = vmatprep.mubr.f32.mxu0 0.0
  %3724 = vmatmul.mubr.f32.gmra.mrb[0].mxu0 %v3122
  %v3725 = vpop.f32.mrb[0].mxu0
  %v3726 = vadd.f32 %v2888, %v3725
  %v3727 = vpop.f32.mrb[0].mxu0
  %3728 = vmatprep.mubr.f32.mxu0 0.0
  %3729 = vmatmul.mubr.f32.gmra.mrb[0].mxu0 %v3125
  %v3730 = vpop.f32.mrb[0].mxu0
  %v3731 = vadd.f32 %v2888, %v3730
  %v3732 = vpop.f32.mrb[0].mxu0
  %3733 = vmatprep.mubr.f32.mxu0 0.0
  %3734 = vmatmul.mubr.f32.gmra.mrb[0].mxu0 %v3128
  %v3735 = vpop.f32.mrb[0].mxu0
  %v3736 = vadd.f32 %v2888, %v3735
  %v3737 = vpop.f32.mrb[0].mxu0
  %3738 = vmatprep.mubr.f32.mxu0 0.0
  %3739 = vmatmul.mubr.f32.gmra.mrb[0].mxu0 %v3131
  %v3740 = vpop.f32.mrb[0].mxu0
  %v3741 = vadd.f32 %v2888, %v3740
  %v3742 = vpop.f32.mrb[0].mxu0
  %3743 = vmatprep.mubr.f32.mxu0 0.0
  %3744 = vmatmul.mubr.f32.gmra.mrb[0].mxu0 %v3134
  %v3745 = vpop.f32.mrb[0].mxu0
  %v3746 = vadd.f32 %v2888, %v3745
  %v3747 = vpop.f32.mrb[0].mxu0
  %3748 = vmatprep.mubr.f32.mxu0 0.0
  %3749 = vmatmul.mubr.f32.gmra.mrb[0].mxu0 %v3137
  %v3750 = vpop.f32.mrb[0].mxu0
  %v3751 = vadd.f32 %v2888, %v3750
  %v3752 = vpop.f32.mrb[0].mxu0
  %3753 = vmatprep.mubr.f32.mxu0 0.0
  %3754 = vmatmul.mubr.f32.gmra.mrb[0].mxu0 %v3140
  %v3755 = vpop.f32.mrb[0].mxu0
  %v3756 = vadd.f32 %v2888, %v3755
  %v3757 = vpop.f32.mrb[0].mxu0
  %3758 = vmatprep.mubr.f32.mxu0 0.0
  %3759 = vmatmul.mubr.f32.gmra.mrb[0].mxu0 %v3143
  %v3760 = vpop.f32.mrb[0].mxu0
  %v3761 = vadd.f32 %v2888, %v3760
  %v3762 = vpop.f32.mrb[0].mxu0
  %3763 = vmatprep.mubr.f32.mxu0 0.0
  %3764 = vmatmul.mubr.f32.gmra.mrb[0].mxu0 %v3146
  %v3765 = vpop.f32.mrb[0].mxu0
  %v3766 = vadd.f32 %v2888, %v3765
  %v3767 = vpop.f32.mrb[0].mxu0
  %3768 = vmatprep.mubr.f32.mxu0 0.0
  %3769 = vmatmul.mubr.f32.gmra.mrb[0].mxu0 %v3149
  %v3770 = vpop.f32.mrb[0].mxu0
  %v3771 = vadd.f32 %v2888, %v3770
  %v3772 = vpop.f32.mrb[0].mxu0
  %3773 = vmatprep.mubr.f32.mxu0 0.0
  %3774 = vmatmul.mubr.f32.gmra.mrb[0].mxu0 %v3152
  %v3775 = vpop.f32.mrb[0].mxu0
  %v3776 = vadd.f32 %v2888, %v3775
  %v3777 = vpop.f32.mrb[0].mxu0
  %3778 = vmatprep.mubr.f32.mxu0 0.0
  %3779 = vmatmul.mubr.f32.gmra.mrb[0].mxu0 %v3155
  %v3780 = vpop.f32.mrb[0].mxu0
  %v3781 = vadd.f32 %v2888, %v3780
  %v3782 = vpop.f32.mrb[0].mxu0
  %3783 = vmatprep.mubr.f32.mxu0 0.0
  %3784 = vmatmul.mubr.f32.gmra.mrb[0].mxu0 %v3158
  %v3785 = vpop.f32.mrb[0].mxu0
  %v3786 = vadd.f32 %v2888, %v3785
  %v3787 = vpop.f32.mrb[0].mxu0
  %3788 = vmatprep.mubr.f32.mxu0 0.0
  %3789 = vmatmul.mubr.f32.gmra.mrb[0].mxu0 %v3161
  %v3790 = vpop.f32.mrb[0].mxu0
  %v3791 = vadd.f32 %v2888, %v3790
  %v3792 = vpop.f32.mrb[0].mxu0
  %3793 = vmatprep.mubr.f32.mxu0 0.0
  %3794 = vmatmul.mubr.f32.gmra.mrb[0].mxu0 %v3164
  %v3795 = vpop.f32.mrb[0].mxu0
  %v3796 = vadd.f32 %v2888, %v3795
  %v3797 = vpop.f32.mrb[0].mxu0
  %3798 = vmatprep.mubr.f32.mxu0 0.0
  %3799 = vmatmul.mubr.f32.gmra.mrb[0].mxu0 %v3167
  %v3800 = vpop.f32.mrb[0].mxu0
  %v3801 = vadd.f32 %v2888, %v3800
  %v3802 = vpop.f32.mrb[0].mxu0
  %3803 = vmatprep.mubr.f32.mxu0 0.0
  %3804 = vmatmul.mubr.f32.gmra.mrb[0].mxu0 %v3170
  %v3805 = vpop.f32.mrb[0].mxu0
  %v3806 = vadd.f32 %v2888, %v3805
  %v3807 = vpop.f32.mrb[0].mxu0
  %3808 = vmatprep.mubr.f32.mxu0 0.0
  %3809 = vmatmul.mubr.f32.gmra.mrb[0].mxu0 %v3173
  %v3810 = vpop.f32.mrb[0].mxu0
  %v3811 = vadd.f32 %v2888, %v3810
  %v3812 = vpop.f32.mrb[0].mxu0
  %3813 = vmatprep.mubr.f32.mxu0 0.0
  %3814 = vmatmul.mubr.f32.gmra.mrb[0].mxu0 %v3176
  %v3815 = vpop.f32.mrb[0].mxu0
  %v3816 = vadd.f32 %v2888, %v3815
  %v3817 = vpop.f32.mrb[0].mxu0
  %3818 = vmatprep.mubr.f32.mxu0 0.0
  %3819 = vmatmul.mubr.f32.gmra.mrb[0].mxu0 %v3179
  %v3820 = vpop.f32.mrb[0].mxu0
  %v3821 = vadd.f32 %v2888, %v3820
  %v3822 = vpop.f32.mrb[0].mxu0
  %3823 = vmatprep.mubr.f32.mxu0 0.0
  %3824 = vmatmul.mubr.f32.gmra.mrb[0].mxu0 %v3182
  %v3825 = vpop.f32.mrb[0].mxu0
  %v3826 = vadd.f32 %v2888, %v3825
  %v3827 = vpop.f32.mrb[0].mxu0
  %3828 = vmatprep.mubr.f32.mxu0 0.0
  %3829 = vmatmul.mubr.f32.gmra.mrb[0].mxu0 %v3185
  %v3830 = vpop.f32.mrb[0].mxu0
  %v3831 = vadd.f32 %v2888, %v3830
  %v3832 = vpop.f32.mrb[0].mxu0
  %3833 = vmatprep.mubr.f32.mxu0 0.0
  %3834 = vmatmul.mubr.f32.gmra.mrb[0].mxu0 %v3188
  %v3835 = vpop.f32.mrb[0].mxu0
  %v3836 = vadd.f32 %v2888, %v3835
  %v3837 = vpop.f32.mrb[0].mxu0
  %3838 = vmatprep.mubr.f32.mxu0 0.0
  %3839 = vmatmul.mubr.f32.gmra.mrb[0].mxu0 %v3191
  %v3840 = vpop.f32.mrb[0].mxu0
  %v3841 = vadd.f32 %v2888, %v3840
  %v3842 = vpop.f32.mrb[0].mxu0
  %3843 = vmatprep.mubr.f32.mxu0 0.0
  %3844 = vmatmul.mubr.f32.gmra.mrb[0].mxu0 %v3194
  %v3845 = vpop.f32.mrb[0].mxu0
  %v3846 = vadd.f32 %v2888, %v3845
  %v3847 = vpop.f32.mrb[0].mxu0
  %3848 = vmatprep.mubr.f32.mxu0 0.0
  %3849 = vmatmul.mubr.f32.gmra.mrb[0].mxu0 %v3197
  %v3850 = vpop.f32.mrb[0].mxu0
  %v3851 = vadd.f32 %v2888, %v3850
  %v3852 = vpop.f32.mrb[0].mxu0
  %3853 = vmatprep.mubr.f32.mxu0 0.0
  %3854 = vmatmul.mubr.f32.gmra.mrb[0].mxu0 %v3200
  %v3855 = vpop.f32.mrb[0].mxu0
  %v3856 = vadd.f32 %v2888, %v3855
  %v3857 = vpop.f32.mrb[0].mxu0
  %3858 = vmatprep.mubr.f32.mxu0 0.0
  %3859 = vmatmul.mubr.f32.gmra.mrb[0].mxu0 %v3203
  %v3860 = vpop.f32.mrb[0].mxu0
  %v3861 = vadd.f32 %v2888, %v3860
  %v3862 = vpop.f32.mrb[0].mxu0
  %3863 = vmatprep.mubr.f32.mxu0 0.0
  %3864 = vmatmul.mubr.f32.gmra.mrb[0].mxu0 %v3206
  %v3865 = vpop.f32.mrb[0].mxu0
  %v3866 = vadd.f32 %v2888, %v3865
  %v3867 = vpop.f32.mrb[0].mxu0
  %3868 = vmatprep.mubr.f32.mxu0 0.0
  %3869 = vmatmul.mubr.f32.gmra.mrb[0].mxu0 %v3209
  %v3870 = vpop.f32.mrb[0].mxu0
  %v3871 = vadd.f32 %v2888, %v3870
  %v3872 = vpop.f32.mrb[0].mxu0
  %3873 = vmatprep.mubr.f32.mxu0 0.0
  %3874 = vmatmul.mubr.f32.gmra.mrb[0].mxu0 %v3212
  %v3875 = vpop.f32.mrb[0].mxu0
  %v3876 = vadd.f32 %v2888, %v3875
  %v3877 = vpop.f32.mrb[0].mxu0
  %3878 = vmatprep.mubr.f32.mxu0 0.0
  %3879 = vmatmul.mubr.f32.gmra.mrb[0].mxu0 %v3215
  %v3880 = vpop.f32.mrb[0].mxu0
  %v3881 = vadd.f32 %v2888, %v3880
  %v3882 = vpop.f32.mrb[0].mxu0
  %3883 = vmatprep.mubr.f32.mxu0 0.0
  %3884 = vmatmul.mubr.f32.gmra.mrb[0].mxu0 %v3218
  %v3885 = vpop.f32.mrb[0].mxu0
  %v3886 = vadd.f32 %v2888, %v3885
  %v3887 = vpop.f32.mrb[0].mxu0
  %3888 = vmatprep.mubr.f32.mxu0 0.0
  %3889 = vmatmul.mubr.f32.gmra.mrb[0].mxu0 %v3221
  %v3890 = vpop.f32.mrb[0].mxu0
  %v3891 = vadd.f32 %v2888, %v3890
  %v3892 = vpop.f32.mrb[0].mxu0
  %3893 = vmatprep.mubr.f32.mxu0 0.0
  %3894 = vmatmul.mubr.f32.gmra.mrb[0].mxu0 %v3224
  %v3895 = vpop.f32.mrb[0].mxu0
  %v3896 = vadd.f32 %v2888, %v3895
  %v3897 = vpop.f32.mrb[0].mxu0
  %3898 = vmatprep.mubr.f32.mxu0 0.0
  %3899 = vmatmul.mubr.f32.gmra.mrb[0].mxu0 %v3227
  %v3900 = vpop.f32.mrb[0].mxu0
  %v3901 = vadd.f32 %v2888, %v3900
  %v3902 = vpop.f32.mrb[0].mxu0
  %3903 = vmatprep.mubr.f32.mxu0 0.0
  %3904 = vmatmul.mubr.f32.gmra.mrb[0].mxu0 %v3230
  %v3905 = vpop.f32.mrb[0].mxu0
  %v3906 = vadd.f32 %v2888, %v3905
  %v3907 = vpop.f32.mrb[0].mxu0
  %3908 = vmatprep.mubr.f32.mxu0 0.0
  %3909 = vmatmul.mubr.f32.gmra.mrb[0].mxu0 %v3233
  %v3910 = vpop.f32.mrb[0].mxu0
  %v3911 = vadd.f32 %v2888, %v3910
  %v3912 = vpop.f32.mrb[0].mxu0
  %3913 = vmatprep.mubr.f32.mxu0 0.0
  %3914 = vmatmul.mubr.f32.gmra.mrb[0].mxu0 %v3236
  %v3915 = vpop.f32.mrb[0].mxu0
  %v3916 = vadd.f32 %v2888, %v3915
  %v3917 = vpop.f32.mrb[0].mxu0
  %3918 = vmatprep.mubr.f32.mxu0 0.0
  %3919 = vmatmul.mubr.f32.gmra.mrb[0].mxu0 %v3239
  %v3920 = vpop.f32.mrb[0].mxu0
  %v3921 = vadd.f32 %v2888, %v3920
  %v3922 = vpop.f32.mrb[0].mxu0
  %3923 = vmatprep.mubr.f32.mxu0 0.0
  %3924 = vmatmul.mubr.f32.gmra.mrb[0].mxu0 %v3242
  %v3925 = vpop.f32.mrb[0].mxu0
  %v3926 = vadd.f32 %v2888, %v3925
  %v3927 = vpop.f32.mrb[0].mxu0
  %3928 = vmatprep.mubr.f32.mxu0 0.0
  %3929 = vmatmul.mubr.f32.gmra.mrb[0].mxu0 %v3245
  %v3930 = vpop.f32.mrb[0].mxu0
  %v3931 = vadd.f32 %v2888, %v3930
  %v3932 = vpop.f32.mrb[0].mxu0
  %3933 = vmatprep.mubr.f32.mxu0 0.0
  %3934 = vmatmul.mubr.f32.gmra.mrb[0].mxu0 %v3248
  %v3935 = vpop.f32.mrb[0].mxu0
  %v3936 = vadd.f32 %v2888, %v3935
  %v3937 = vpop.f32.mrb[0].mxu0
  %3938 = vmatprep.mubr.f32.mxu0 0.0
  %3939 = vmatmul.mubr.f32.gmra.mrb[0].mxu0 %v3251
  %v3940 = vpop.f32.mrb[0].mxu0
  %v3941 = vadd.f32 %v2888, %v3940
  %v3942 = vpop.f32.mrb[0].mxu0
  %3943 = vmatprep.mubr.f32.mxu0 0.0
  %3944 = vmatmul.mubr.f32.gmra.mrb[0].mxu0 %v3254
  %v3945 = vpop.f32.mrb[0].mxu0
  %v3946 = vadd.f32 %v2888, %v3945
  %v3947 = vpop.f32.mrb[0].mxu0
  %3948 = vmatprep.mubr.f32.mxu0 0.0
  %3949 = vmatmul.mubr.f32.gmra.mrb[0].mxu0 %v3257
  %v3950 = vpop.f32.mrb[0].mxu0
  %v3951 = vadd.f32 %v2888, %v3950
  %v3952 = vpop.f32.mrb[0].mxu0
  %3953 = vmatprep.mubr.f32.mxu0 0.0
  %3954 = vmatmul.mubr.f32.gmra.mrb[0].mxu0 %v3260
  %v3955 = vpop.f32.mrb[0].mxu0
  %v3956 = vadd.f32 %v2888, %v3955
  %v3957 = vpop.f32.mrb[0].mxu0
  %3958 = vmatprep.mubr.f32.mxu0 0.0
  %3959 = vmatmul.mubr.f32.gmra.mrb[0].mxu0 %v3263
  %v3960 = vpop.f32.mrb[0].mxu0
  %v3961 = vadd.f32 %v2888, %v3960
  %v3962 = vpop.f32.mrb[0].mxu0
  %3963 = vmatprep.mubr.f32.mxu0 0.0
  %3964 = vmatmul.mubr.f32.gmra.mrb[0].mxu0 %v3266
  %v3965 = vpop.f32.mrb[0].mxu0
  %v3966 = vadd.f32 %v2888, %v3965
  %v3967 = vpop.f32.mrb[0].mxu0
  %3968 = vmatprep.mubr.f32.mxu0 0.0
  %3969 = vmatmul.mubr.f32.gmra.mrb[0].mxu0 %v3269
  %v3970 = vpop.f32.mrb[0].mxu0
  %v3971 = vadd.f32 %v2888, %v3970
  %v3972 = vpop.f32.mrb[0].mxu0
  %3973 = vmatprep.mubr.f32.mxu0 0.0
  %3974 = vmatmul.mubr.f32.gmra.mrb[0].mxu0 %v3272
  %v3975 = vpop.f32.mrb[0].mxu0
  %v3976 = vadd.f32 %v2888, %v3975
  %v3977 = vpop.f32.mrb[0].mxu0
  %3978 = vdwg.mxu0
  %v3979 = vmax.f32 %v3341, 0.0
  %v3980 = vmax.f32 %v3346, 0.0
  %v3981 = vmax.f32 %v3351, 0.0
  %v3982 = vmax.f32 %v3356, 0.0
  %v3983 = vmax.f32 %v3361, 0.0
  %v3984 = vmax.f32 %v3366, 0.0
  %v3985 = vmax.f32 %v3371, 0.0
  %v3986 = vmax.f32 %v3376, 0.0
  %v3987 = vmax.f32 %v3381, 0.0
  %v3988 = vmax.f32 %v3386, 0.0
  %v3989 = vmax.f32 %v3391, 0.0
  %v3990 = vmax.f32 %v3396, 0.0
  %v3991 = vmax.f32 %v3401, 0.0
  %v3992 = vmax.f32 %v3406, 0.0
  %v3993 = vmax.f32 %v3411, 0.0
  %v3994 = vmax.f32 %v3416, 0.0
  %v3995 = vmax.f32 %v3421, 0.0
  %v3996 = vmax.f32 %v3426, 0.0
  %v3997 = vmax.f32 %v3431, 0.0
  %v3998 = vmax.f32 %v3436, 0.0
  %v3999 = vmax.f32 %v3441, 0.0
  %v4000 = vmax.f32 %v3446, 0.0
  %v4001 = vmax.f32 %v3451, 0.0
  %v4002 = vmax.f32 %v3456, 0.0
  %v4003 = vmax.f32 %v3461, 0.0
  %v4004 = vmax.f32 %v3466, 0.0
  %v4005 = vmax.f32 %v3471, 0.0
  %v4006 = vmax.f32 %v3476, 0.0
  %v4007 = vmax.f32 %v3481, 0.0
  %v4008 = vmax.f32 %v3486, 0.0
  %v4009 = vmax.f32 %v3491, 0.0
  %v4010 = vmax.f32 %v3496, 0.0
  %v4011 = vmax.f32 %v3501, 0.0
  %v4012 = vmax.f32 %v3506, 0.0
  %v4013 = vmax.f32 %v3511, 0.0
  %v4014 = vmax.f32 %v3516, 0.0
  %v4015 = vmax.f32 %v3521, 0.0
  %v4016 = vmax.f32 %v3526, 0.0
  %v4017 = vmax.f32 %v3531, 0.0
  %v4018 = vmax.f32 %v3536, 0.0
  %v4019 = vmax.f32 %v3541, 0.0
  %v4020 = vmax.f32 %v3546, 0.0
  %v4021 = vmax.f32 %v3551, 0.0
  %v4022 = vmax.f32 %v3556, 0.0
  %v4023 = vmax.f32 %v3561, 0.0
  %v4024 = vmax.f32 %v3566, 0.0
  %v4025 = vmax.f32 %v3571, 0.0
  %v4026 = vmax.f32 %v3576, 0.0
  %v4027 = vmax.f32 %v3581, 0.0
  %v4028 = vmax.f32 %v3586, 0.0
  %v4029 = vmax.f32 %v3591, 0.0
  %v4030 = vmax.f32 %v3596, 0.0
  %v4031 = vmax.f32 %v3601, 0.0
  %v4032 = vmax.f32 %v3606, 0.0
  %v4033 = vmax.f32 %v3611, 0.0
  %v4034 = vmax.f32 %v3616, 0.0
  %v4035 = vmax.f32 %v3621, 0.0
  %v4036 = vmax.f32 %v3626, 0.0
  %v4037 = vmax.f32 %v3631, 0.0
  %v4038 = vmax.f32 %v3636, 0.0
  %v4039 = vmax.f32 %v3641, 0.0
  %v4040 = vmax.f32 %v3646, 0.0
  %v4041 = vmax.f32 %v3651, 0.0
  %v4042 = vmax.f32 %v3656, 0.0
  %v4043 = vmax.f32 %v3661, 0.0
  %v4044 = vmax.f32 %v3666, 0.0
  %v4045 = vmax.f32 %v3671, 0.0
  %v4046 = vmax.f32 %v3676, 0.0
  %v4047 = vmax.f32 %v3681, 0.0
  %v4048 = vmax.f32 %v3686, 0.0
  %v4049 = vmax.f32 %v3691, 0.0
  %v4050 = vmax.f32 %v3696, 0.0
  %v4051 = vmax.f32 %v3701, 0.0
  %v4052 = vmax.f32 %v3706, 0.0
  %v4053 = vmax.f32 %v3711, 0.0
  %v4054 = vmax.f32 %v3716, 0.0
  %v4055 = vmax.f32 %v3721, 0.0
  %v4056 = vmax.f32 %v3726, 0.0
  %v4057 = vmax.f32 %v3731, 0.0
  %v4058 = vmax.f32 %v3736, 0.0
  %v4059 = vmax.f32 %v3741, 0.0
  %v4060 = vmax.f32 %v3746, 0.0
  %v4061 = vmax.f32 %v3751, 0.0
  %v4062 = vmax.f32 %v3756, 0.0
  %v4063 = vmax.f32 %v3761, 0.0
  %v4064 = vmax.f32 %v3766, 0.0
  %v4065 = vmax.f32 %v3771, 0.0
  %v4066 = vmax.f32 %v3776, 0.0
  %v4067 = vmax.f32 %v3781, 0.0
  %v4068 = vmax.f32 %v3786, 0.0
  %v4069 = vmax.f32 %v3791, 0.0
  %v4070 = vmax.f32 %v3796, 0.0
  %v4071 = vmax.f32 %v3801, 0.0
  %v4072 = vmax.f32 %v3806, 0.0
  %v4073 = vmax.f32 %v3811, 0.0
  %v4074 = vmax.f32 %v3816, 0.0
  %v4075 = vmax.f32 %v3821, 0.0
  %v4076 = vmax.f32 %v3826, 0.0
  %v4077 = vmax.f32 %v3831, 0.0
  %v4078 = vmax.f32 %v3836, 0.0
  %v4079 = vmax.f32 %v3841, 0.0
  %v4080 = vmax.f32 %v3846, 0.0
  %v4081 = vmax.f32 %v3851, 0.0
  %v4082 = vmax.f32 %v3856, 0.0
  %v4083 = vmax.f32 %v3861, 0.0
  %v4084 = vmax.f32 %v3866, 0.0
  %v4085 = vmax.f32 %v3871, 0.0
  %v4086 = vmax.f32 %v3876, 0.0
  %v4087 = vmax.f32 %v3881, 0.0
  %v4088 = vmax.f32 %v3886, 0.0
  %v4089 = vmax.f32 %v3891, 0.0
  %v4090 = vmax.f32 %v3896, 0.0
  %v4091 = vmax.f32 %v3901, 0.0
  %v4092 = vmax.f32 %v3906, 0.0
  %v4093 = vmax.f32 %v3911, 0.0
  %v4094 = vmax.f32 %v3916, 0.0
  %v4095 = vmax.f32 %v3921, 0.0
  %v4096 = vmax.f32 %v3926, 0.0
  %v4097 = vmax.f32 %v3931, 0.0
  %v4098 = vmax.f32 %v3936, 0.0
  %v4099 = vmax.f32 %v3941, 0.0
  %v4100 = vmax.f32 %v3946, 0.0
  %v4101 = vmax.f32 %v3951, 0.0
  %v4102 = vmax.f32 %v3956, 0.0
  %v4103 = vmax.f32 %v3961, 0.0
  %v4104 = vmax.f32 %v3966, 0.0
  %v4105 = vmax.f32 %v3971, 0.0
  %v4106 = vmax.f32 %v3976, 0.0
  %vm4107 = vcmask 261120
  %v4108 = vsel %vm4107, %v3979, -inf
  %v4109 = vsel %vm4107, %v3987, -inf
  %v4110 = vmax.f32 %v4108, %v4109
  %v4111 = vsel %vm4107, %v3995, -inf
  %v4112 = vmax.f32 %v4110, %v4111
  %v4113 = vsel %vm4107, %v4003, -inf
  %v4114 = vmax.f32 %v4112, %v4113
  %v4115 = vsel %vm4107, %v4011, -inf
  %v4116 = vmax.f32 %v4114, %v4115
  %v4117 = vsel %vm4107, %v4019, -inf
  %v4118 = vmax.f32 %v4116, %v4117
  %v4119 = vsel %vm4107, %v4027, -inf
  %v4120 = vmax.f32 %v4118, %v4119
  %v4121 = vsel %vm4107, %v4035, -inf
  %v4122 = vmax.f32 %v4120, %v4121
  %v4123 = vsel %vm4107, %v4043, -inf
  %v4124 = vmax.f32 %v4122, %v4123
  %v4125 = vsel %vm4107, %v4051, -inf
  %v4126 = vmax.f32 %v4124, %v4125
  %v4127 = vsel %vm4107, %v4059, -inf
  %v4128 = vmax.f32 %v4126, %v4127
  %v4129 = vsel %vm4107, %v4067, -inf
  %v4130 = vmax.f32 %v4128, %v4129
  %v4131 = vsel %vm4107, %v4075, -inf
  %v4132 = vmax.f32 %v4130, %v4131
  %v4133 = vsel %vm4107, %v4083, -inf
  %v4134 = vmax.f32 %v4132, %v4133
  %v4135 = vsel %vm4107, %v4091, -inf
  %v4136 = vmax.f32 %v4134, %v4135
  %v4137 = vsel %vm4107, %v4099, -inf
  %v4138 = vmax.f32 %v4136, %v4137
  %v4139 = vsel %vm4107, %v3980, -inf
  %v4140 = vsel %vm4107, %v3988, -inf
  %v4141 = vmax.f32 %v4139, %v4140
  %v4142 = vsel %vm4107, %v3996, -inf
  %v4143 = vmax.f32 %v4141, %v4142
  %v4144 = vsel %vm4107, %v4004, -inf
  %v4145 = vmax.f32 %v4143, %v4144
  %v4146 = vsel %vm4107, %v4012, -inf
  %v4147 = vmax.f32 %v4145, %v4146
  %v4148 = vsel %vm4107, %v4020, -inf
  %v4149 = vmax.f32 %v4147, %v4148
  %v4150 = vsel %vm4107, %v4028, -inf
  %v4151 = vmax.f32 %v4149, %v4150
  %v4152 = vsel %vm4107, %v4036, -inf
  %v4153 = vmax.f32 %v4151, %v4152
  %v4154 = vsel %vm4107, %v4044, -inf
  %v4155 = vmax.f32 %v4153, %v4154
  %v4156 = vsel %vm4107, %v4052, -inf
  %v4157 = vmax.f32 %v4155, %v4156
  %v4158 = vsel %vm4107, %v4060, -inf
  %v4159 = vmax.f32 %v4157, %v4158
  %v4160 = vsel %vm4107, %v4068, -inf
  %v4161 = vmax.f32 %v4159, %v4160
  %v4162 = vsel %vm4107, %v4076, -inf
  %v4163 = vmax.f32 %v4161, %v4162
  %v4164 = vsel %vm4107, %v4084, -inf
  %v4165 = vmax.f32 %v4163, %v4164
  %v4166 = vsel %vm4107, %v4092, -inf
  %v4167 = vmax.f32 %v4165, %v4166
  %v4168 = vsel %vm4107, %v4100, -inf
  %v4169 = vmax.f32 %v4167, %v4168
  %v4170 = vsel %vm4107, %v3981, -inf
  %v4171 = vsel %vm4107, %v3989, -inf
  %v4172 = vmax.f32 %v4170, %v4171
  %v4173 = vsel %vm4107, %v3997, -inf
  %v4174 = vmax.f32 %v4172, %v4173
  %v4175 = vsel %vm4107, %v4005, -inf
  %v4176 = vmax.f32 %v4174, %v4175
  %v4177 = vsel %vm4107, %v4013, -inf
  %v4178 = vmax.f32 %v4176, %v4177
  %v4179 = vsel %vm4107, %v4021, -inf
  %v4180 = vmax.f32 %v4178, %v4179
  %v4181 = vsel %vm4107, %v4029, -inf
  %v4182 = vmax.f32 %v4180, %v4181
  %v4183 = vsel %vm4107, %v4037, -inf
  %v4184 = vmax.f32 %v4182, %v4183
  %v4185 = vsel %vm4107, %v4045, -inf
  %v4186 = vmax.f32 %v4184, %v4185
  %v4187 = vsel %vm4107, %v4053, -inf
  %v4188 = vmax.f32 %v4186, %v4187
  %v4189 = vsel %vm4107, %v4061, -inf
  %v4190 = vmax.f32 %v4188, %v4189
  %v4191 = vsel %vm4107, %v4069, -inf
  %v4192 = vmax.f32 %v4190, %v4191
  %v4193 = vsel %vm4107, %v4077, -inf
  %v4194 = vmax.f32 %v4192, %v4193
  %v4195 = vsel %vm4107, %v4085, -inf
  %v4196 = vmax.f32 %v4194, %v4195
  %v4197 = vsel %vm4107, %v4093, -inf
  %v4198 = vmax.f32 %v4196, %v4197
  %v4199 = vsel %vm4107, %v4101, -inf
  %v4200 = vmax.f32 %v4198, %v4199
  %v4201 = vsel %vm4107, %v3982, -inf
  %v4202 = vsel %vm4107, %v3990, -inf
  %v4203 = vmax.f32 %v4201, %v4202
  %v4204 = vsel %vm4107, %v3998, -inf
  %v4205 = vmax.f32 %v4203, %v4204
  %v4206 = vsel %vm4107, %v4006, -inf
  %v4207 = vmax.f32 %v4205, %v4206
  %v4208 = vsel %vm4107, %v4014, -inf
  %v4209 = vmax.f32 %v4207, %v4208
  %v4210 = vsel %vm4107, %v4022, -inf
  %v4211 = vmax.f32 %v4209, %v4210
  %v4212 = vsel %vm4107, %v4030, -inf
  %v4213 = vmax.f32 %v4211, %v4212
  %v4214 = vsel %vm4107, %v4038, -inf
  %v4215 = vmax.f32 %v4213, %v4214
  %v4216 = vsel %vm4107, %v4046, -inf
  %v4217 = vmax.f32 %v4215, %v4216
  %v4218 = vsel %vm4107, %v4054, -inf
  %v4219 = vmax.f32 %v4217, %v4218
  %v4220 = vsel %vm4107, %v4062, -inf
  %v4221 = vmax.f32 %v4219, %v4220
  %v4222 = vsel %vm4107, %v4070, -inf
  %v4223 = vmax.f32 %v4221, %v4222
  %v4224 = vsel %vm4107, %v4078, -inf
  %v4225 = vmax.f32 %v4223, %v4224
  %v4226 = vsel %vm4107, %v4086, -inf
  %v4227 = vmax.f32 %v4225, %v4226
  %v4228 = vsel %vm4107, %v4094, -inf
  %v4229 = vmax.f32 %v4227, %v4228
  %v4230 = vsel %vm4107, %v4102, -inf
  %v4231 = vmax.f32 %v4229, %v4230
  %v4232 = vsel %vm4107, %v3983, -inf
  %v4233 = vsel %vm4107, %v3991, -inf
  %v4234 = vmax.f32 %v4232, %v4233
  %v4235 = vsel %vm4107, %v3999, -inf
  %v4236 = vmax.f32 %v4234, %v4235
  %v4237 = vsel %vm4107, %v4007, -inf
  %v4238 = vmax.f32 %v4236, %v4237
  %v4239 = vsel %vm4107, %v4015, -inf
  %v4240 = vmax.f32 %v4238, %v4239
  %v4241 = vsel %vm4107, %v4023, -inf
  %v4242 = vmax.f32 %v4240, %v4241
  %v4243 = vsel %vm4107, %v4031, -inf
  %v4244 = vmax.f32 %v4242, %v4243
  %v4245 = vsel %vm4107, %v4039, -inf
  %v4246 = vmax.f32 %v4244, %v4245
  %v4247 = vsel %vm4107, %v4047, -inf
  %v4248 = vmax.f32 %v4246, %v4247
  %v4249 = vsel %vm4107, %v4055, -inf
  %v4250 = vmax.f32 %v4248, %v4249
  %v4251 = vsel %vm4107, %v4063, -inf
  %v4252 = vmax.f32 %v4250, %v4251
  %v4253 = vsel %vm4107, %v4071, -inf
  %v4254 = vmax.f32 %v4252, %v4253
  %v4255 = vsel %vm4107, %v4079, -inf
  %v4256 = vmax.f32 %v4254, %v4255
  %v4257 = vsel %vm4107, %v4087, -inf
  %v4258 = vmax.f32 %v4256, %v4257
  %v4259 = vsel %vm4107, %v4095, -inf
  %v4260 = vmax.f32 %v4258, %v4259
  %v4261 = vsel %vm4107, %v4103, -inf
  %v4262 = vmax.f32 %v4260, %v4261
  %v4263 = vsel %vm4107, %v3984, -inf
  %v4264 = vsel %vm4107, %v3992, -inf
  %v4265 = vmax.f32 %v4263, %v4264
  %v4266 = vsel %vm4107, %v4000, -inf
  %v4267 = vmax.f32 %v4265, %v4266
  %v4268 = vsel %vm4107, %v4008, -inf
  %v4269 = vmax.f32 %v4267, %v4268
  %v4270 = vsel %vm4107, %v4016, -inf
  %v4271 = vmax.f32 %v4269, %v4270
  %v4272 = vsel %vm4107, %v4024, -inf
  %v4273 = vmax.f32 %v4271, %v4272
  %v4274 = vsel %vm4107, %v4032, -inf
  %v4275 = vmax.f32 %v4273, %v4274
  %v4276 = vsel %vm4107, %v4040, -inf
  %v4277 = vmax.f32 %v4275, %v4276
  %v4278 = vsel %vm4107, %v4048, -inf
  %v4279 = vmax.f32 %v4277, %v4278
  %v4280 = vsel %vm4107, %v4056, -inf
  %v4281 = vmax.f32 %v4279, %v4280
  %v4282 = vsel %vm4107, %v4064, -inf
  %v4283 = vmax.f32 %v4281, %v4282
  %v4284 = vsel %vm4107, %v4072, -inf
  %v4285 = vmax.f32 %v4283, %v4284
  %v4286 = vsel %vm4107, %v4080, -inf
  %v4287 = vmax.f32 %v4285, %v4286
  %v4288 = vsel %vm4107, %v4088, -inf
  %v4289 = vmax.f32 %v4287, %v4288
  %v4290 = vsel %vm4107, %v4096, -inf
  %v4291 = vmax.f32 %v4289, %v4290
  %v4292 = vsel %vm4107, %v4104, -inf
  %v4293 = vmax.f32 %v4291, %v4292
  %v4294 = vsel %vm4107, %v3985, -inf
  %v4295 = vsel %vm4107, %v3993, -inf
  %v4296 = vmax.f32 %v4294, %v4295
  %v4297 = vsel %vm4107, %v4001, -inf
  %v4298 = vmax.f32 %v4296, %v4297
  %v4299 = vsel %vm4107, %v4009, -inf
  %v4300 = vmax.f32 %v4298, %v4299
  %v4301 = vsel %vm4107, %v4017, -inf
  %v4302 = vmax.f32 %v4300, %v4301
  %v4303 = vsel %vm4107, %v4025, -inf
  %v4304 = vmax.f32 %v4302, %v4303
  %v4305 = vsel %vm4107, %v4033, -inf
  %v4306 = vmax.f32 %v4304, %v4305
  %v4307 = vsel %vm4107, %v4041, -inf
  %v4308 = vmax.f32 %v4306, %v4307
  %v4309 = vsel %vm4107, %v4049, -inf
  %v4310 = vmax.f32 %v4308, %v4309
  %v4311 = vsel %vm4107, %v4057, -inf
  %v4312 = vmax.f32 %v4310, %v4311
  %v4313 = vsel %vm4107, %v4065, -inf
  %v4314 = vmax.f32 %v4312, %v4313
  %v4315 = vsel %vm4107, %v4073, -inf
  %v4316 = vmax.f32 %v4314, %v4315
  %v4317 = vsel %vm4107, %v4081, -inf
  %v4318 = vmax.f32 %v4316, %v4317
  %v4319 = vsel %vm4107, %v4089, -inf
  %v4320 = vmax.f32 %v4318, %v4319
  %v4321 = vsel %vm4107, %v4097, -inf
  %v4322 = vmax.f32 %v4320, %v4321
  %v4323 = vsel %vm4107, %v4105, -inf
  %v4324 = vmax.f32 %v4322, %v4323
  %v4325 = vsel %vm4107, %v3986, -inf
  %v4326 = vsel %vm4107, %v3994, -inf
  %v4327 = vmax.f32 %v4325, %v4326
  %v4328 = vsel %vm4107, %v4002, -inf
  %v4329 = vmax.f32 %v4327, %v4328
  %v4330 = vsel %vm4107, %v4010, -inf
  %v4331 = vmax.f32 %v4329, %v4330
  %v4332 = vsel %vm4107, %v4018, -inf
  %v4333 = vmax.f32 %v4331, %v4332
  %v4334 = vsel %vm4107, %v4026, -inf
  %v4335 = vmax.f32 %v4333, %v4334
  %v4336 = vsel %vm4107, %v4034, -inf
  %v4337 = vmax.f32 %v4335, %v4336
  %v4338 = vsel %vm4107, %v4042, -inf
  %v4339 = vmax.f32 %v4337, %v4338
  %v4340 = vsel %vm4107, %v4050, -inf
  %v4341 = vmax.f32 %v4339, %v4340
  %v4342 = vsel %vm4107, %v4058, -inf
  %v4343 = vmax.f32 %v4341, %v4342
  %v4344 = vsel %vm4107, %v4066, -inf
  %v4345 = vmax.f32 %v4343, %v4344
  %v4346 = vsel %vm4107, %v4074, -inf
  %v4347 = vmax.f32 %v4345, %v4346
  %v4348 = vsel %vm4107, %v4082, -inf
  %v4349 = vmax.f32 %v4347, %v4348
  %v4350 = vsel %vm4107, %v4090, -inf
  %v4351 = vmax.f32 %v4349, %v4350
  %v4352 = vsel %vm4107, %v4098, -inf
  %v4353 = vmax.f32 %v4351, %v4352
  %v4354 = vsel %vm4107, %v4106, -inf
  %v4355 = vmax.f32 %v4353, %v4354
  %4364 = vrot.lane.b32.xlu0 %v4138, 24
  %v4365 = vpop.permute.xlu0 %4364
  %4366 = vrot.lane.b32.xlu0 %v4169, 24
  %v4367 = vpop.permute.xlu0 %4366
  %4368 = vrot.lane.b32.xlu0 %v4200, 24
  %v4369 = vpop.permute.xlu0 %4368
  %4370 = vrot.lane.b32.xlu0 %v4231, 24
  %v4371 = vpop.permute.xlu0 %4370
  %4372 = vrot.lane.b32.xlu0 %v4262, 24
  %v4373 = vpop.permute.xlu0 %4372
  %4374 = vrot.lane.b32.xlu0 %v4293, 24
  %v4375 = vpop.permute.xlu0 %4374
  %4376 = vrot.lane.b32.xlu0 %v4324, 24
  %v4377 = vpop.permute.xlu0 %4376
  %4378 = vrot.lane.b32.xlu0 %v4355, 24
  %v4379 = vpop.permute.xlu0 %4378
  %v4388 = vsel %vm1404, %v1419, %v4365
  %v4389 = vsel %vm1404, %v1434, %v4367
  %v4390 = vsel %vm1404, %v1449, %v4369
  %v4391 = vsel %vm1404, %v1464, %v4371
  %v4392 = vsel %vm1404, %v1479, %v4373
  %v4393 = vsel %vm1404, %v1494, %v4375
  %v4394 = vsel %vm1404, %v1509, %v4377
  %v4395 = vsel %vm1404, %v1524, %v4379
  %vm4396 = vcmask 457728
  %4397 = vst.msk [vmem:[%s10] sm:$0xff] %vm4396, %v4388
  %4398 = vst.msk [vmem:[%s10 + $0x8] sm:$0xff] %vm4396, %v4389
  %4399 = vst.msk [vmem:[%s10 + $0x10] sm:$0xff] %vm4396, %v4390
  %4400 = vst.msk [vmem:[%s10 + $0x18] sm:$0xff] %vm4396, %v4391
  %4401 = vst.msk [vmem:[%s10 + $0x20] sm:$0xff] %vm4396, %v4392
  %4402 = vst.msk [vmem:[%s10 + $0x28] sm:$0xff] %vm4396, %v4393
  %4403 = vst.msk [vmem:[%s10 + $0x30] sm:$0xff] %vm4396, %v4394
  %4404 = vst.msk [vmem:[%s10 + $0x38] sm:$0xff] %vm4396, %v4395
  // Predicated region
  $region42: #{tpu_custom_call.1} parent=0 // pred_check
    _
  $region43: #{tpu_custom_call.1} parent=0 // pred_check_branch
    %4406 = sbr.rel (0) target = $region45
  $region44: #{tpu_custom_call.1} parent=0 // pred_region
    _
  $region45: #{tpu_custom_call.1} parent=0 // pred_fallthru
    _
  // Predicated region
  $region46: #{tpu_custom_call.1} parent=0 // pred_check
    _
  $region47: #{tpu_custom_call.1} parent=0 // pred_check_branch
    %4408 = sbr.rel (0) target = $region49
  $region48: #{tpu_custom_call.1} parent=0 // pred_region
    _
  $region49: #{tpu_custom_call.1} parent=0 // pred_fallthru
    _

</llo_original>
